<compile_context>
chip_gen: v7x
topology: tpu7x:2x2x1
jax: 0.10.0
libtpu: 0.0.40
codegen_flags: <defaults>
</compile_context>

<pallas_src>
import functools

import jax
import jax.numpy as jnp
from jax.experimental import pallas as pl
from jax.experimental.pallas import tpu as pltpu

# ---- small synthetic config (stand-in for bert-base-uncased) ----
HIDDEN = 32
NUM_HEADS = 2
HEAD_DIM = HIDDEN // NUM_HEADS
FFN_DIM = 64
NUM_LAYERS = 2
VOCAB = 64
MAX_QUESTION_LEN = 8      # module default 42, scaled down
MAX_SENTENCE_LEN = 16     # module default 122, scaled down
LN_EPS = 1e-12

# lane/sublane-dense padded sizes
H_PAD = 128               # hidden, zero-padded from 32
F_PAD = 128               # FFN, zero-padded from 64
M_PAD = 128               # folded num_seqs*seq_len rows, zero-padded
S_PAD = 8                 # pooled-sequence output rows, zero-padded

NUM_ENCODERS = 2          # query model + context model, fused into one call

WEIGHT_NAMES = ('wq', 'bq', 'wk', 'bk', 'wv', 'bv', 'wo', 'bo',
                'g1', 'be1', 'w1', 'b1', 'w2', 'b2', 'g2', 'be2',
                'pooler_w', 'pooler_b')


# -------------------------- encoder kernel (one layer per grid step) -----

def _make_encoder_kernel(pool_mode):
    """One transformer layer per (encoder, layer) grid step; pooling epilogue
    fused under pl.when on the last layer step."""

    def kernel(x_emb_ref, bias_ref, pmat_ref,
               wq_ref, bq_ref, wk_ref, bk_ref, wv_ref, bv_ref,
               wo_ref, bo_ref, g1_ref, be1_ref,
               w1_ref, b1_ref, w2_ref, b2_ref, g2_ref, be2_ref,
               wp_ref, bp_ref,
               out_ref,
               x_scr, q_scr, k_scr, v_scr):
        l = pl.program_id(1)

        @pl.when(l == 0)
        def _():
            # load the embedding slab into the carried activation scratch
            x_scr[...] = x_emb_ref[...]

        # lane-validity / per-head column masks (cheap iota, no extra DMA)
        col_h = jax.lax.broadcasted_iota(jnp.int32, (1, H_PAD), 1)
        h_valid = (col_h < HIDDEN).astype(jnp.float32)

        def layer_norm(h, g, b):
            # padded lanes of h are zero; normalize over the real HIDDEN lanes
            mu = jnp.sum(h, axis=-1, keepdims=True) * (1.0 / HIDDEN)
            d = (h - mu) * h_valid
            var = jnp.sum(d * d, axis=-1, keepdims=True) * (1.0 / HIDDEN)
            return d * jax.lax.rsqrt(var + LN_EPS) * g + b

        # --- QKV: three separate lane-dense (128,128) dots; results parked in
        #     VMEM scratch (short vreg live ranges; q/v pre-masked per head) ---
        x = x_scr[...]
        xb = x.astype(jnp.bfloat16)
        q = jnp.dot(xb, wq_ref[...],                       # scale folded in Wq
                    preferred_element_type=jnp.float32) + bq_ref[...]
        k = jnp.dot(xb, wk_ref[...],
                    preferred_element_type=jnp.float32) + bk_ref[...]
        v = jnp.dot(xb, wv_ref[...],
                    preferred_element_type=jnp.float32) + bv_ref[...]
        k_scr[...] = k.astype(jnp.bfloat16)
        for h in range(NUM_HEADS):
            hm = ((col_h >= h * HEAD_DIM) &
                  (col_h < (h + 1) * HEAD_DIM)).astype(jnp.float32)
            q_scr[h] = (q * hm).astype(jnp.bfloat16)
            v_scr[h] = (v * hm).astype(jnp.bfloat16)

        # --- multi-head attention: mask-free head loop over scratch slabs ---
        bias = bias_ref[...]          # precomputed block-diag + key-pad bias
        ctx = jnp.zeros((M_PAD, H_PAD), jnp.float32)
        for h in range(NUM_HEADS):
            s = jax.lax.dot_general(
                q_scr[h], k_scr[...], (((1,), (1,)), ((), ())),
                preferred_element_type=jnp.float32) + bias
            s = s - jnp.max(s, axis=-1, keepdims=True)
            p = jnp.exp(s)
            p = p * pl.reciprocal(jnp.sum(p, axis=-1, keepdims=True),
                                  approx=True)
            ctx = ctx + jnp.dot(p.astype(jnp.bfloat16), v_scr[h],
                                preferred_element_type=jnp.float32)

        attn = jnp.dot(ctx.astype(jnp.bfloat16), wo_ref[...],
                       preferred_element_type=jnp.float32) + bo_ref[...]
        h1 = layer_norm(x + attn, g1_ref[...], be1_ref[...])

        # --- FFN ---
        f = jnp.dot(h1.astype(jnp.bfloat16), w1_ref[...],
                    preferred_element_type=jnp.float32) + b1_ref[...]
        # TODO(synk): HF BERT uses exact (erf) GELU; tanh approximation here.
        f = jax.nn.gelu(f, approximate=True)
        f = jnp.dot(f.astype(jnp.bfloat16), w2_ref[...],
                    preferred_element_type=jnp.float32) + b2_ref[...]
        x_new = layer_norm(h1 + f, g2_ref[...], be2_ref[...])
        x_scr[...] = x_new

        # --- pooling epilogue on the last layer step ---
        @pl.when(l == pl.num_programs(1) - 1)
        def _():
            pooled = jnp.dot(pmat_ref[...], x_new,
                             preferred_element_type=jnp.float32)
            if pool_mode == 'bert':
                # BertPooler: tanh(dense(CLS token)) -> the [1] output path
                out_ref[...] = jnp.tanh(
                    jnp.dot(pooled.astype(jnp.bfloat16), wp_ref[...],
                            preferred_element_type=jnp.float32) + bp_ref[...])
            else:
                # _mean_pooling: masked mean (baked into pmat) + L2 normalize
                nrm = jnp.sqrt(jnp.sum(pooled * pooled, axis=-1, keepdims=True))
                out_ref[...] = pooled / jnp.maximum(nrm, 1e-12)

    return kernel


# -------------------------- pallas_call wrapper --------------------------

def _encoder_pallas_call(pool_mode):
    kernel = _make_encoder_kernel(pool_mode)

    def w_spec(shape):
        # per-(encoder, layer) weight slab, streamed each layer step
        return pl.BlockSpec((None, None) + shape, lambda e, l: (e, l, 0, 0))

    def e_spec(shape):
        # per-encoder, layer-invariant slab (fetched once per encoder)
        return pl.BlockSpec((None,) + shape, lambda e, l: (e, 0, 0))

    grid_spec = pltpu.PrefetchScalarGridSpec(
        num_scalar_prefetch=0,
        grid=(NUM_ENCODERS, NUM_LAYERS),
        in_specs=[
            e_spec((M_PAD, H_PAD)),     # x_emb
            e_spec((M_PAD, M_PAD)),     # attention bias
            e_spec((S_PAD, M_PAD)),     # pooling matrix
            w_spec((H_PAD, H_PAD)),     # wq
            w_spec((1, H_PAD)),         # bq
            w_spec((H_PAD, H_PAD)),     # wk
            w_spec((1, H_PAD)),         # bk
            w_spec((H_PAD, H_PAD)),     # wv
            w_spec((1, H_PAD)),         # bv
            w_spec((H_PAD, H_PAD)),     # wo
            w_spec((1, H_PAD)),         # bo
            w_spec((1, H_PAD)),         # g1
            w_spec((1, H_PAD)),         # be1
            w_spec((H_PAD, F_PAD)),     # w1
            w_spec((1, F_PAD)),         # b1
            w_spec((F_PAD, H_PAD)),     # w2
            w_spec((1, H_PAD)),         # b2
            w_spec((1, H_PAD)),         # g2
            w_spec((1, H_PAD)),         # be2
            e_spec((H_PAD, H_PAD)),     # pooler_w
            e_spec((1, H_PAD)),         # pooler_b
        ],
        out_specs=e_spec((S_PAD, H_PAD)),
        scratch_shapes=[
            pltpu.VMEM((M_PAD, H_PAD), jnp.float32),               # carried x
            pltpu.VMEM((NUM_HEADS, M_PAD, H_PAD), jnp.bfloat16),   # per-head q
            pltpu.VMEM((M_PAD, H_PAD), jnp.bfloat16),              # k
            pltpu.VMEM((NUM_HEADS, M_PAD, H_PAD), jnp.bfloat16),   # per-head v
        ],
    )
    return pl.pallas_call(
        kernel,
        out_shape=jax.ShapeDtypeStruct((NUM_ENCODERS, S_PAD, H_PAD),
                                       jnp.float32),
        grid_spec=grid_spec,
        compiler_params=pltpu.CompilerParams(
            dimension_semantics=("parallel", "arbitrary"),
            # sized well under v7x's 64 MiB physical VMEM
            vmem_limit_bytes=32 * 1024 * 1024,
        ),
    )


def _fold_encoder_inputs(tok_emb, pos_emb, ids, mask, pool_mode):
    """Embedding gather + batch->row folding + precomputed bias / pool matrix
    (XLA glue inside jit; removes in-kernel int32 division prologue)."""
    num_seqs, seq_len = ids.shape
    m = num_seqs * seq_len
    assert m <= M_PAD and num_seqs <= S_PAD

    # TODO(synk): token-type embeddings and the post-embedding LayerNorm of HF
    #             BERT are omitted (weights are synthetic anyway).
    x = tok_emb[ids] + pos_emb[:seq_len][None, :, :]
    x = jnp.pad(x.reshape(m, H_PAD).astype(jnp.float32),
                ((0, M_PAD - m), (0, 0)))

    keymask = jnp.pad(mask.reshape(m).astype(jnp.float32), (0, M_PAD - m))
    seq_id = jnp.pad(jnp.repeat(jnp.arange(num_seqs, dtype=jnp.int32), seq_len),
                     (0, M_PAD - m), constant_values=-1)

    # block-diagonal (per-sequence) + key-padding additive attention bias
    same = (seq_id[:, None] == seq_id[None, :]) & (keymask[None, :] > 0.5)
    bias = jnp.where(same, 0.0, -1e9).astype(jnp.float32)

    out_row = jnp.arange(S_PAD, dtype=jnp.int32)[:, None]
    if pool_mode == 'bert':
        # CLS row picker: sequence s starts at folded row s*seq_len
        col = jnp.arange(M_PAD, dtype=jnp.int32)[None, :]
        pmat = ((seq_id[None, :] == out_row) &
                (col == out_row * seq_len)).astype(jnp.float32)
    else:
        # masked-mean weights: mask / clamp(count) baked into the matrix
        sel = (seq_id[None, :] == out_row).astype(jnp.float32) * keymask[None, :]
        cnt = jnp.maximum(jnp.sum(sel, axis=-1, keepdims=True), 1e-9)
        pmat = sel / cnt
    return x, bias, pmat


def _forward_impl(params, q_ids, q_mask, s_ids, s_mask, *, pool_mode):
    batch_size = q_ids.shape[0]
    num_sent = s_ids.shape[0] // batch_size

    xq, biasq, pmatq = _fold_encoder_inputs(
        params['tok_emb'][0], params['pos_emb'][0], q_ids, q_mask, pool_mode)
    xc, biasc, pmatc = _fold_encoder_inputs(
        params['tok_emb'][1], params['pos_emb'][1], s_ids, s_mask, pool_mode)

    x = jnp.stack([xq, xc])          # (2, M_PAD, H_PAD)
    bias = jnp.stack([biasq, biasc])
    pmat = jnp.stack([pmatq, pmatc])

    out = _encoder_pallas_call(pool_mode)(
        x, bias, pmat, *[params[n] for n in WEIGHT_NAMES])

    q_emb = out[0, :batch_size, :HIDDEN]
    c_emb = out[1, :batch_size * num_sent, :HIDDEN]
    return q_emb, c_emb.reshape(batch_size, num_sent, HIDDEN)


# -------------------------- parameters & model --------------------------

def _pad2(w, rows, cols):
    return jnp.pad(w, ((0, rows - w.shape[0]), (0, cols - w.shape[1])))


def init_encoder_params(key):
    keys = jax.random.split(key, 3 + NUM_LAYERS)

    def norm(k, shape):
        return 0.02 * jax.random.normal(k, shape, jnp.float32)

    params = {
        'tok_emb': _pad2(norm(keys[0], (VOCAB, HIDDEN)), VOCAB, H_PAD),
        'pos_emb': _pad2(norm(keys[1], (MAX_SENTENCE_LEN, HIDDEN)),
                         MAX_SENTENCE_LEN, H_PAD),
        'pooler_w': _pad2(norm(keys[2], (HIDDEN, HIDDEN)),
                          H_PAD, H_PAD).astype(jnp.bfloat16),
        'pooler_b': jnp.zeros((1, H_PAD), jnp.float32),
    }

    scale = HEAD_DIM ** -0.5
    stacks = {n: [] for n in WEIGHT_NAMES if n not in ('pooler_w', 'pooler_b')}
    gamma = jnp.pad(jnp.ones((1, HIDDEN), jnp.float32),
                    ((0, 0), (0, H_PAD - HIDDEN)))
    zero_h = jnp.zeros((1, H_PAD), jnp.float32)
    zero_f = jnp.zeros((1, F_PAD), jnp.float32)
    for i in range(NUM_LAYERS):
        lk = jax.random.split(keys[3 + i], 6)
        wq = _pad2(norm(lk[0], (HIDDEN, HIDDEN)), H_PAD, H_PAD)
        # fold the 1/sqrt(HEAD_DIM) attention scale into the Q projection
        stacks['wq'].append((wq * scale).astype(jnp.bfloat16))
        stacks['bq'].append(zero_h * scale)
        stacks['wk'].append(_pad2(norm(lk[1], (HIDDEN, HIDDEN)),
                                  H_PAD, H_PAD).astype(jnp.bfloat16))
        stacks['bk'].append(zero_h)
        stacks['wv'].append(_pad2(norm(lk[2], (HIDDEN, HIDDEN)),
                                  H_PAD, H_PAD).astype(jnp.bfloat16))
        stacks['bv'].append(zero_h)
        stacks['wo'].append(_pad2(norm(lk[3], (HIDDEN, HIDDEN)),
                                  H_PAD, H_PAD).astype(jnp.bfloat16))
        stacks['bo'].append(zero_h)
        stacks['g1'].append(gamma)
        stacks['be1'].append(zero_h)
        stacks['w1'].append(_pad2(norm(lk[4], (HIDDEN, FFN_DIM)),
                                  H_PAD, F_PAD).astype(jnp.bfloat16))
        stacks['b1'].append(zero_f)
        stacks['w2'].append(_pad2(norm(lk[5], (FFN_DIM, HIDDEN)),
                                  F_PAD, H_PAD).astype(jnp.bfloat16))
        stacks['b2'].append(zero_h)
        stacks['g2'].append(gamma)
        stacks['be2'].append(zero_h)

    for name, lst in stacks.items():
        params[name] = jnp.stack(lst)     # leading NUM_LAYERS axis
    return params


class PallasVerifier:
    """Pallas TPU re-implementation of Verifier.forward()."""

    def __init__(self, key, max_sentence_length=MAX_SENTENCE_LEN,
                 max_question_length=MAX_QUESTION_LEN, topK=3,
                 bert_or_sbert='bert'):
        if bert_or_sbert not in ('bert', 'sbert'):
            raise Exception('Unknown model name for the verifier!')
        self.max_sentence_length = max_sentence_length
        self.max_question_length = max_question_length
        self.topK = topK
        self.model_name = bert_or_sbert
        kq, kc = jax.random.split(key)
        qp = init_encoder_params(kq)    # separate query model
        cp = init_encoder_params(kc)    # separate context model
        # stack the two param trees along a leading "encoder" axis so both
        # encoders run inside one fused pallas_call
        self.params = {n: jnp.stack([qp[n], cp[n]]) for n in qp}
        self._fwd = jax.jit(functools.partial(_forward_impl,
                                              pool_mode=self.model_name))

    def forward(self, q_ids, q_mask, s_ids, s_mask):
        """Matches Verifier.forward: (query_emb, context_emb.view(B, n_sent, -1))."""
        return self._fwd(self.params, q_ids, q_mask, s_ids, s_mask)


# -------------------------- main --------------------------

if __name__ == "__main__":
    key = jax.random.PRNGKey(0)
    k_model, k_q, k_s = jax.random.split(key, 3)

    B = 2                      # batch of questions
    NUM_SENTENCES = 3          # sentences per document
    Lq = MAX_QUESTION_LEN
    Ls = MAX_SENTENCE_LEN

    # synthetic "tokenized" inputs (stand-in for the HF tokenizer output)
    q_ids = jax.random.randint(k_q, (B, Lq), 1, VOCAB, dtype=jnp.int32)
    s_ids = jax.random.randint(k_s, (B * NUM_SENTENCES, Ls), 1, VOCAB,
                               dtype=jnp.int32)
    q_lens = jnp.array([Lq, 5], jnp.int32)
    s_lens = jnp.array([Ls, 10, 2, 7, Ls, 4], jnp.int32)
    q_mask = (jnp.arange(Lq)[None, :] < q_lens[:, None]).astype(jnp.float32)
    s_mask = (jnp.arange(Ls)[None, :] < s_lens[:, None]).astype(jnp.float32)

    # default 'bert' path: CLS pooler
    verifier = PallasVerifier(k_model, bert_or_sbert='bert')
    q_emb, c_emb = verifier.forward(q_ids, q_mask, s_ids, s_mask)
    jax.block_until_ready((q_emb, c_emb))
    assert q_emb.shape == (B, HIDDEN)
    assert c_emb.shape == (B, NUM_SENTENCES, HIDDEN)
    assert bool(jnp.all(jnp.isfinite(q_emb))) and bool(jnp.all(jnp.isfinite(c_emb)))

    # 'sbert' path: masked mean pooling + L2 normalization
    verifier_s = PallasVerifier(k_model, bert_or_sbert='sbert')
    q_emb_s, c_emb_s = verifier_s.forward(q_ids, q_mask, s_ids, s_mask)
    jax.block_until_ready((q_emb_s, c_emb_s))
    assert q_emb_s.shape == (B, HIDDEN)
    assert c_emb_s.shape == (B, NUM_SENTENCES, HIDDEN)
    norms = jnp.sqrt(jnp.sum(q_emb_s * q_emb_s, axis=-1))
    assert bool(jnp.allclose(norms, 1.0, atol=1e-3))

    print("KERNEL_OK")
</pallas_src>

<mosaic_0001>
module attributes {stable_mosaic.version = 11 : i64} {
  func.func @kernel(%arg0: i32, %arg1: i32, %arg2: memref<1x128x128xf32, #tpu.memory_space<vmem>>, %arg3: memref<1x128x128xf32, #tpu.memory_space<vmem>>, %arg4: memref<1x8x128xf32, #tpu.memory_space<vmem>>, %arg5: memref<1x1x128x128xbf16, #tpu.memory_space<vmem>>, %arg6: memref<1x1x1x128xf32, #tpu.memory_space<vmem>>, %arg7: memref<1x1x128x128xbf16, #tpu.memory_space<vmem>>, %arg8: memref<1x1x1x128xf32, #tpu.memory_space<vmem>>, %arg9: memref<1x1x128x128xbf16, #tpu.memory_space<vmem>>, %arg10: memref<1x1x1x128xf32, #tpu.memory_space<vmem>>, %arg11: memref<1x1x128x128xbf16, #tpu.memory_space<vmem>>, %arg12: memref<1x1x1x128xf32, #tpu.memory_space<vmem>>, %arg13: memref<1x1x1x128xf32, #tpu.memory_space<vmem>>, %arg14: memref<1x1x1x128xf32, #tpu.memory_space<vmem>>, %arg15: memref<1x1x128x128xbf16, #tpu.memory_space<vmem>>, %arg16: memref<1x1x1x128xf32, #tpu.memory_space<vmem>>, %arg17: memref<1x1x128x128xbf16, #tpu.memory_space<vmem>>, %arg18: memref<1x1x1x128xf32, #tpu.memory_space<vmem>>, %arg19: memref<1x1x1x128xf32, #tpu.memory_space<vmem>>, %arg20: memref<1x1x1x128xf32, #tpu.memory_space<vmem>>, %arg21: memref<1x128x128xbf16, #tpu.memory_space<vmem>>, %arg22: memref<1x1x128xf32, #tpu.memory_space<vmem>>, %arg23: memref<1x8x128xf32, #tpu.memory_space<vmem>>, %arg24: memref<128x128xf32, #tpu.memory_space<vmem>>, %arg25: memref<2x128x128xbf16, #tpu.memory_space<vmem>>, %arg26: memref<128x128xbf16, #tpu.memory_space<vmem>>, %arg27: memref<2x128x128xbf16, #tpu.memory_space<vmem>>) attributes {dimension_semantics = [#tpu.dimension_semantics<parallel>, #tpu.dimension_semantics<arbitrary>], iteration_bounds = array<i64: 2, 2>, scalar_prefetch = 0 : i64, scratch_operands = 4 : i64, tpu.core_type = #tpu.core_type<tc>, window_params = [{transform_indices = @transform_0, window_bounds = array<i64: 1, 128, 128>}, {transform_indices = @transform_1, window_bounds = array<i64: 1, 128, 128>}, {transform_indices = @transform_2, window_bounds = array<i64: 1, 8, 128>}, {transform_indices = @transform_3, window_bounds = array<i64: 1, 1, 128, 128>}, {transform_indices = @transform_4, window_bounds = array<i64: 1, 1, 1, 128>}, {transform_indices = @transform_5, window_bounds = array<i64: 1, 1, 128, 128>}, {transform_indices = @transform_6, window_bounds = array<i64: 1, 1, 1, 128>}, {transform_indices = @transform_7, window_bounds = array<i64: 1, 1, 128, 128>}, {transform_indices = @transform_8, window_bounds = array<i64: 1, 1, 1, 128>}, {transform_indices = @transform_9, window_bounds = array<i64: 1, 1, 128, 128>}, {transform_indices = @transform_10, window_bounds = array<i64: 1, 1, 1, 128>}, {transform_indices = @transform_11, window_bounds = array<i64: 1, 1, 1, 128>}, {transform_indices = @transform_12, window_bounds = array<i64: 1, 1, 1, 128>}, {transform_indices = @transform_13, window_bounds = array<i64: 1, 1, 128, 128>}, {transform_indices = @transform_14, window_bounds = array<i64: 1, 1, 1, 128>}, {transform_indices = @transform_15, window_bounds = array<i64: 1, 1, 128, 128>}, {transform_indices = @transform_16, window_bounds = array<i64: 1, 1, 1, 128>}, {transform_indices = @transform_17, window_bounds = array<i64: 1, 1, 1, 128>}, {transform_indices = @transform_18, window_bounds = array<i64: 1, 1, 1, 128>}, {transform_indices = @transform_19, window_bounds = array<i64: 1, 128, 128>}, {transform_indices = @transform_20, window_bounds = array<i64: 1, 1, 128>}, {transform_indices = @transform_21, window_bounds = array<i64: 1, 8, 128>}]} {
    %c0_i32 = arith.constant 0 : i32
    %0 = arith.cmpi eq, %arg1, %c0_i32 : i32
    %1 = arith.extui %0 : i1 to i32
    %c0_i32_0 = arith.constant 0 : i32
    %2 = arith.cmpi ne, %1, %c0_i32_0 : i32
    scf.if %2 {
      %c0_132 = arith.constant 0 : index
      %c0_133 = arith.constant 0 : index
      %c0_134 = arith.constant 0 : index
      %209 = vector.load %arg2[%c0_132, %c0_133, %c0_134] : memref<1x128x128xf32, #tpu.memory_space<vmem>>, vector<1x128x128xf32>
      %210 = vector.shape_cast %209 : vector<1x128x128xf32> to vector<128x128xf32>
      %c0_135 = arith.constant 0 : index
      %c0_136 = arith.constant 0 : index
      %211 = vector.load %arg24[%c0_135, %c0_136] : memref<128x128xf32, #tpu.memory_space<vmem>>, vector<128x128xf32>
      tpu.vector_store %arg24[%c0_135, %c0_136], %210 {strides = array<i32>} : memref<128x128xf32, #tpu.memory_space<vmem>>, vector<128x128xf32>,
    } else {
    }
    %3 = tpu.iota {dimensions = array<i32: 1>} : vector<1x128xi32>
    %c32_i32 = arith.constant 32 : i32
    %4 = vector.broadcast %c32_i32 : i32 to vector<1x128xi32>
    %5 = arith.cmpi slt, %3, %4 : vector<1x128xi32>
    %6 = arith.extui %5 : vector<1x128xi1> to vector<1x128xi32>
    %7 = arith.sitofp %6 : vector<1x128xi32> to vector<1x128xf32>
    %c0 = arith.constant 0 : index
    %c0_1 = arith.constant 0 : index
    %8 = vector.load %arg24[%c0, %c0_1] : memref<128x128xf32, #tpu.memory_space<vmem>>, vector<128x128xf32>
    %9 = arith.truncf %8 : vector<128x128xf32> to vector<128x128xbf16>
    %c0_2 = arith.constant 0 : index
    %c0_3 = arith.constant 0 : index
    %c0_4 = arith.constant 0 : index
    %c0_5 = arith.constant 0 : index
    %10 = vector.load %arg5[%c0_2, %c0_3, %c0_4, %c0_5] : memref<1x1x128x128xbf16, #tpu.memory_space<vmem>>, vector<1x1x128x128xbf16>
    %11 = vector.shape_cast %10 : vector<1x1x128x128xbf16> to vector<128x128xbf16>
    %cst = arith.constant dense<0.000000e+00> : vector<128x128xf32>
    %12 = tpu.matmul %9, %11, %cst {dimension_numbers = #tpu.dot_dimension_numbers<[1], [0], [0], [1], [0, 0, 1, 1], [], []>} : vector<128x128xbf16>, vector<128x128xbf16>, vector<128x128xf32> -> vector<128x128xf32>
    %c0_6 = arith.constant 0 : index
    %c0_7 = arith.constant 0 : index
    %c0_8 = arith.constant 0 : index
    %c0_9 = arith.constant 0 : index
    %13 = vector.load %arg6[%c0_6, %c0_7, %c0_8, %c0_9] : memref<1x1x1x128xf32, #tpu.memory_space<vmem>>, vector<1x1x1x128xf32>
    %14 = vector.shape_cast %13 : vector<1x1x1x128xf32> to vector<1x128xf32>
    %15 = vector.broadcast %14 : vector<1x128xf32> to vector<128x128xf32>
    %16 = arith.addf %12, %15 : vector<128x128xf32>
    %c0_10 = arith.constant 0 : index
    %c0_11 = arith.constant 0 : index
    %c0_12 = arith.constant 0 : index
    %c0_13 = arith.constant 0 : index
    %17 = vector.load %arg7[%c0_10, %c0_11, %c0_12, %c0_13] : memref<1x1x128x128xbf16, #tpu.memory_space<vmem>>, vector<1x1x128x128xbf16>
    %18 = vector.shape_cast %17 : vector<1x1x128x128xbf16> to vector<128x128xbf16>
    %cst_14 = arith.constant dense<0.000000e+00> : vector<128x128xf32>
    %19 = tpu.matmul %9, %18, %cst_14 {dimension_numbers = #tpu.dot_dimension_numbers<[1], [0], [0], [1], [0, 0, 1, 1], [], []>} : vector<128x128xbf16>, vector<128x128xbf16>, vector<128x128xf32> -> vector<128x128xf32>
    %c0_15 = arith.constant 0 : index
    %c0_16 = arith.constant 0 : index
    %c0_17 = arith.constant 0 : index
    %c0_18 = arith.constant 0 : index
    %20 = vector.load %arg8[%c0_15, %c0_16, %c0_17, %c0_18] : memref<1x1x1x128xf32, #tpu.memory_space<vmem>>, vector<1x1x1x128xf32>
    %21 = vector.shape_cast %20 : vector<1x1x1x128xf32> to vector<1x128xf32>
    %22 = vector.broadcast %21 : vector<1x128xf32> to vector<128x128xf32>
    %23 = arith.addf %19, %22 : vector<128x128xf32>
    %c0_19 = arith.constant 0 : index
    %c0_20 = arith.constant 0 : index
    %c0_21 = arith.constant 0 : index
    %c0_22 = arith.constant 0 : index
    %24 = vector.load %arg9[%c0_19, %c0_20, %c0_21, %c0_22] : memref<1x1x128x128xbf16, #tpu.memory_space<vmem>>, vector<1x1x128x128xbf16>
    %25 = vector.shape_cast %24 : vector<1x1x128x128xbf16> to vector<128x128xbf16>
    %cst_23 = arith.constant dense<0.000000e+00> : vector<128x128xf32>
    %26 = tpu.matmul %9, %25, %cst_23 {dimension_numbers = #tpu.dot_dimension_numbers<[1], [0], [0], [1], [0, 0, 1, 1], [], []>} : vector<128x128xbf16>, vector<128x128xbf16>, vector<128x128xf32> -> vector<128x128xf32>
    %c0_24 = arith.constant 0 : index
    %c0_25 = arith.constant 0 : index
    %c0_26 = arith.constant 0 : index
    %c0_27 = arith.constant 0 : index
    %27 = vector.load %arg10[%c0_24, %c0_25, %c0_26, %c0_27] : memref<1x1x1x128xf32, #tpu.memory_space<vmem>>, vector<1x1x1x128xf32>
    %28 = vector.shape_cast %27 : vector<1x1x1x128xf32> to vector<1x128xf32>
    %29 = vector.broadcast %28 : vector<1x128xf32> to vector<128x128xf32>
    %30 = arith.addf %26, %29 : vector<128x128xf32>
    %31 = arith.truncf %23 : vector<128x128xf32> to vector<128x128xbf16>
    %c0_28 = arith.constant 0 : index
    %c0_29 = arith.constant 0 : index
    %32 = vector.load %arg26[%c0_28, %c0_29] : memref<128x128xbf16, #tpu.memory_space<vmem>>, vector<128x128xbf16>
    tpu.vector_store %arg26[%c0_28, %c0_29], %31 {strides = array<i32>} : memref<128x128xbf16, #tpu.memory_space<vmem>>, vector<128x128xbf16>,
    %c0_i32_30 = arith.constant 0 : i32
    %33 = vector.broadcast %c0_i32_30 : i32 to vector<1x128xi32>
    %34 = arith.cmpi sge, %3, %33 : vector<1x128xi32>
    %c16_i32 = arith.constant 16 : i32
    %35 = vector.broadcast %c16_i32 : i32 to vector<1x128xi32>
    %36 = arith.cmpi slt, %3, %35 : vector<1x128xi32>
    %37 = arith.andi %34, %36 : vector<1x128xi1>
    %38 = arith.extui %37 : vector<1x128xi1> to vector<1x128xi32>
    %39 = arith.sitofp %38 : vector<1x128xi32> to vector<1x128xf32>
    %40 = vector.broadcast %39 : vector<1x128xf32> to vector<128x128xf32>
    %41 = arith.mulf %16, %40 : vector<128x128xf32>
    %42 = arith.truncf %41 : vector<128x128xf32> to vector<128x128xbf16>
    %c0_31 = arith.constant 0 : index
    %c0_32 = arith.constant 0 : index
    %c0_33 = arith.constant 0 : index
    %43 = vector.load %arg25[%c0_31, %c0_32, %c0_33] : memref<2x128x128xbf16, #tpu.memory_space<vmem>>, vector<1x128x128xbf16>
    %44 = vector.shape_cast %43 : vector<1x128x128xbf16> to vector<128x128xbf16>
    %45 = vector.shape_cast %42 : vector<128x128xbf16> to vector<1x128x128xbf16>
    tpu.vector_store %arg25[%c0_31, %c0_32, %c0_33], %45 {strides = array<i32>} : memref<2x128x128xbf16, #tpu.memory_space<vmem>>, vector<1x128x128xbf16>,
    %46 = vector.broadcast %39 : vector<1x128xf32> to vector<128x128xf32>
    %47 = arith.mulf %30, %46 : vector<128x128xf32>
    %48 = arith.truncf %47 : vector<128x128xf32> to vector<128x128xbf16>
    %c0_34 = arith.constant 0 : index
    %c0_35 = arith.constant 0 : index
    %c0_36 = arith.constant 0 : index
    %49 = vector.load %arg27[%c0_34, %c0_35, %c0_36] : memref<2x128x128xbf16, #tpu.memory_space<vmem>>, vector<1x128x128xbf16>
    %50 = vector.shape_cast %49 : vector<1x128x128xbf16> to vector<128x128xbf16>
    %51 = vector.shape_cast %48 : vector<128x128xbf16> to vector<1x128x128xbf16>
    tpu.vector_store %arg27[%c0_34, %c0_35, %c0_36], %51 {strides = array<i32>} : memref<2x128x128xbf16, #tpu.memory_space<vmem>>, vector<1x128x128xbf16>,
    %c16_i32_37 = arith.constant 16 : i32
    %52 = vector.broadcast %c16_i32_37 : i32 to vector<1x128xi32>
    %53 = arith.cmpi sge, %3, %52 : vector<1x128xi32>
    %c32_i32_38 = arith.constant 32 : i32
    %54 = vector.broadcast %c32_i32_38 : i32 to vector<1x128xi32>
    %55 = arith.cmpi slt, %3, %54 : vector<1x128xi32>
    %56 = arith.andi %53, %55 : vector<1x128xi1>
    %57 = arith.extui %56 : vector<1x128xi1> to vector<1x128xi32>
    %58 = arith.sitofp %57 : vector<1x128xi32> to vector<1x128xf32>
    %59 = vector.broadcast %58 : vector<1x128xf32> to vector<128x128xf32>
    %60 = arith.mulf %16, %59 : vector<128x128xf32>
    %61 = arith.truncf %60 : vector<128x128xf32> to vector<128x128xbf16>
    %c1 = arith.constant 1 : index
    %c0_39 = arith.constant 0 : index
    %c0_40 = arith.constant 0 : index
    %62 = vector.load %arg25[%c1, %c0_39, %c0_40] : memref<2x128x128xbf16, #tpu.memory_space<vmem>>, vector<1x128x128xbf16>
    %63 = vector.shape_cast %62 : vector<1x128x128xbf16> to vector<128x128xbf16>
    %64 = vector.shape_cast %61 : vector<128x128xbf16> to vector<1x128x128xbf16>
    tpu.vector_store %arg25[%c1, %c0_39, %c0_40], %64 {strides = array<i32>} : memref<2x128x128xbf16, #tpu.memory_space<vmem>>, vector<1x128x128xbf16>,
    %65 = vector.broadcast %58 : vector<1x128xf32> to vector<128x128xf32>
    %66 = arith.mulf %30, %65 : vector<128x128xf32>
    %67 = arith.truncf %66 : vector<128x128xf32> to vector<128x128xbf16>
    %c1_41 = arith.constant 1 : index
    %c0_42 = arith.constant 0 : index
    %c0_43 = arith.constant 0 : index
    %68 = vector.load %arg27[%c1_41, %c0_42, %c0_43] : memref<2x128x128xbf16, #tpu.memory_space<vmem>>, vector<1x128x128xbf16>
    %69 = vector.shape_cast %68 : vector<1x128x128xbf16> to vector<128x128xbf16>
    %70 = vector.shape_cast %67 : vector<128x128xbf16> to vector<1x128x128xbf16>
    tpu.vector_store %arg27[%c1_41, %c0_42, %c0_43], %70 {strides = array<i32>} : memref<2x128x128xbf16, #tpu.memory_space<vmem>>, vector<1x128x128xbf16>,
    %c0_44 = arith.constant 0 : index
    %c0_45 = arith.constant 0 : index
    %c0_46 = arith.constant 0 : index
    %71 = vector.load %arg3[%c0_44, %c0_45, %c0_46] : memref<1x128x128xf32, #tpu.memory_space<vmem>>, vector<1x128x128xf32>
    %72 = vector.shape_cast %71 : vector<1x128x128xf32> to vector<128x128xf32>
    %cst_47 = arith.constant 0.000000e+00 : f32
    %73 = vector.broadcast %cst_47 : f32 to vector<128x128xf32>
    %c0_48 = arith.constant 0 : index
    %c0_49 = arith.constant 0 : index
    %c0_50 = arith.constant 0 : index
    %74 = vector.load %arg25[%c0_48, %c0_49, %c0_50] : memref<2x128x128xbf16, #tpu.memory_space<vmem>>, vector<1x128x128xbf16>
    %75 = vector.shape_cast %74 : vector<1x128x128xbf16> to vector<128x128xbf16>
    %c0_51 = arith.constant 0 : index
    %c0_52 = arith.constant 0 : index
    %76 = vector.load %arg26[%c0_51, %c0_52] : memref<128x128xbf16, #tpu.memory_space<vmem>>, vector<128x128xbf16>
    %cst_53 = arith.constant dense<0.000000e+00> : vector<128x128xf32>
    %77 = tpu.matmul %75, %76, %cst_53 {dimension_numbers = #tpu.dot_dimension_numbers<[1], [1], [0], [0], [0, 0, 1, 0], [], []>} : vector<128x128xbf16>, vector<128x128xbf16>, vector<128x128xf32> -> vector<128x128xf32>
    %78 = arith.addf %77, %72 : vector<128x128xf32>
    %cst_54 = arith.constant dense<0xFF800000> : vector<128xf32>
    %79 = vector.multi_reduction <maximumf>, %78, %cst_54 [1] : vector<128x128xf32> to vector<128xf32>
    %80 = vector.shape_cast %79 : vector<128xf32> to vector<128x1xf32>
    %81 = vector.broadcast %80 : vector<128x1xf32> to vector<128x128xf32>
    %82 = arith.subf %78, %81 : vector<128x128xf32>
    %83 = math.exp %82 : vector<128x128xf32>
    %cst_55 = arith.constant dense<0.000000e+00> : vector<128xf32>
    %84 = vector.multi_reduction <add>, %83, %cst_55 [1] : vector<128x128xf32> to vector<128xf32>
    %85 = vector.shape_cast %84 : vector<128xf32> to vector<128x1xf32>
    %86 = tpu.reciprocal %85 {approx = true} : vector<128x1xf32> -> vector<128x1xf32>
    %87 = vector.broadcast %86 : vector<128x1xf32> to vector<128x128xf32>
    %88 = arith.mulf %83, %87 : vector<128x128xf32>
    %89 = arith.truncf %88 : vector<128x128xf32> to vector<128x128xbf16>
    %c0_56 = arith.constant 0 : index
    %c0_57 = arith.constant 0 : index
    %c0_58 = arith.constant 0 : index
    %90 = vector.load %arg27[%c0_56, %c0_57, %c0_58] : memref<2x128x128xbf16, #tpu.memory_space<vmem>>, vector<1x128x128xbf16>
    %91 = vector.shape_cast %90 : vector<1x128x128xbf16> to vector<128x128xbf16>
    %cst_59 = arith.constant dense<0.000000e+00> : vector<128x128xf32>
    %92 = tpu.matmul %89, %91, %cst_59 {dimension_numbers = #tpu.dot_dimension_numbers<[1], [0], [0], [1], [0, 0, 1, 1], [], []>} : vector<128x128xbf16>, vector<128x128xbf16>, vector<128x128xf32> -> vector<128x128xf32>
    %93 = arith.addf %73, %92 : vector<128x128xf32>
    %c1_60 = arith.constant 1 : index
    %c0_61 = arith.constant 0 : index
    %c0_62 = arith.constant 0 : index
    %94 = vector.load %arg25[%c1_60, %c0_61, %c0_62] : memref<2x128x128xbf16, #tpu.memory_space<vmem>>, vector<1x128x128xbf16>
    %95 = vector.shape_cast %94 : vector<1x128x128xbf16> to vector<128x128xbf16>
    %c0_63 = arith.constant 0 : index
    %c0_64 = arith.constant 0 : index
    %96 = vector.load %arg26[%c0_63, %c0_64] : memref<128x128xbf16, #tpu.memory_space<vmem>>, vector<128x128xbf16>
    %cst_65 = arith.constant dense<0.000000e+00> : vector<128x128xf32>
    %97 = tpu.matmul %95, %96, %cst_65 {dimension_numbers = #tpu.dot_dimension_numbers<[1], [1], [0], [0], [0, 0, 1, 0], [], []>} : vector<128x128xbf16>, vector<128x128xbf16>, vector<128x128xf32> -> vector<128x128xf32>
    %98 = arith.addf %97, %72 : vector<128x128xf32>
    %cst_66 = arith.constant dense<0xFF800000> : vector<128xf32>
    %99 = vector.multi_reduction <maximumf>, %98, %cst_66 [1] : vector<128x128xf32> to vector<128xf32>
    %100 = vector.shape_cast %99 : vector<128xf32> to vector<128x1xf32>
    %101 = vector.broadcast %100 : vector<128x1xf32> to vector<128x128xf32>
    %102 = arith.subf %98, %101 : vector<128x128xf32>
    %103 = math.exp %102 : vector<128x128xf32>
    %cst_67 = arith.constant dense<0.000000e+00> : vector<128xf32>
    %104 = vector.multi_reduction <add>, %103, %cst_67 [1] : vector<128x128xf32> to vector<128xf32>
    %105 = vector.shape_cast %104 : vector<128xf32> to vector<128x1xf32>
    %106 = tpu.reciprocal %105 {approx = true} : vector<128x1xf32> -> vector<128x1xf32>
    %107 = vector.broadcast %106 : vector<128x1xf32> to vector<128x128xf32>
    %108 = arith.mulf %103, %107 : vector<128x128xf32>
    %109 = arith.truncf %108 : vector<128x128xf32> to vector<128x128xbf16>
    %c1_68 = arith.constant 1 : index
    %c0_69 = arith.constant 0 : index
    %c0_70 = arith.constant 0 : index
    %110 = vector.load %arg27[%c1_68, %c0_69, %c0_70] : memref<2x128x128xbf16, #tpu.memory_space<vmem>>, vector<1x128x128xbf16>
    %111 = vector.shape_cast %110 : vector<1x128x128xbf16> to vector<128x128xbf16>
    %cst_71 = arith.constant dense<0.000000e+00> : vector<128x128xf32>
    %112 = tpu.matmul %109, %111, %cst_71 {dimension_numbers = #tpu.dot_dimension_numbers<[1], [0], [0], [1], [0, 0, 1, 1], [], []>} : vector<128x128xbf16>, vector<128x128xbf16>, vector<128x128xf32> -> vector<128x128xf32>
    %113 = arith.addf %93, %112 : vector<128x128xf32>
    %114 = arith.truncf %113 : vector<128x128xf32> to vector<128x128xbf16>
    %c0_72 = arith.constant 0 : index
    %c0_73 = arith.constant 0 : index
    %c0_74 = arith.constant 0 : index
    %c0_75 = arith.constant 0 : index
    %115 = vector.load %arg11[%c0_72, %c0_73, %c0_74, %c0_75] : memref<1x1x128x128xbf16, #tpu.memory_space<vmem>>, vector<1x1x128x128xbf16>
    %116 = vector.shape_cast %115 : vector<1x1x128x128xbf16> to vector<128x128xbf16>
    %cst_76 = arith.constant dense<0.000000e+00> : vector<128x128xf32>
    %117 = tpu.matmul %114, %116, %cst_76 {dimension_numbers = #tpu.dot_dimension_numbers<[1], [0], [0], [1], [0, 0, 1, 1], [], []>} : vector<128x128xbf16>, vector<128x128xbf16>, vector<128x128xf32> -> vector<128x128xf32>
    %c0_77 = arith.constant 0 : index
    %c0_78 = arith.constant 0 : index
    %c0_79 = arith.constant 0 : index
    %c0_80 = arith.constant 0 : index
    %118 = vector.load %arg12[%c0_77, %c0_78, %c0_79, %c0_80] : memref<1x1x1x128xf32, #tpu.memory_space<vmem>>, vector<1x1x1x128xf32>
    %119 = vector.shape_cast %118 : vector<1x1x1x128xf32> to vector<1x128xf32>
    %120 = vector.broadcast %119 : vector<1x128xf32> to vector<128x128xf32>
    %121 = arith.addf %117, %120 : vector<128x128xf32>
    %122 = arith.addf %8, %121 : vector<128x128xf32>
    %c0_81 = arith.constant 0 : index
    %c0_82 = arith.constant 0 : index
    %c0_83 = arith.constant 0 : index
    %c0_84 = arith.constant 0 : index
    %123 = vector.load %arg13[%c0_81, %c0_82, %c0_83, %c0_84] : memref<1x1x1x128xf32, #tpu.memory_space<vmem>>, vector<1x1x1x128xf32>
    %124 = vector.shape_cast %123 : vector<1x1x1x128xf32> to vector<1x128xf32>
    %c0_85 = arith.constant 0 : index
    %c0_86 = arith.constant 0 : index
    %c0_87 = arith.constant 0 : index
    %c0_88 = arith.constant 0 : index
    %125 = vector.load %arg14[%c0_85, %c0_86, %c0_87, %c0_88] : memref<1x1x1x128xf32, #tpu.memory_space<vmem>>, vector<1x1x1x128xf32>
    %126 = vector.shape_cast %125 : vector<1x1x1x128xf32> to vector<1x128xf32>
    %cst_89 = arith.constant dense<0.000000e+00> : vector<128xf32>
    %127 = vector.multi_reduction <add>, %122, %cst_89 [1] : vector<128x128xf32> to vector<128xf32>
    %128 = vector.shape_cast %127 : vector<128xf32> to vector<128x1xf32>
    %cst_90 = arith.constant 3.125000e-02 : f32
    %129 = vector.broadcast %cst_90 : f32 to vector<128x1xf32>
    %130 = arith.mulf %128, %129 : vector<128x1xf32>
    %131 = vector.broadcast %130 : vector<128x1xf32> to vector<128x128xf32>
    %132 = arith.subf %122, %131 : vector<128x128xf32>
    %133 = vector.broadcast %7 : vector<1x128xf32> to vector<128x128xf32>
    %134 = arith.mulf %132, %133 : vector<128x128xf32>
    %135 = arith.mulf %134, %134 : vector<128x128xf32>
    %cst_91 = arith.constant dense<0.000000e+00> : vector<128xf32>
    %136 = vector.multi_reduction <add>, %135, %cst_91 [1] : vector<128x128xf32> to vector<128xf32>
    %137 = vector.shape_cast %136 : vector<128xf32> to vector<128x1xf32>
    %cst_92 = arith.constant 3.125000e-02 : f32
    %138 = vector.broadcast %cst_92 : f32 to vector<128x1xf32>
    %139 = arith.mulf %137, %138 : vector<128x1xf32>
    %cst_93 = arith.constant 9.99999996E-13 : f32
    %140 = vector.broadcast %cst_93 : f32 to vector<128x1xf32>
    %141 = arith.addf %139, %140 : vector<128x1xf32>
    %142 = math.rsqrt %141 : vector<128x1xf32>
    %143 = vector.broadcast %142 : vector<128x1xf32> to vector<128x128xf32>
    %144 = arith.mulf %134, %143 : vector<128x128xf32>
    %145 = vector.broadcast %124 : vector<1x128xf32> to vector<128x128xf32>
    %146 = arith.mulf %144, %145 : vector<128x128xf32>
    %147 = vector.broadcast %126 : vector<1x128xf32> to vector<128x128xf32>
    %148 = arith.addf %146, %147 : vector<128x128xf32>
    %149 = arith.truncf %148 : vector<128x128xf32> to vector<128x128xbf16>
    %c0_94 = arith.constant 0 : index
    %c0_95 = arith.constant 0 : index
    %c0_96 = arith.constant 0 : index
    %c0_97 = arith.constant 0 : index
    %150 = vector.load %arg15[%c0_94, %c0_95, %c0_96, %c0_97] : memref<1x1x128x128xbf16, #tpu.memory_space<vmem>>, vector<1x1x128x128xbf16>
    %151 = vector.shape_cast %150 : vector<1x1x128x128xbf16> to vector<128x128xbf16>
    %cst_98 = arith.constant dense<0.000000e+00> : vector<128x128xf32>
    %152 = tpu.matmul %149, %151, %cst_98 {dimension_numbers = #tpu.dot_dimension_numbers<[1], [0], [0], [1], [0, 0, 1, 1], [], []>} : vector<128x128xbf16>, vector<128x128xbf16>, vector<128x128xf32> -> vector<128x128xf32>
    %c0_99 = arith.constant 0 : index
    %c0_100 = arith.constant 0 : index
    %c0_101 = arith.constant 0 : index
    %c0_102 = arith.constant 0 : index
    %153 = vector.load %arg16[%c0_99, %c0_100, %c0_101, %c0_102] : memref<1x1x1x128xf32, #tpu.memory_space<vmem>>, vector<1x1x1x128xf32>
    %154 = vector.shape_cast %153 : vector<1x1x1x128xf32> to vector<1x128xf32>
    %155 = vector.broadcast %154 : vector<1x128xf32> to vector<128x128xf32>
    %156 = arith.addf %152, %155 : vector<128x128xf32>
    %157 = arith.mulf %156, %156 : vector<128x128xf32>
    %158 = arith.mulf %156, %157 : vector<128x128xf32>
    %cst_103 = arith.constant 4.471500e-02 : f32
    %159 = vector.broadcast %cst_103 : f32 to vector<128x128xf32>
    %160 = arith.mulf %159, %158 : vector<128x128xf32>
    %161 = arith.addf %156, %160 : vector<128x128xf32>
    %cst_104 = arith.constant 0.797884583 : f32
    %162 = vector.broadcast %cst_104 : f32 to vector<128x128xf32>
    %163 = arith.mulf %162, %161 : vector<128x128xf32>
    %164 = math.tanh %163 : vector<128x128xf32>
    %cst_105 = arith.constant 1.000000e+00 : f32
    %165 = vector.broadcast %cst_105 : f32 to vector<128x128xf32>
    %166 = arith.addf %165, %164 : vector<128x128xf32>
    %cst_106 = arith.constant 5.000000e-01 : f32
    %167 = vector.broadcast %cst_106 : f32 to vector<128x128xf32>
    %168 = arith.mulf %167, %166 : vector<128x128xf32>
    %169 = arith.mulf %156, %168 : vector<128x128xf32>
    %170 = arith.truncf %169 : vector<128x128xf32> to vector<128x128xbf16>
    %c0_107 = arith.constant 0 : index
    %c0_108 = arith.constant 0 : index
    %c0_109 = arith.constant 0 : index
    %c0_110 = arith.constant 0 : index
    %171 = vector.load %arg17[%c0_107, %c0_108, %c0_109, %c0_110] : memref<1x1x128x128xbf16, #tpu.memory_space<vmem>>, vector<1x1x128x128xbf16>
    %172 = vector.shape_cast %171 : vector<1x1x128x128xbf16> to vector<128x128xbf16>
    %cst_111 = arith.constant dense<0.000000e+00> : vector<128x128xf32>
    %173 = tpu.matmul %170, %172, %cst_111 {dimension_numbers = #tpu.dot_dimension_numbers<[1], [0], [0], [1], [0, 0, 1, 1], [], []>} : vector<128x128xbf16>, vector<128x128xbf16>, vector<128x128xf32> -> vector<128x128xf32>
    %c0_112 = arith.constant 0 : index
    %c0_113 = arith.constant 0 : index
    %c0_114 = arith.constant 0 : index
    %c0_115 = arith.constant 0 : index
    %174 = vector.load %arg18[%c0_112, %c0_113, %c0_114, %c0_115] : memref<1x1x1x128xf32, #tpu.memory_space<vmem>>, vector<1x1x1x128xf32>
    %175 = vector.shape_cast %174 : vector<1x1x1x128xf32> to vector<1x128xf32>
    %176 = vector.broadcast %175 : vector<1x128xf32> to vector<128x128xf32>
    %177 = arith.addf %173, %176 : vector<128x128xf32>
    %178 = arith.addf %148, %177 : vector<128x128xf32>
    %c0_116 = arith.constant 0 : index
    %c0_117 = arith.constant 0 : index
    %c0_118 = arith.constant 0 : index
    %c0_119 = arith.constant 0 : index
    %179 = vector.load %arg19[%c0_116, %c0_117, %c0_118, %c0_119] : memref<1x1x1x128xf32, #tpu.memory_space<vmem>>, vector<1x1x1x128xf32>
    %180 = vector.shape_cast %179 : vector<1x1x1x128xf32> to vector<1x128xf32>
    %c0_120 = arith.constant 0 : index
    %c0_121 = arith.constant 0 : index
    %c0_122 = arith.constant 0 : index
    %c0_123 = arith.constant 0 : index
    %181 = vector.load %arg20[%c0_120, %c0_121, %c0_122, %c0_123] : memref<1x1x1x128xf32, #tpu.memory_space<vmem>>, vector<1x1x1x128xf32>
    %182 = vector.shape_cast %181 : vector<1x1x1x128xf32> to vector<1x128xf32>
    %cst_124 = arith.constant dense<0.000000e+00> : vector<128xf32>
    %183 = vector.multi_reduction <add>, %178, %cst_124 [1] : vector<128x128xf32> to vector<128xf32>
    %184 = vector.shape_cast %183 : vector<128xf32> to vector<128x1xf32>
    %cst_125 = arith.constant 3.125000e-02 : f32
    %185 = vector.broadcast %cst_125 : f32 to vector<128x1xf32>
    %186 = arith.mulf %184, %185 : vector<128x1xf32>
    %187 = vector.broadcast %186 : vector<128x1xf32> to vector<128x128xf32>
    %188 = arith.subf %178, %187 : vector<128x128xf32>
    %189 = vector.broadcast %7 : vector<1x128xf32> to vector<128x128xf32>
    %190 = arith.mulf %188, %189 : vector<128x128xf32>
    %191 = arith.mulf %190, %190 : vector<128x128xf32>
    %cst_126 = arith.constant dense<0.000000e+00> : vector<128xf32>
    %192 = vector.multi_reduction <add>, %191, %cst_126 [1] : vector<128x128xf32> to vector<128xf32>
    %193 = vector.shape_cast %192 : vector<128xf32> to vector<128x1xf32>
    %cst_127 = arith.constant 3.125000e-02 : f32
    %194 = vector.broadcast %cst_127 : f32 to vector<128x1xf32>
    %195 = arith.mulf %193, %194 : vector<128x1xf32>
    %cst_128 = arith.constant 9.99999996E-13 : f32
    %196 = vector.broadcast %cst_128 : f32 to vector<128x1xf32>
    %197 = arith.addf %195, %196 : vector<128x1xf32>
    %198 = math.rsqrt %197 : vector<128x1xf32>
    %199 = vector.broadcast %198 : vector<128x1xf32> to vector<128x128xf32>
    %200 = arith.mulf %190, %199 : vector<128x128xf32>
    %201 = vector.broadcast %180 : vector<1x128xf32> to vector<128x128xf32>
    %202 = arith.mulf %200, %201 : vector<128x128xf32>
    %203 = vector.broadcast %182 : vector<1x128xf32> to vector<128x128xf32>
    %204 = arith.addf %202, %203 : vector<128x128xf32>
    %c0_129 = arith.constant 0 : index
    %c0_130 = arith.constant 0 : index
    %205 = vector.load %arg24[%c0_129, %c0_130] : memref<128x128xf32, #tpu.memory_space<vmem>>, vector<128x128xf32>
    tpu.vector_store %arg24[%c0_129, %c0_130], %204 {strides = array<i32>} : memref<128x128xf32, #tpu.memory_space<vmem>>, vector<128x128xf32>,
    %c1_i32 = arith.constant 1 : i32
    %206 = arith.cmpi eq, %arg1, %c1_i32 : i32
    %207 = arith.extui %206 : i1 to i32
    %c0_i32_131 = arith.constant 0 : i32
    %208 = arith.cmpi ne, %207, %c0_i32_131 : i32
    scf.if %208 {
      %c0_132 = arith.constant 0 : index
      %c0_133 = arith.constant 0 : index
      %c0_134 = arith.constant 0 : index
      %209 = vector.load %arg4[%c0_132, %c0_133, %c0_134] : memref<1x8x128xf32, #tpu.memory_space<vmem>>, vector<1x8x128xf32>
      %210 = vector.shape_cast %209 : vector<1x8x128xf32> to vector<8x128xf32>
      %cst_135 = arith.constant dense<0.000000e+00> : vector<8x128xf32>
      %211 = tpu.matmul %210, %204, %cst_135 {dimension_numbers = #tpu.dot_dimension_numbers<[1], [0], [0], [1], [0, 0, 1, 1], [], []>} : vector<8x128xf32>, vector<128x128xf32>, vector<8x128xf32> -> vector<8x128xf32>
      %212 = arith.truncf %211 : vector<8x128xf32> to vector<8x128xbf16>
      %c0_136 = arith.constant 0 : index
      %c0_137 = arith.constant 0 : index
      %c0_138 = arith.constant 0 : index
      %213 = vector.load %arg21[%c0_136, %c0_137, %c0_138] : memref<1x128x128xbf16, #tpu.memory_space<vmem>>, vector<1x128x128xbf16>
      %214 = vector.shape_cast %213 : vector<1x128x128xbf16> to vector<128x128xbf16>
      %cst_139 = arith.constant dense<0.000000e+00> : vector<8x128xf32>
      %215 = tpu.matmul %212, %214, %cst_139 {dimension_numbers = #tpu.dot_dimension_numbers<[1], [0], [0], [1], [0, 0, 1, 1], [], []>} : vector<8x128xbf16>, vector<128x128xbf16>, vector<8x128xf32> -> vector<8x128xf32>
      %c0_140 = arith.constant 0 : index
      %c0_141 = arith.constant 0 : index
      %c0_142 = arith.constant 0 : index
      %216 = vector.load %arg22[%c0_140, %c0_141, %c0_142] : memref<1x1x128xf32, #tpu.memory_space<vmem>>, vector<1x1x128xf32>
      %217 = vector.shape_cast %216 : vector<1x1x128xf32> to vector<1x128xf32>
      %218 = vector.broadcast %217 : vector<1x128xf32> to vector<8x128xf32>
      %219 = arith.addf %215, %218 : vector<8x128xf32>
      %220 = math.tanh %219 : vector<8x128xf32>
      %c0_143 = arith.constant 0 : index
      %c0_144 = arith.constant 0 : index
      %c0_145 = arith.constant 0 : index
      %221 = vector.load %arg23[%c0_143, %c0_144, %c0_145] : memref<1x8x128xf32, #tpu.memory_space<vmem>>, vector<1x8x128xf32>
      %222 = vector.shape_cast %221 : vector<1x8x128xf32> to vector<8x128xf32>
      %223 = vector.shape_cast %220 : vector<8x128xf32> to vector<1x8x128xf32>
      tpu.vector_store %arg23[%c0_143, %c0_144, %c0_145], %223 {strides = array<i32>} : memref<1x8x128xf32, #tpu.memory_space<vmem>>, vector<1x8x128xf32>,
    } else {
    }
    return
  }
  func.func @transform_0(%arg0: i32, %arg1: i32) -> (i32, i32, i32) {
    %c0_i32 = arith.constant 0 : i32
    %c0_i32_0 = arith.constant 0 : i32
    %c0_i32_1 = arith.constant 0 : i32
    return %arg0, %c0_i32, %c0_i32_0 : i32, i32, i32
  }
  func.func @transform_1(%arg0: i32, %arg1: i32) -> (i32, i32, i32) {
    %c0_i32 = arith.constant 0 : i32
    %c0_i32_0 = arith.constant 0 : i32
    %c0_i32_1 = arith.constant 0 : i32
    return %arg0, %c0_i32, %c0_i32_0 : i32, i32, i32
  }
  func.func @transform_2(%arg0: i32, %arg1: i32) -> (i32, i32, i32) {
    %c0_i32 = arith.constant 0 : i32
    %c0_i32_0 = arith.constant 0 : i32
    %c0_i32_1 = arith.constant 0 : i32
    return %arg0, %c0_i32, %c0_i32_0 : i32, i32, i32
  }
  func.func @transform_3(%arg0: i32, %arg1: i32) -> (i32, i32, i32, i32) {
    %c0_i32 = arith.constant 0 : i32
    %c0_i32_0 = arith.constant 0 : i32
    %c0_i32_1 = arith.constant 0 : i32
    return %arg0, %arg1, %c0_i32, %c0_i32_0 : i32, i32, i32, i32
  }
  func.func @transform_4(%arg0: i32, %arg1: i32) -> (i32, i32, i32, i32) {
    %c0_i32 = arith.constant 0 : i32
    %c0_i32_0 = arith.constant 0 : i32
    %c0_i32_1 = arith.constant 0 : i32
    return %arg0, %arg1, %c0_i32, %c0_i32_0 : i32, i32, i32, i32
  }
  func.func @transform_5(%arg0: i32, %arg1: i32) -> (i32, i32, i32, i32) {
    %c0_i32 = arith.constant 0 : i32
    %c0_i32_0 = arith.constant 0 : i32
    %c0_i32_1 = arith.constant 0 : i32
    return %arg0, %arg1, %c0_i32, %c0_i32_0 : i32, i32, i32, i32
  }
  func.func @transform_6(%arg0: i32, %arg1: i32) -> (i32, i32, i32, i32) {
    %c0_i32 = arith.constant 0 : i32
    %c0_i32_0 = arith.constant 0 : i32
    %c0_i32_1 = arith.constant 0 : i32
    return %arg0, %arg1, %c0_i32, %c0_i32_0 : i32, i32, i32, i32
  }
  func.func @transform_7(%arg0: i32, %arg1: i32) -> (i32, i32, i32, i32) {
    %c0_i32 = arith.constant 0 : i32
    %c0_i32_0 = arith.constant 0 : i32
    %c0_i32_1 = arith.constant 0 : i32
    return %arg0, %arg1, %c0_i32, %c0_i32_0 : i32, i32, i32, i32
  }
  func.func @transform_8(%arg0: i32, %arg1: i32) -> (i32, i32, i32, i32) {
    %c0_i32 = arith.constant 0 : i32
    %c0_i32_0 = arith.constant 0 : i32
    %c0_i32_1 = arith.constant 0 : i32
    return %arg0, %arg1, %c0_i32, %c0_i32_0 : i32, i32, i32, i32
  }
  func.func @transform_9(%arg0: i32, %arg1: i32) -> (i32, i32, i32, i32) {
    %c0_i32 = arith.constant 0 : i32
    %c0_i32_0 = arith.constant 0 : i32
    %c0_i32_1 = arith.constant 0 : i32
    return %arg0, %arg1, %c0_i32, %c0_i32_0 : i32, i32, i32, i32
  }
  func.func @transform_10(%arg0: i32, %arg1: i32) -> (i32, i32, i32, i32) {
    %c0_i32 = arith.constant 0 : i32
    %c0_i32_0 = arith.constant 0 : i32
    %c0_i32_1 = arith.constant 0 : i32
    return %arg0, %arg1, %c0_i32, %c0_i32_0 : i32, i32, i32, i32
  }
  func.func @transform_11(%arg0: i32, %arg1: i32) -> (i32, i32, i32, i32) {
    %c0_i32 = arith.constant 0 : i32
    %c0_i32_0 = arith.constant 0 : i32
    %c0_i32_1 = arith.constant 0 : i32
    return %arg0, %arg1, %c0_i32, %c0_i32_0 : i32, i32, i32, i32
  }
  func.func @transform_12(%arg0: i32, %arg1: i32) -> (i32, i32, i32, i32) {
    %c0_i32 = arith.constant 0 : i32
    %c0_i32_0 = arith.constant 0 : i32
    %c0_i32_1 = arith.constant 0 : i32
    return %arg0, %arg1, %c0_i32, %c0_i32_0 : i32, i32, i32, i32
  }
  func.func @transform_13(%arg0: i32, %arg1: i32) -> (i32, i32, i32, i32) {
    %c0_i32 = arith.constant 0 : i32
    %c0_i32_0 = arith.constant 0 : i32
    %c0_i32_1 = arith.constant 0 : i32
    return %arg0, %arg1, %c0_i32, %c0_i32_0 : i32, i32, i32, i32
  }
  func.func @transform_14(%arg0: i32, %arg1: i32) -> (i32, i32, i32, i32) {
    %c0_i32 = arith.constant 0 : i32
    %c0_i32_0 = arith.constant 0 : i32
    %c0_i32_1 = arith.constant 0 : i32
    return %arg0, %arg1, %c0_i32, %c0_i32_0 : i32, i32, i32, i32
  }
  func.func @transform_15(%arg0: i32, %arg1: i32) -> (i32, i32, i32, i32) {
    %c0_i32 = arith.constant 0 : i32
    %c0_i32_0 = arith.constant 0 : i32
    %c0_i32_1 = arith.constant 0 : i32
    return %arg0, %arg1, %c0_i32, %c0_i32_0 : i32, i32, i32, i32
  }
  func.func @transform_16(%arg0: i32, %arg1: i32) -> (i32, i32, i32, i32) {
    %c0_i32 = arith.constant 0 : i32
    %c0_i32_0 = arith.constant 0 : i32
    %c0_i32_1 = arith.constant 0 : i32
    return %arg0, %arg1, %c0_i32, %c0_i32_0 : i32, i32, i32, i32
  }
  func.func @transform_17(%arg0: i32, %arg1: i32) -> (i32, i32, i32, i32) {
    %c0_i32 = arith.constant 0 : i32
    %c0_i32_0 = arith.constant 0 : i32
    %c0_i32_1 = arith.constant 0 : i32
    return %arg0, %arg1, %c0_i32, %c0_i32_0 : i32, i32, i32, i32
  }
  func.func @transform_18(%arg0: i32, %arg1: i32) -> (i32, i32, i32, i32) {
    %c0_i32 = arith.constant 0 : i32
    %c0_i32_0 = arith.constant 0 : i32
    %c0_i32_1 = arith.constant 0 : i32
    return %arg0, %arg1, %c0_i32, %c0_i32_0 : i32, i32, i32, i32
  }
  func.func @transform_19(%arg0: i32, %arg1: i32) -> (i32, i32, i32) {
    %c0_i32 = arith.constant 0 : i32
    %c0_i32_0 = arith.constant 0 : i32
    %c0_i32_1 = arith.constant 0 : i32
    return %arg0, %c0_i32, %c0_i32_0 : i32, i32, i32
  }
  func.func @transform_20(%arg0: i32, %arg1: i32) -> (i32, i32, i32) {
    %c0_i32 = arith.constant 0 : i32
    %c0_i32_0 = arith.constant 0 : i32
    %c0_i32_1 = arith.constant 0 : i32
    return %arg0, %c0_i32, %c0_i32_0 : i32, i32, i32
  }
  func.func @transform_21(%arg0: i32, %arg1: i32) -> (i32, i32, i32) {
    %c0_i32 = arith.constant 0 : i32
    %c0_i32_0 = arith.constant 0 : i32
    %c0_i32_1 = arith.constant 0 : i32
    return %arg0, %c0_i32, %c0_i32_0 : i32, i32, i32
  }
}

</mosaic_0001>

<llo_original>
// kernel: squeeze.9
$region0: #{squeeze.9}
  %s0 = inlined_call_operand.vmem [shape: f32[1,6,32], index: 0, kind: input, shape index: {}]
  %s1 = inlined_call_operand.vmem [shape: f32[2,3,32], index: 1, kind: output, shape index: {}]
  $region1: #{squeeze.9} parent=0
    #allocation0 [shape = 'u8[8192]{0}', space=vmem, size = 0x2000, scoped, tag = 'scoped mem for output reshape']
    %v2 = vld [vmem:[%s0] sm:$0x3f]
    %vm3 = vcmask 261120
    %4 = vst.msk [vmem:[#allocation0] sm:$0x7] %vm3, %v2
    %s5 = scalar_lea.vmem [#allocation0], 5
    %6 = vst.msk [vmem:[%s5] sm:$0x38] %vm3, %v2
    %s8 = sshllo.u32 0, 4
    %v10 = vld [vmem:[#allocation0] sm:%s8]
    %s11 = sshllo.u32 0, 4
    %12 = vst [vmem:[%s1] sm:%s11] %v10
    %s13 = scalar_lea.vmem [#allocation0], 8
    %v14 = vld [vmem:[%s13] sm:%s8]
    %s15 = sshllo.u32 0, 4
    %s16 = scalar_lea.vmem %s1, 4
    %17 = vst [vmem:[%s16] sm:%s15] %v14

// kernel: _forward_impl.1
$region0: #{_forward_impl.1}
  #allocation0 [shape = 'u32[]', space=smem, size = 0x4, offset = 0x4, fixed_abs, tag = 'smem constant byte address 0x4 - core index']
  #allocation1 [shape = 'u32[144,128]{1,0:T(1,128)}', space=vmem, size = 0x12000, scoped, tag = 'internal scratch']
  #allocation2 [shape = 'f32[128,128]{1,0:T(8,128)}', space=vmem, size = 0x10000, scoped, tag = 'scratch operand']
  #allocation3 [shape = 'bf16[2,128,128]{2,1,0:T(16,128)(2,1)}', space=vmem, size = 0x10000, scoped, tag = 'scratch operand']
  #allocation4 [shape = 'bf16[128,128]{1,0:T(16,128)(2,1)}', space=vmem, size = 0x8000, scoped, tag = 'scratch operand']
  #allocation5 [shape = 'bf16[2,128,128]{2,1,0:T(16,128)(2,1)}', space=vmem, size = 0x10000, scoped, tag = 'scratch operand']
  %s0 = inlined_call_operand.vmem [shape: f32[2,128,128], index: 0, kind: input, shape index: {}]
  %s1 = inlined_call_operand.vmem [shape: f32[2,128,128], index: 1, kind: input, shape index: {}]
  %s2 = inlined_call_operand.vmem [shape: f32[2,8,128], index: 2, kind: input, shape index: {}]
  %s3 = inlined_call_operand.vmem [shape: bf16[2,2,128,128], index: 3, kind: input, shape index: {}]
  %s4 = inlined_call_operand.vmem [shape: f32[2,2,1,128], index: 4, kind: input, shape index: {}]
  %s5 = inlined_call_operand.vmem [shape: bf16[2,2,128,128], index: 5, kind: input, shape index: {}]
  %s6 = inlined_call_operand.vmem [shape: f32[2,2,1,128], index: 6, kind: input, shape index: {}]
  %s7 = inlined_call_operand.vmem [shape: bf16[2,2,128,128], index: 7, kind: input, shape index: {}]
  %s8 = inlined_call_operand.vmem [shape: f32[2,2,1,128], index: 8, kind: input, shape index: {}]
  %s9 = inlined_call_operand.vmem [shape: bf16[2,2,128,128], index: 9, kind: input, shape index: {}]
  %s10 = inlined_call_operand.vmem [shape: f32[2,2,1,128], index: 10, kind: input, shape index: {}]
  %s11 = inlined_call_operand.vmem [shape: f32[2,2,1,128], index: 11, kind: input, shape index: {}]
  %s12 = inlined_call_operand.vmem [shape: f32[2,2,1,128], index: 12, kind: input, shape index: {}]
  %s13 = inlined_call_operand.vmem [shape: bf16[2,2,128,128], index: 13, kind: input, shape index: {}]
  %s14 = inlined_call_operand.vmem [shape: f32[2,2,1,128], index: 14, kind: input, shape index: {}]
  %s15 = inlined_call_operand.vmem [shape: bf16[2,2,128,128], index: 15, kind: input, shape index: {}]
  %s16 = inlined_call_operand.vmem [shape: f32[2,2,1,128], index: 16, kind: input, shape index: {}]
  %s17 = inlined_call_operand.vmem [shape: f32[2,2,1,128], index: 17, kind: input, shape index: {}]
  %s18 = inlined_call_operand.vmem [shape: f32[2,2,1,128], index: 18, kind: input, shape index: {}]
  %s19 = inlined_call_operand.vmem [shape: bf16[2,128,128], index: 19, kind: input, shape index: {}]
  %s20 = inlined_call_operand.vmem [shape: f32[2,1,128], index: 20, kind: input, shape index: {}]
  %s21 = inlined_call_operand.vmem [shape: f32[2,8,128], index: 21, kind: output, shape index: {}]
  %s22 = sld [smem:[#allocation0]]
  $region125: #{_forward_impl.1} parent=0
    _
  %s24 = ssub.s32 1, %s22
  %s25 = scalar_select 0, %s24, %s22
  loop: start=0, step=1, limit=6
  $region2: #{_forward_impl.1} parent=0 // loop_pre_header
    _
  $region3: #{_forward_impl.1} parent=0 // loop_header
    %s27 = sphi 0, %s31
    %p28 = scmp.ge.s32.totalorder %s27, 6
    %s34 = sphi 0, %s46
    %s35 = sphi 0, %s42
    %s36 = sphi 0, %s34
    %s37 = sphi 0, %s35
    %s38 = sphi 0, %s36
    %s39 = sphi 0, %s37
    %s49 = sphi 0, %s51
    %s52 = sphi 0, %s49
    %s53 = sphi 0, %s52
    %s69 = sphi 0, %s53
    %s75 = sphi 0, %s77
    %s78 = sphi 0, %s75
    %s79 = sphi 0, %s78
    %s95 = sphi 0, %s79
    %s101 = sphi 0, %s103
    %s104 = sphi 0, %s101
    %s105 = sphi 0, %s104
    %s121 = sphi 0, %s105
    %s129 = sphi 0, %s131
    %s132 = sphi 0, %s129
    %s133 = sphi 0, %s132
    %s149 = sphi 0, %s133
    %s157 = sphi 0, %s159
    %s160 = sphi 0, %s157
    %s161 = sphi 0, %s160
    %s177 = sphi 0, %s161
    %s185 = sphi 0, %s187
    %s188 = sphi 0, %s185
    %s189 = sphi 0, %s188
    %s205 = sphi 0, %s189
    %s213 = sphi 0, %s215
    %s216 = sphi 0, %s213
    %s217 = sphi 0, %s216
    %s233 = sphi 0, %s217
    %s241 = sphi 0, %s243
    %s244 = sphi 0, %s241
    %s245 = sphi 0, %s244
    %s261 = sphi 0, %s245
    %s269 = sphi 0, %s271
    %s272 = sphi 0, %s269
    %s273 = sphi 0, %s272
    %s289 = sphi 0, %s273
    %s297 = sphi 0, %s299
    %s300 = sphi 0, %s297
    %s301 = sphi 0, %s300
    %s317 = sphi 0, %s301
    %s325 = sphi 0, %s327
    %s328 = sphi 0, %s325
    %s329 = sphi 0, %s328
    %s345 = sphi 0, %s329
    %s353 = sphi 0, %s355
    %s356 = sphi 0, %s353
    %s357 = sphi 0, %s356
    %s373 = sphi 0, %s357
    %s381 = sphi 0, %s383
    %s384 = sphi 0, %s381
    %s385 = sphi 0, %s384
    %s401 = sphi 0, %s385
    %s409 = sphi 0, %s411
    %s412 = sphi 0, %s409
    %s413 = sphi 0, %s412
    %s429 = sphi 0, %s413
    %s437 = sphi 0, %s439
    %s440 = sphi 0, %s437
    %s441 = sphi 0, %s440
    %s457 = sphi 0, %s441
    %s465 = sphi 0, %s467
    %s468 = sphi 0, %s465
    %s469 = sphi 0, %s468
    %s485 = sphi 0, %s469
    %s493 = sphi 0, %s495
    %s496 = sphi 0, %s493
    %s497 = sphi 0, %s496
    %s513 = sphi 0, %s497
    %s521 = sphi 0, %s523
    %s524 = sphi 0, %s521
    %s525 = sphi 0, %s524
    %s541 = sphi 0, %s525
    %s549 = sphi 0, %s551
    %s552 = sphi 0, %s549
    %s553 = sphi 0, %s552
    %s569 = sphi 0, %s553
    %s575 = sphi 0, %s577
    %s578 = sphi 0, %s575
    %s579 = sphi 0, %s578
    %s595 = sphi 0, %s579
    %s601 = sphi 0, %s603
    %s604 = sphi 0, %s601
    %s605 = sphi 0, %s604
    %s621 = sphi 0, %s605
    %s627 = sphi 0, %s629
    %s630 = sphi 0, %s627
    %s631 = sphi 0, %s630
    %s647 = sphi 0, %s631
  $region4: #{_forward_impl.1} parent=0 // loop_header_branch
    %30 = sbr.rel (%p28) target = $region8
  $region5: #{_forward_impl.1} parent=0 // loop_body
    %s32 = ssub.s32 %s27, 1
    %s33 = ssub.s32 %s27, 2
    %s40 = sadd.s32 1, %s35
    %p41 = scmp.ge.s32.totalorder %s40, 2
    %s42 = scalar_select %p41, 0, %s40
    %s43 = sadd.s32 1, %s34
    %s44 = scalar_select %p41, %s43, %s34
    %p45 = scmp.ge.s32.totalorder %s44, 2
    %s46 = scalar_select %p45, 0, %s44
    %s47 = ssub.s32 %s34, %s46
    %p48 = scmp.eq.s32.totalorder %s47, 0
    %s50 = sadd.s32 %s49, 1
    %s51 = scalar_select %p48, %s49, %s50
    %p54 = pneg %p48
    %p55 = scmp.eq.s32.totalorder %s27, 3
    %p56 = por %p54, %p55
    %p57 = scmp.ne.s32.totalorder %s49, %s52
    %p58 = scmp.eq.s32.totalorder %s27, 0
    %p59 = por %p57, %p58
    %p60 = scmp.ne.s32.totalorder %s49, %s52
    %p61 = scmp.eq.s32.totalorder %s32, 3
    %p62 = por %p60, %p61
    %p63 = scmp.ne.s32.totalorder %s52, %s53
    %p64 = scmp.eq.s32.totalorder %s32, 0
    %p65 = por %p63, %p64
    %p66 = scmp.ne.s32.totalorder %s52, %s53
    %p67 = scmp.eq.s32.totalorder %s33, 3
    %p68 = por %p66, %p67
    %p70 = scmp.ne.s32.totalorder %s53, %s69
    %p71 = scmp.eq.s32.totalorder %s33, 0
    %p72 = por %p70, %p71
    %s73 = ssub.s32 %s34, %s46
    %p74 = scmp.eq.s32.totalorder %s73, 0
    %s76 = sadd.s32 %s75, 1
    %s77 = scalar_select %p74, %s75, %s76
    %p80 = pneg %p74
    %p81 = scmp.eq.s32.totalorder %s27, 3
    %p82 = por %p80, %p81
    %p83 = scmp.ne.s32.totalorder %s75, %s78
    %p84 = scmp.eq.s32.totalorder %s27, 0
    %p85 = por %p83, %p84
    %p86 = scmp.ne.s32.totalorder %s75, %s78
    %p87 = scmp.eq.s32.totalorder %s32, 3
    %p88 = por %p86, %p87
    %p89 = scmp.ne.s32.totalorder %s78, %s79
    %p90 = scmp.eq.s32.totalorder %s32, 0
    %p91 = por %p89, %p90
    %p92 = scmp.ne.s32.totalorder %s78, %s79
    %p93 = scmp.eq.s32.totalorder %s33, 3
    %p94 = por %p92, %p93
    %p96 = scmp.ne.s32.totalorder %s79, %s95
    %p97 = scmp.eq.s32.totalorder %s33, 0
    %p98 = por %p96, %p97
    %s99 = ssub.s32 %s34, %s46
    %p100 = scmp.eq.s32.totalorder %s99, 0
    %s102 = sadd.s32 %s101, 1
    %s103 = scalar_select %p100, %s101, %s102
    %p106 = pneg %p100
    %p107 = scmp.eq.s32.totalorder %s27, 3
    %p108 = por %p106, %p107
    %p109 = scmp.ne.s32.totalorder %s101, %s104
    %p110 = scmp.eq.s32.totalorder %s27, 0
    %p111 = por %p109, %p110
    %p112 = scmp.ne.s32.totalorder %s101, %s104
    %p113 = scmp.eq.s32.totalorder %s32, 3
    %p114 = por %p112, %p113
    %p115 = scmp.ne.s32.totalorder %s104, %s105
    %p116 = scmp.eq.s32.totalorder %s32, 0
    %p117 = por %p115, %p116
    %p118 = scmp.ne.s32.totalorder %s104, %s105
    %p119 = scmp.eq.s32.totalorder %s33, 3
    %p120 = por %p118, %p119
    %p122 = scmp.ne.s32.totalorder %s105, %s121
    %p123 = scmp.eq.s32.totalorder %s33, 0
    %p124 = por %p122, %p123
    %s125 = ssub.s32 %s34, %s46
    %s126 = ssub.s32 %s35, %s42
    %s127 = sor.u32 %s125, %s126
    %p128 = scmp.eq.s32.totalorder %s127, 0
    %s130 = sadd.s32 %s129, 1
    %s131 = scalar_select %p128, %s129, %s130
    %p134 = pneg %p128
    %p135 = scmp.eq.s32.totalorder %s27, 3
    %p136 = por %p134, %p135
    %p137 = scmp.ne.s32.totalorder %s129, %s132
    %p138 = scmp.eq.s32.totalorder %s27, 0
    %p139 = por %p137, %p138
    %p140 = scmp.ne.s32.totalorder %s129, %s132
    %p141 = scmp.eq.s32.totalorder %s32, 3
    %p142 = por %p140, %p141
    %p143 = scmp.ne.s32.totalorder %s132, %s133
    %p144 = scmp.eq.s32.totalorder %s32, 0
    %p145 = por %p143, %p144
    %p146 = scmp.ne.s32.totalorder %s132, %s133
    %p147 = scmp.eq.s32.totalorder %s33, 3
    %p148 = por %p146, %p147
    %p150 = scmp.ne.s32.totalorder %s133, %s149
    %p151 = scmp.eq.s32.totalorder %s33, 0
    %p152 = por %p150, %p151
    %s153 = ssub.s32 %s34, %s46
    %s154 = ssub.s32 %s35, %s42
    %s155 = sor.u32 %s153, %s154
    %p156 = scmp.eq.s32.totalorder %s155, 0
    %s158 = sadd.s32 %s157, 1
    %s159 = scalar_select %p156, %s157, %s158
    %p162 = pneg %p156
    %p163 = scmp.eq.s32.totalorder %s27, 3
    %p164 = por %p162, %p163
    %p165 = scmp.ne.s32.totalorder %s157, %s160
    %p166 = scmp.eq.s32.totalorder %s27, 0
    %p167 = por %p165, %p166
    %p168 = scmp.ne.s32.totalorder %s157, %s160
    %p169 = scmp.eq.s32.totalorder %s32, 3
    %p170 = por %p168, %p169
    %p171 = scmp.ne.s32.totalorder %s160, %s161
    %p172 = scmp.eq.s32.totalorder %s32, 0
    %p173 = por %p171, %p172
    %p174 = scmp.ne.s32.totalorder %s160, %s161
    %p175 = scmp.eq.s32.totalorder %s33, 3
    %p176 = por %p174, %p175
    %p178 = scmp.ne.s32.totalorder %s161, %s177
    %p179 = scmp.eq.s32.totalorder %s33, 0
    %p180 = por %p178, %p179
    %s181 = ssub.s32 %s34, %s46
    %s182 = ssub.s32 %s35, %s42
    %s183 = sor.u32 %s181, %s182
    %p184 = scmp.eq.s32.totalorder %s183, 0
    %s186 = sadd.s32 %s185, 1
    %s187 = scalar_select %p184, %s185, %s186
    %p190 = pneg %p184
    %p191 = scmp.eq.s32.totalorder %s27, 3
    %p192 = por %p190, %p191
    %p193 = scmp.ne.s32.totalorder %s185, %s188
    %p194 = scmp.eq.s32.totalorder %s27, 0
    %p195 = por %p193, %p194
    %p196 = scmp.ne.s32.totalorder %s185, %s188
    %p197 = scmp.eq.s32.totalorder %s32, 3
    %p198 = por %p196, %p197
    %p199 = scmp.ne.s32.totalorder %s188, %s189
    %p200 = scmp.eq.s32.totalorder %s32, 0
    %p201 = por %p199, %p200
    %p202 = scmp.ne.s32.totalorder %s188, %s189
    %p203 = scmp.eq.s32.totalorder %s33, 3
    %p204 = por %p202, %p203
    %p206 = scmp.ne.s32.totalorder %s189, %s205
    %p207 = scmp.eq.s32.totalorder %s33, 0
    %p208 = por %p206, %p207
    %s209 = ssub.s32 %s34, %s46
    %s210 = ssub.s32 %s35, %s42
    %s211 = sor.u32 %s209, %s210
    %p212 = scmp.eq.s32.totalorder %s211, 0
    %s214 = sadd.s32 %s213, 1
    %s215 = scalar_select %p212, %s213, %s214
    %p218 = pneg %p212
    %p219 = scmp.eq.s32.totalorder %s27, 3
    %p220 = por %p218, %p219
    %p221 = scmp.ne.s32.totalorder %s213, %s216
    %p222 = scmp.eq.s32.totalorder %s27, 0
    %p223 = por %p221, %p222
    %p224 = scmp.ne.s32.totalorder %s213, %s216
    %p225 = scmp.eq.s32.totalorder %s32, 3
    %p226 = por %p224, %p225
    %p227 = scmp.ne.s32.totalorder %s216, %s217
    %p228 = scmp.eq.s32.totalorder %s32, 0
    %p229 = por %p227, %p228
    %p230 = scmp.ne.s32.totalorder %s216, %s217
    %p231 = scmp.eq.s32.totalorder %s33, 3
    %p232 = por %p230, %p231
    %p234 = scmp.ne.s32.totalorder %s217, %s233
    %p235 = scmp.eq.s32.totalorder %s33, 0
    %p236 = por %p234, %p235
    %s237 = ssub.s32 %s34, %s46
    %s238 = ssub.s32 %s35, %s42
    %s239 = sor.u32 %s237, %s238
    %p240 = scmp.eq.s32.totalorder %s239, 0
    %s242 = sadd.s32 %s241, 1
    %s243 = scalar_select %p240, %s241, %s242
    %p246 = pneg %p240
    %p247 = scmp.eq.s32.totalorder %s27, 3
    %p248 = por %p246, %p247
    %p249 = scmp.ne.s32.totalorder %s241, %s244
    %p250 = scmp.eq.s32.totalorder %s27, 0
    %p251 = por %p249, %p250
    %p252 = scmp.ne.s32.totalorder %s241, %s244
    %p253 = scmp.eq.s32.totalorder %s32, 3
    %p254 = por %p252, %p253
    %p255 = scmp.ne.s32.totalorder %s244, %s245
    %p256 = scmp.eq.s32.totalorder %s32, 0
    %p257 = por %p255, %p256
    %p258 = scmp.ne.s32.totalorder %s244, %s245
    %p259 = scmp.eq.s32.totalorder %s33, 3
    %p260 = por %p258, %p259
    %p262 = scmp.ne.s32.totalorder %s245, %s261
    %p263 = scmp.eq.s32.totalorder %s33, 0
    %p264 = por %p262, %p263
    %s265 = ssub.s32 %s34, %s46
    %s266 = ssub.s32 %s35, %s42
    %s267 = sor.u32 %s265, %s266
    %p268 = scmp.eq.s32.totalorder %s267, 0
    %s270 = sadd.s32 %s269, 1
    %s271 = scalar_select %p268, %s269, %s270
    %p274 = pneg %p268
    %p275 = scmp.eq.s32.totalorder %s27, 3
    %p276 = por %p274, %p275
    %p277 = scmp.ne.s32.totalorder %s269, %s272
    %p278 = scmp.eq.s32.totalorder %s27, 0
    %p279 = por %p277, %p278
    %p280 = scmp.ne.s32.totalorder %s269, %s272
    %p281 = scmp.eq.s32.totalorder %s32, 3
    %p282 = por %p280, %p281
    %p283 = scmp.ne.s32.totalorder %s272, %s273
    %p284 = scmp.eq.s32.totalorder %s32, 0
    %p285 = por %p283, %p284
    %p286 = scmp.ne.s32.totalorder %s272, %s273
    %p287 = scmp.eq.s32.totalorder %s33, 3
    %p288 = por %p286, %p287
    %p290 = scmp.ne.s32.totalorder %s273, %s289
    %p291 = scmp.eq.s32.totalorder %s33, 0
    %p292 = por %p290, %p291
    %s293 = ssub.s32 %s34, %s46
    %s294 = ssub.s32 %s35, %s42
    %s295 = sor.u32 %s293, %s294
    %p296 = scmp.eq.s32.totalorder %s295, 0
    %s298 = sadd.s32 %s297, 1
    %s299 = scalar_select %p296, %s297, %s298
    %p302 = pneg %p296
    %p303 = scmp.eq.s32.totalorder %s27, 3
    %p304 = por %p302, %p303
    %p305 = scmp.ne.s32.totalorder %s297, %s300
    %p306 = scmp.eq.s32.totalorder %s27, 0
    %p307 = por %p305, %p306
    %p308 = scmp.ne.s32.totalorder %s297, %s300
    %p309 = scmp.eq.s32.totalorder %s32, 3
    %p310 = por %p308, %p309
    %p311 = scmp.ne.s32.totalorder %s300, %s301
    %p312 = scmp.eq.s32.totalorder %s32, 0
    %p313 = por %p311, %p312
    %p314 = scmp.ne.s32.totalorder %s300, %s301
    %p315 = scmp.eq.s32.totalorder %s33, 3
    %p316 = por %p314, %p315
    %p318 = scmp.ne.s32.totalorder %s301, %s317
    %p319 = scmp.eq.s32.totalorder %s33, 0
    %p320 = por %p318, %p319
    %s321 = ssub.s32 %s34, %s46
    %s322 = ssub.s32 %s35, %s42
    %s323 = sor.u32 %s321, %s322
    %p324 = scmp.eq.s32.totalorder %s323, 0
    %s326 = sadd.s32 %s325, 1
    %s327 = scalar_select %p324, %s325, %s326
    %p330 = pneg %p324
    %p331 = scmp.eq.s32.totalorder %s27, 3
    %p332 = por %p330, %p331
    %p333 = scmp.ne.s32.totalorder %s325, %s328
    %p334 = scmp.eq.s32.totalorder %s27, 0
    %p335 = por %p333, %p334
    %p336 = scmp.ne.s32.totalorder %s325, %s328
    %p337 = scmp.eq.s32.totalorder %s32, 3
    %p338 = por %p336, %p337
    %p339 = scmp.ne.s32.totalorder %s328, %s329
    %p340 = scmp.eq.s32.totalorder %s32, 0
    %p341 = por %p339, %p340
    %p342 = scmp.ne.s32.totalorder %s328, %s329
    %p343 = scmp.eq.s32.totalorder %s33, 3
    %p344 = por %p342, %p343
    %p346 = scmp.ne.s32.totalorder %s329, %s345
    %p347 = scmp.eq.s32.totalorder %s33, 0
    %p348 = por %p346, %p347
    %s349 = ssub.s32 %s34, %s46
    %s350 = ssub.s32 %s35, %s42
    %s351 = sor.u32 %s349, %s350
    %p352 = scmp.eq.s32.totalorder %s351, 0
    %s354 = sadd.s32 %s353, 1
    %s355 = scalar_select %p352, %s353, %s354
    %p358 = pneg %p352
    %p359 = scmp.eq.s32.totalorder %s27, 3
    %p360 = por %p358, %p359
    %p361 = scmp.ne.s32.totalorder %s353, %s356
    %p362 = scmp.eq.s32.totalorder %s27, 0
    %p363 = por %p361, %p362
    %p364 = scmp.ne.s32.totalorder %s353, %s356
    %p365 = scmp.eq.s32.totalorder %s32, 3
    %p366 = por %p364, %p365
    %p367 = scmp.ne.s32.totalorder %s356, %s357
    %p368 = scmp.eq.s32.totalorder %s32, 0
    %p369 = por %p367, %p368
    %p370 = scmp.ne.s32.totalorder %s356, %s357
    %p371 = scmp.eq.s32.totalorder %s33, 3
    %p372 = por %p370, %p371
    %p374 = scmp.ne.s32.totalorder %s357, %s373
    %p375 = scmp.eq.s32.totalorder %s33, 0
    %p376 = por %p374, %p375
    %s377 = ssub.s32 %s34, %s46
    %s378 = ssub.s32 %s35, %s42
    %s379 = sor.u32 %s377, %s378
    %p380 = scmp.eq.s32.totalorder %s379, 0
    %s382 = sadd.s32 %s381, 1
    %s383 = scalar_select %p380, %s381, %s382
    %p386 = pneg %p380
    %p387 = scmp.eq.s32.totalorder %s27, 3
    %p388 = por %p386, %p387
    %p389 = scmp.ne.s32.totalorder %s381, %s384
    %p390 = scmp.eq.s32.totalorder %s27, 0
    %p391 = por %p389, %p390
    %p392 = scmp.ne.s32.totalorder %s381, %s384
    %p393 = scmp.eq.s32.totalorder %s32, 3
    %p394 = por %p392, %p393
    %p395 = scmp.ne.s32.totalorder %s384, %s385
    %p396 = scmp.eq.s32.totalorder %s32, 0
    %p397 = por %p395, %p396
    %p398 = scmp.ne.s32.totalorder %s384, %s385
    %p399 = scmp.eq.s32.totalorder %s33, 3
    %p400 = por %p398, %p399
    %p402 = scmp.ne.s32.totalorder %s385, %s401
    %p403 = scmp.eq.s32.totalorder %s33, 0
    %p404 = por %p402, %p403
    %s405 = ssub.s32 %s34, %s46
    %s406 = ssub.s32 %s35, %s42
    %s407 = sor.u32 %s405, %s406
    %p408 = scmp.eq.s32.totalorder %s407, 0
    %s410 = sadd.s32 %s409, 1
    %s411 = scalar_select %p408, %s409, %s410
    %p414 = pneg %p408
    %p415 = scmp.eq.s32.totalorder %s27, 3
    %p416 = por %p414, %p415
    %p417 = scmp.ne.s32.totalorder %s409, %s412
    %p418 = scmp.eq.s32.totalorder %s27, 0
    %p419 = por %p417, %p418
    %p420 = scmp.ne.s32.totalorder %s409, %s412
    %p421 = scmp.eq.s32.totalorder %s32, 3
    %p422 = por %p420, %p421
    %p423 = scmp.ne.s32.totalorder %s412, %s413
    %p424 = scmp.eq.s32.totalorder %s32, 0
    %p425 = por %p423, %p424
    %p426 = scmp.ne.s32.totalorder %s412, %s413
    %p427 = scmp.eq.s32.totalorder %s33, 3
    %p428 = por %p426, %p427
    %p430 = scmp.ne.s32.totalorder %s413, %s429
    %p431 = scmp.eq.s32.totalorder %s33, 0
    %p432 = por %p430, %p431
    %s433 = ssub.s32 %s34, %s46
    %s434 = ssub.s32 %s35, %s42
    %s435 = sor.u32 %s433, %s434
    %p436 = scmp.eq.s32.totalorder %s435, 0
    %s438 = sadd.s32 %s437, 1
    %s439 = scalar_select %p436, %s437, %s438
    %p442 = pneg %p436
    %p443 = scmp.eq.s32.totalorder %s27, 3
    %p444 = por %p442, %p443
    %p445 = scmp.ne.s32.totalorder %s437, %s440
    %p446 = scmp.eq.s32.totalorder %s27, 0
    %p447 = por %p445, %p446
    %p448 = scmp.ne.s32.totalorder %s437, %s440
    %p449 = scmp.eq.s32.totalorder %s32, 3
    %p450 = por %p448, %p449
    %p451 = scmp.ne.s32.totalorder %s440, %s441
    %p452 = scmp.eq.s32.totalorder %s32, 0
    %p453 = por %p451, %p452
    %p454 = scmp.ne.s32.totalorder %s440, %s441
    %p455 = scmp.eq.s32.totalorder %s33, 3
    %p456 = por %p454, %p455
    %p458 = scmp.ne.s32.totalorder %s441, %s457
    %p459 = scmp.eq.s32.totalorder %s33, 0
    %p460 = por %p458, %p459
    %s461 = ssub.s32 %s34, %s46
    %s462 = ssub.s32 %s35, %s42
    %s463 = sor.u32 %s461, %s462
    %p464 = scmp.eq.s32.totalorder %s463, 0
    %s466 = sadd.s32 %s465, 1
    %s467 = scalar_select %p464, %s465, %s466
    %p470 = pneg %p464
    %p471 = scmp.eq.s32.totalorder %s27, 3
    %p472 = por %p470, %p471
    %p473 = scmp.ne.s32.totalorder %s465, %s468
    %p474 = scmp.eq.s32.totalorder %s27, 0
    %p475 = por %p473, %p474
    %p476 = scmp.ne.s32.totalorder %s465, %s468
    %p477 = scmp.eq.s32.totalorder %s32, 3
    %p478 = por %p476, %p477
    %p479 = scmp.ne.s32.totalorder %s468, %s469
    %p480 = scmp.eq.s32.totalorder %s32, 0
    %p481 = por %p479, %p480
    %p482 = scmp.ne.s32.totalorder %s468, %s469
    %p483 = scmp.eq.s32.totalorder %s33, 3
    %p484 = por %p482, %p483
    %p486 = scmp.ne.s32.totalorder %s469, %s485
    %p487 = scmp.eq.s32.totalorder %s33, 0
    %p488 = por %p486, %p487
    %s489 = ssub.s32 %s34, %s46
    %s490 = ssub.s32 %s35, %s42
    %s491 = sor.u32 %s489, %s490
    %p492 = scmp.eq.s32.totalorder %s491, 0
    %s494 = sadd.s32 %s493, 1
    %s495 = scalar_select %p492, %s493, %s494
    %p498 = pneg %p492
    %p499 = scmp.eq.s32.totalorder %s27, 3
    %p500 = por %p498, %p499
    %p501 = scmp.ne.s32.totalorder %s493, %s496
    %p502 = scmp.eq.s32.totalorder %s27, 0
    %p503 = por %p501, %p502
    %p504 = scmp.ne.s32.totalorder %s493, %s496
    %p505 = scmp.eq.s32.totalorder %s32, 3
    %p506 = por %p504, %p505
    %p507 = scmp.ne.s32.totalorder %s496, %s497
    %p508 = scmp.eq.s32.totalorder %s32, 0
    %p509 = por %p507, %p508
    %p510 = scmp.ne.s32.totalorder %s496, %s497
    %p511 = scmp.eq.s32.totalorder %s33, 3
    %p512 = por %p510, %p511
    %p514 = scmp.ne.s32.totalorder %s497, %s513
    %p515 = scmp.eq.s32.totalorder %s33, 0
    %p516 = por %p514, %p515
    %s517 = ssub.s32 %s34, %s46
    %s518 = ssub.s32 %s35, %s42
    %s519 = sor.u32 %s517, %s518
    %p520 = scmp.eq.s32.totalorder %s519, 0
    %s522 = sadd.s32 %s521, 1
    %s523 = scalar_select %p520, %s521, %s522
    %p526 = pneg %p520
    %p527 = scmp.eq.s32.totalorder %s27, 3
    %p528 = por %p526, %p527
    %p529 = scmp.ne.s32.totalorder %s521, %s524
    %p530 = scmp.eq.s32.totalorder %s27, 0
    %p531 = por %p529, %p530
    %p532 = scmp.ne.s32.totalorder %s521, %s524
    %p533 = scmp.eq.s32.totalorder %s32, 3
    %p534 = por %p532, %p533
    %p535 = scmp.ne.s32.totalorder %s524, %s525
    %p536 = scmp.eq.s32.totalorder %s32, 0
    %p537 = por %p535, %p536
    %p538 = scmp.ne.s32.totalorder %s524, %s525
    %p539 = scmp.eq.s32.totalorder %s33, 3
    %p540 = por %p538, %p539
    %p542 = scmp.ne.s32.totalorder %s525, %s541
    %p543 = scmp.eq.s32.totalorder %s33, 0
    %p544 = por %p542, %p543
    %s545 = ssub.s32 %s34, %s46
    %s546 = ssub.s32 %s35, %s42
    %s547 = sor.u32 %s545, %s546
    %p548 = scmp.eq.s32.totalorder %s547, 0
    %s550 = sadd.s32 %s549, 1
    %s551 = scalar_select %p548, %s549, %s550
    %p554 = pneg %p548
    %p555 = scmp.eq.s32.totalorder %s27, 3
    %p556 = por %p554, %p555
    %p557 = scmp.ne.s32.totalorder %s549, %s552
    %p558 = scmp.eq.s32.totalorder %s27, 0
    %p559 = por %p557, %p558
    %p560 = scmp.ne.s32.totalorder %s549, %s552
    %p561 = scmp.eq.s32.totalorder %s32, 3
    %p562 = por %p560, %p561
    %p563 = scmp.ne.s32.totalorder %s552, %s553
    %p564 = scmp.eq.s32.totalorder %s32, 0
    %p565 = por %p563, %p564
    %p566 = scmp.ne.s32.totalorder %s552, %s553
    %p567 = scmp.eq.s32.totalorder %s33, 3
    %p568 = por %p566, %p567
    %p570 = scmp.ne.s32.totalorder %s553, %s569
    %p571 = scmp.eq.s32.totalorder %s33, 0
    %p572 = por %p570, %p571
    %s573 = ssub.s32 %s34, %s46
    %p574 = scmp.eq.s32.totalorder %s573, 0
    %s576 = sadd.s32 %s575, 1
    %s577 = scalar_select %p574, %s575, %s576
    %p580 = pneg %p574
    %p581 = scmp.eq.s32.totalorder %s27, 3
    %p582 = por %p580, %p581
    %p583 = scmp.ne.s32.totalorder %s575, %s578
    %p584 = scmp.eq.s32.totalorder %s27, 0
    %p585 = por %p583, %p584
    %p586 = scmp.ne.s32.totalorder %s575, %s578
    %p587 = scmp.eq.s32.totalorder %s32, 3
    %p588 = por %p586, %p587
    %p589 = scmp.ne.s32.totalorder %s578, %s579
    %p590 = scmp.eq.s32.totalorder %s32, 0
    %p591 = por %p589, %p590
    %p592 = scmp.ne.s32.totalorder %s578, %s579
    %p593 = scmp.eq.s32.totalorder %s33, 3
    %p594 = por %p592, %p593
    %p596 = scmp.ne.s32.totalorder %s579, %s595
    %p597 = scmp.eq.s32.totalorder %s33, 0
    %p598 = por %p596, %p597
    %s599 = ssub.s32 %s34, %s46
    %p600 = scmp.eq.s32.totalorder %s599, 0
    %s602 = sadd.s32 %s601, 1
    %s603 = scalar_select %p600, %s601, %s602
    %p606 = pneg %p600
    %p607 = scmp.eq.s32.totalorder %s27, 3
    %p608 = por %p606, %p607
    %p609 = scmp.ne.s32.totalorder %s601, %s604
    %p610 = scmp.eq.s32.totalorder %s27, 0
    %p611 = por %p609, %p610
    %p612 = scmp.ne.s32.totalorder %s601, %s604
    %p613 = scmp.eq.s32.totalorder %s32, 3
    %p614 = por %p612, %p613
    %p615 = scmp.ne.s32.totalorder %s604, %s605
    %p616 = scmp.eq.s32.totalorder %s32, 0
    %p617 = por %p615, %p616
    %p618 = scmp.ne.s32.totalorder %s604, %s605
    %p619 = scmp.eq.s32.totalorder %s33, 3
    %p620 = por %p618, %p619
    %p622 = scmp.ne.s32.totalorder %s605, %s621
    %p623 = scmp.eq.s32.totalorder %s33, 0
    %p624 = por %p622, %p623
    %s625 = ssub.s32 %s34, %s46
    %p626 = scmp.eq.s32.totalorder %s625, 0
    %s628 = sadd.s32 %s627, 1
    %s629 = scalar_select %p626, %s627, %s628
    %p632 = pneg %p626
    %p633 = scmp.eq.s32.totalorder %s27, 3
    %p634 = por %p632, %p633
    %p635 = scmp.ne.s32.totalorder %s627, %s630
    %p636 = scmp.eq.s32.totalorder %s27, 0
    %p637 = por %p635, %p636
    %p638 = scmp.ne.s32.totalorder %s627, %s630
    %p639 = scmp.eq.s32.totalorder %s32, 3
    %p640 = por %p638, %p639
    %p641 = scmp.ne.s32.totalorder %s630, %s631
    %p642 = scmp.eq.s32.totalorder %s32, 0
    %p643 = por %p641, %p642
    %p644 = scmp.ne.s32.totalorder %s630, %s631
    %p645 = scmp.eq.s32.totalorder %s33, 3
    %p646 = por %p644, %p645
    %p648 = scmp.ne.s32.totalorder %s631, %s647
    %p649 = scmp.eq.s32.totalorder %s33, 0
    %p650 = por %p648, %p649
    %p651 = scmp.le.s32.totalorder 1, %s27
    %p652 = scmp.lt.s32.totalorder %s27, 5
    %p653 = pnand %p651, %p652
    %p654 = pneg %p653
    // Predicated region
    $region9: #{_forward_impl.1} parent=5 // pred_check
      _
    $region10: #{_forward_impl.1} parent=5 // pred_check_branch
      %656 = sbr.rel (%p653) target = $region12
    $region11: #{_forward_impl.1} parent=5 // pred_region
      %s657 = ssub.s32 %s27, 1
    $region12: #{_forward_impl.1} parent=5 // pred_fallthru
      _
    %p658 = scmp.lt.s32.totalorder %s27, 4
    // Predicated region
    $region13: #{_forward_impl.1} parent=5 // pred_check
      %p659 = pneg %p658
    $region14: #{_forward_impl.1} parent=5 // pred_check_branch
      %661 = sbr.rel (%p659) target = $region16
    $region15: #{_forward_impl.1} parent=5 // pred_region
      // Predicated region
      $region17: #{_forward_impl.1} parent=15 // pred_check
        %p662 = pneg %p59
      $region18: #{_forward_impl.1} parent=15 // pred_check_branch
        %664 = sbr.rel (%p662) target = $region20
      $region19: #{_forward_impl.1} parent=15 // pred_region
        %p665 = scmp.lt.s32.totalorder %s34, 1
        %s666 = scalar_select %p665, %s34, 1
        %s667 = smul.addr %s666, 16
        %s668 = smul.addr %s667, 8
        %s669 = scalar_lea.vmem %s0, %s668
      $region20: #{_forward_impl.1} parent=15 // pred_fallthru
        _
      // Predicated region
      $region21: #{_forward_impl.1} parent=15 // pred_check
        %p670 = pneg %p85
      $region22: #{_forward_impl.1} parent=15 // pred_check_branch
        %672 = sbr.rel (%p670) target = $region24
      $region23: #{_forward_impl.1} parent=15 // pred_region
        %p673 = scmp.lt.s32.totalorder %s34, 1
        %s674 = scalar_select %p673, %s34, 1
        %s675 = smul.addr %s674, 16
        %s676 = smul.addr %s675, 8
        %s677 = scalar_lea.vmem %s1, %s676
      $region24: #{_forward_impl.1} parent=15 // pred_fallthru
        _
      // Predicated region
      $region25: #{_forward_impl.1} parent=15 // pred_check
        %p678 = pneg %p111
      $region26: #{_forward_impl.1} parent=15 // pred_check_branch
        %680 = sbr.rel (%p678) target = $region28
      $region27: #{_forward_impl.1} parent=15 // pred_region
        %p681 = scmp.lt.s32.totalorder %s34, 1
        %s682 = scalar_select %p681, %s34, 1
        %s683 = smul.addr %s682, 8
        %s684 = scalar_lea.vmem %s2, %s683
      $region28: #{_forward_impl.1} parent=15 // pred_fallthru
        _
      // Predicated region
      $region29: #{_forward_impl.1} parent=15 // pred_check
        %p685 = pneg %p139
      $region30: #{_forward_impl.1} parent=15 // pred_check_branch
        %687 = sbr.rel (%p685) target = $region32
      $region31: #{_forward_impl.1} parent=15 // pred_region
        %p688 = scmp.lt.s32.totalorder %s34, 1
        %s689 = scalar_select %p688, %s34, 1
        %p690 = scmp.lt.s32.totalorder %s35, 1
        %s691 = scalar_select %p690, %s35, 1
        %s692 = smul.addr %s691, 16
        %s693 = smul.addr %s689, 32
        %s694 = sadd.s32 %s692, %s693
        %s695 = smul.addr %s694, 4
        %s696 = scalar_lea.vmem %s3, %s695
      $region32: #{_forward_impl.1} parent=15 // pred_fallthru
        _
      // Predicated region
      $region33: #{_forward_impl.1} parent=15 // pred_check
        %p697 = pneg %p167
      $region34: #{_forward_impl.1} parent=15 // pred_check_branch
        %699 = sbr.rel (%p697) target = $region36
      $region35: #{_forward_impl.1} parent=15 // pred_region
        %p700 = scmp.lt.s32.totalorder %s34, 1
        %s701 = scalar_select %p700, %s34, 1
        %p702 = scmp.lt.s32.totalorder %s35, 1
        %s703 = scalar_select %p702, %s35, 1
        %s704 = smul.addr %s701, 2
        %s705 = sadd.s32 %s703, %s704
        %s706 = scalar_lea.vmem %s4, %s705
      $region36: #{_forward_impl.1} parent=15 // pred_fallthru
        _
      // Predicated region
      $region37: #{_forward_impl.1} parent=15 // pred_check
        %p707 = pneg %p195
      $region38: #{_forward_impl.1} parent=15 // pred_check_branch
        %709 = sbr.rel (%p707) target = $region40
      $region39: #{_forward_impl.1} parent=15 // pred_region
        %p710 = scmp.lt.s32.totalorder %s34, 1
        %s711 = scalar_select %p710, %s34, 1
        %p712 = scmp.lt.s32.totalorder %s35, 1
        %s713 = scalar_select %p712, %s35, 1
        %s714 = smul.addr %s713, 16
        %s715 = smul.addr %s711, 32
        %s716 = sadd.s32 %s714, %s715
        %s717 = smul.addr %s716, 4
        %s718 = scalar_lea.vmem %s5, %s717
      $region40: #{_forward_impl.1} parent=15 // pred_fallthru
        _
      // Predicated region
      $region41: #{_forward_impl.1} parent=15 // pred_check
        %p719 = pneg %p223
      $region42: #{_forward_impl.1} parent=15 // pred_check_branch
        %721 = sbr.rel (%p719) target = $region44
      $region43: #{_forward_impl.1} parent=15 // pred_region
        %p722 = scmp.lt.s32.totalorder %s34, 1
        %s723 = scalar_select %p722, %s34, 1
        %p724 = scmp.lt.s32.totalorder %s35, 1
        %s725 = scalar_select %p724, %s35, 1
        %s726 = smul.addr %s723, 2
        %s727 = sadd.s32 %s725, %s726
        %s728 = scalar_lea.vmem %s6, %s727
      $region44: #{_forward_impl.1} parent=15 // pred_fallthru
        _
      // Predicated region
      $region45: #{_forward_impl.1} parent=15 // pred_check
        %p729 = pneg %p251
      $region46: #{_forward_impl.1} parent=15 // pred_check_branch
        %731 = sbr.rel (%p729) target = $region48
      $region47: #{_forward_impl.1} parent=15 // pred_region
        %p732 = scmp.lt.s32.totalorder %s34, 1
        %s733 = scalar_select %p732, %s34, 1
        %p734 = scmp.lt.s32.totalorder %s35, 1
        %s735 = scalar_select %p734, %s35, 1
        %s736 = smul.addr %s735, 16
        %s737 = smul.addr %s733, 32
        %s738 = sadd.s32 %s736, %s737
        %s739 = smul.addr %s738, 4
        %s740 = scalar_lea.vmem %s7, %s739
      $region48: #{_forward_impl.1} parent=15 // pred_fallthru
        _
      // Predicated region
      $region49: #{_forward_impl.1} parent=15 // pred_check
        %p741 = pneg %p279
      $region50: #{_forward_impl.1} parent=15 // pred_check_branch
        %743 = sbr.rel (%p741) target = $region52
      $region51: #{_forward_impl.1} parent=15 // pred_region
        %p744 = scmp.lt.s32.totalorder %s34, 1
        %s745 = scalar_select %p744, %s34, 1
        %p746 = scmp.lt.s32.totalorder %s35, 1
        %s747 = scalar_select %p746, %s35, 1
        %s748 = smul.addr %s745, 2
        %s749 = sadd.s32 %s747, %s748
        %s750 = scalar_lea.vmem %s8, %s749
      $region52: #{_forward_impl.1} parent=15 // pred_fallthru
        _
      // Predicated region
      $region53: #{_forward_impl.1} parent=15 // pred_check
        %p751 = pneg %p307
      $region54: #{_forward_impl.1} parent=15 // pred_check_branch
        %753 = sbr.rel (%p751) target = $region56
      $region55: #{_forward_impl.1} parent=15 // pred_region
        %p754 = scmp.lt.s32.totalorder %s34, 1
        %s755 = scalar_select %p754, %s34, 1
        %p756 = scmp.lt.s32.totalorder %s35, 1
        %s757 = scalar_select %p756, %s35, 1
        %s758 = smul.addr %s757, 16
        %s759 = smul.addr %s755, 32
        %s760 = sadd.s32 %s758, %s759
        %s761 = smul.addr %s760, 4
        %s762 = scalar_lea.vmem %s9, %s761
      $region56: #{_forward_impl.1} parent=15 // pred_fallthru
        _
      // Predicated region
      $region57: #{_forward_impl.1} parent=15 // pred_check
        %p763 = pneg %p335
      $region58: #{_forward_impl.1} parent=15 // pred_check_branch
        %765 = sbr.rel (%p763) target = $region60
      $region59: #{_forward_impl.1} parent=15 // pred_region
        %p766 = scmp.lt.s32.totalorder %s34, 1
        %s767 = scalar_select %p766, %s34, 1
        %p768 = scmp.lt.s32.totalorder %s35, 1
        %s769 = scalar_select %p768, %s35, 1
        %s770 = smul.addr %s767, 2
        %s771 = sadd.s32 %s769, %s770
        %s772 = scalar_lea.vmem %s10, %s771
      $region60: #{_forward_impl.1} parent=15 // pred_fallthru
        _
      // Predicated region
      $region61: #{_forward_impl.1} parent=15 // pred_check
        %p773 = pneg %p363
      $region62: #{_forward_impl.1} parent=15 // pred_check_branch
        %775 = sbr.rel (%p773) target = $region64
      $region63: #{_forward_impl.1} parent=15 // pred_region
        %p776 = scmp.lt.s32.totalorder %s34, 1
        %s777 = scalar_select %p776, %s34, 1
        %p778 = scmp.lt.s32.totalorder %s35, 1
        %s779 = scalar_select %p778, %s35, 1
        %s780 = smul.addr %s777, 2
        %s781 = sadd.s32 %s779, %s780
        %s782 = scalar_lea.vmem %s11, %s781
      $region64: #{_forward_impl.1} parent=15 // pred_fallthru
        _
      // Predicated region
      $region65: #{_forward_impl.1} parent=15 // pred_check
        %p783 = pneg %p391
      $region66: #{_forward_impl.1} parent=15 // pred_check_branch
        %785 = sbr.rel (%p783) target = $region68
      $region67: #{_forward_impl.1} parent=15 // pred_region
        %p786 = scmp.lt.s32.totalorder %s34, 1
        %s787 = scalar_select %p786, %s34, 1
        %p788 = scmp.lt.s32.totalorder %s35, 1
        %s789 = scalar_select %p788, %s35, 1
        %s790 = smul.addr %s787, 2
        %s791 = sadd.s32 %s789, %s790
        %s792 = scalar_lea.vmem %s12, %s791
      $region68: #{_forward_impl.1} parent=15 // pred_fallthru
        _
      // Predicated region
      $region69: #{_forward_impl.1} parent=15 // pred_check
        %p793 = pneg %p419
      $region70: #{_forward_impl.1} parent=15 // pred_check_branch
        %795 = sbr.rel (%p793) target = $region72
      $region71: #{_forward_impl.1} parent=15 // pred_region
        %p796 = scmp.lt.s32.totalorder %s34, 1
        %s797 = scalar_select %p796, %s34, 1
        %p798 = scmp.lt.s32.totalorder %s35, 1
        %s799 = scalar_select %p798, %s35, 1
        %s800 = smul.addr %s799, 16
        %s801 = smul.addr %s797, 32
        %s802 = sadd.s32 %s800, %s801
        %s803 = smul.addr %s802, 4
        %s804 = scalar_lea.vmem %s13, %s803
      $region72: #{_forward_impl.1} parent=15 // pred_fallthru
        _
      // Predicated region
      $region73: #{_forward_impl.1} parent=15 // pred_check
        %p805 = pneg %p447
      $region74: #{_forward_impl.1} parent=15 // pred_check_branch
        %807 = sbr.rel (%p805) target = $region76
      $region75: #{_forward_impl.1} parent=15 // pred_region
        %p808 = scmp.lt.s32.totalorder %s34, 1
        %s809 = scalar_select %p808, %s34, 1
        %p810 = scmp.lt.s32.totalorder %s35, 1
        %s811 = scalar_select %p810, %s35, 1
        %s812 = smul.addr %s809, 2
        %s813 = sadd.s32 %s811, %s812
        %s814 = scalar_lea.vmem %s14, %s813
      $region76: #{_forward_impl.1} parent=15 // pred_fallthru
        _
      // Predicated region
      $region77: #{_forward_impl.1} parent=15 // pred_check
        %p815 = pneg %p475
      $region78: #{_forward_impl.1} parent=15 // pred_check_branch
        %817 = sbr.rel (%p815) target = $region80
      $region79: #{_forward_impl.1} parent=15 // pred_region
        %p818 = scmp.lt.s32.totalorder %s34, 1
        %s819 = scalar_select %p818, %s34, 1
        %p820 = scmp.lt.s32.totalorder %s35, 1
        %s821 = scalar_select %p820, %s35, 1
        %s822 = smul.addr %s821, 16
        %s823 = smul.addr %s819, 32
        %s824 = sadd.s32 %s822, %s823
        %s825 = smul.addr %s824, 4
        %s826 = scalar_lea.vmem %s15, %s825
      $region80: #{_forward_impl.1} parent=15 // pred_fallthru
        _
      // Predicated region
      $region81: #{_forward_impl.1} parent=15 // pred_check
        %p827 = pneg %p503
      $region82: #{_forward_impl.1} parent=15 // pred_check_branch
        %829 = sbr.rel (%p827) target = $region84
      $region83: #{_forward_impl.1} parent=15 // pred_region
        %p830 = scmp.lt.s32.totalorder %s34, 1
        %s831 = scalar_select %p830, %s34, 1
        %p832 = scmp.lt.s32.totalorder %s35, 1
        %s833 = scalar_select %p832, %s35, 1
        %s834 = smul.addr %s831, 2
        %s835 = sadd.s32 %s833, %s834
        %s836 = scalar_lea.vmem %s16, %s835
      $region84: #{_forward_impl.1} parent=15 // pred_fallthru
        _
      // Predicated region
      $region85: #{_forward_impl.1} parent=15 // pred_check
        %p837 = pneg %p531
      $region86: #{_forward_impl.1} parent=15 // pred_check_branch
        %839 = sbr.rel (%p837) target = $region88
      $region87: #{_forward_impl.1} parent=15 // pred_region
        %p840 = scmp.lt.s32.totalorder %s34, 1
        %s841 = scalar_select %p840, %s34, 1
        %p842 = scmp.lt.s32.totalorder %s35, 1
        %s843 = scalar_select %p842, %s35, 1
        %s844 = smul.addr %s841, 2
        %s845 = sadd.s32 %s843, %s844
        %s846 = scalar_lea.vmem %s17, %s845
      $region88: #{_forward_impl.1} parent=15 // pred_fallthru
        _
      // Predicated region
      $region89: #{_forward_impl.1} parent=15 // pred_check
        %p847 = pneg %p559
      $region90: #{_forward_impl.1} parent=15 // pred_check_branch
        %849 = sbr.rel (%p847) target = $region92
      $region91: #{_forward_impl.1} parent=15 // pred_region
        %p850 = scmp.lt.s32.totalorder %s34, 1
        %s851 = scalar_select %p850, %s34, 1
        %p852 = scmp.lt.s32.totalorder %s35, 1
        %s853 = scalar_select %p852, %s35, 1
        %s854 = smul.addr %s851, 2
        %s855 = sadd.s32 %s853, %s854
        %s856 = scalar_lea.vmem %s18, %s855
      $region92: #{_forward_impl.1} parent=15 // pred_fallthru
        _
      // Predicated region
      $region93: #{_forward_impl.1} parent=15 // pred_check
        %p857 = pneg %p585
      $region94: #{_forward_impl.1} parent=15 // pred_check_branch
        %859 = sbr.rel (%p857) target = $region96
      $region95: #{_forward_impl.1} parent=15 // pred_region
        %p860 = scmp.lt.s32.totalorder %s34, 1
        %s861 = scalar_select %p860, %s34, 1
        %s862 = smul.addr %s861, 16
        %s863 = smul.addr %s862, 4
        %s864 = scalar_lea.vmem %s19, %s863
      $region96: #{_forward_impl.1} parent=15 // pred_fallthru
        _
      // Predicated region
      $region97: #{_forward_impl.1} parent=15 // pred_check
        %p865 = pneg %p611
      $region98: #{_forward_impl.1} parent=15 // pred_check_branch
        %867 = sbr.rel (%p865) target = $region100
      $region99: #{_forward_impl.1} parent=15 // pred_region
        %p868 = scmp.lt.s32.totalorder %s34, 1
        %s869 = scalar_select %p868, %s34, 1
        %s870 = scalar_lea.vmem %s20, %s869
      $region100: #{_forward_impl.1} parent=15 // pred_fallthru
        _
    $region16: #{_forward_impl.1} parent=5 // pred_fallthru
      _
    %p871 = scmp.le.s32.totalorder 1, %s27
    %p872 = scmp.lt.s32.totalorder %s27, 5
    %p873 = pnand %p871, %p872
    %p874 = pneg %p873
    // Predicated region
    $region101: #{_forward_impl.1} parent=5 // pred_check
      _
    $region102: #{_forward_impl.1} parent=5 // pred_check_branch
      %876 = sbr.rel (%p873) target = $region104
    $region103: #{_forward_impl.1} parent=5 // pred_region
      %s877 = ssub.s32 %s27, 1
      %p878 = scmp.lt.s32.totalorder %s36, 1
      %s879 = scalar_select %p878, %s36, 1
      %s880 = smul.addr %s879, 16
      %s881 = smul.addr %s880, 8
      %s882 = scalar_lea.vmem %s0, %s881
      %p883 = pneg %p65
      %p884 = pneg %p62
      %p885 = scmp.lt.s32.totalorder %s36, 1
      %s886 = scalar_select %p885, %s36, 1
      %s887 = smul.addr %s886, 16
      %s888 = smul.addr %s887, 8
      %s889 = scalar_lea.vmem %s1, %s888
      %p890 = pneg %p91
      %p891 = pneg %p88
      %p892 = scmp.lt.s32.totalorder %s36, 1
      %s893 = scalar_select %p892, %s36, 1
      %s894 = smul.addr %s893, 8
      %s895 = scalar_lea.vmem %s2, %s894
      %p896 = pneg %p117
      %p897 = pneg %p114
      %p898 = scmp.lt.s32.totalorder %s36, 1
      %s899 = scalar_select %p898, %s36, 1
      %p900 = scmp.lt.s32.totalorder %s37, 1
      %s901 = scalar_select %p900, %s37, 1
      %s902 = smul.addr %s901, 16
      %s903 = smul.addr %s899, 32
      %s904 = sadd.s32 %s902, %s903
      %s905 = smul.addr %s904, 4
      %s906 = scalar_lea.vmem %s3, %s905
      %p907 = pneg %p145
      %p908 = pneg %p142
      %p909 = scmp.lt.s32.totalorder %s36, 1
      %s910 = scalar_select %p909, %s36, 1
      %p911 = scmp.lt.s32.totalorder %s37, 1
      %s912 = scalar_select %p911, %s37, 1
      %s913 = smul.addr %s910, 2
      %s914 = sadd.s32 %s912, %s913
      %s915 = scalar_lea.vmem %s4, %s914
      %p916 = pneg %p173
      %p917 = pneg %p170
      %p918 = scmp.lt.s32.totalorder %s36, 1
      %s919 = scalar_select %p918, %s36, 1
      %p920 = scmp.lt.s32.totalorder %s37, 1
      %s921 = scalar_select %p920, %s37, 1
      %s922 = smul.addr %s921, 16
      %s923 = smul.addr %s919, 32
      %s924 = sadd.s32 %s922, %s923
      %s925 = smul.addr %s924, 4
      %s926 = scalar_lea.vmem %s5, %s925
      %p927 = pneg %p201
      %p928 = pneg %p198
      %p929 = scmp.lt.s32.totalorder %s36, 1
      %s930 = scalar_select %p929, %s36, 1
      %p931 = scmp.lt.s32.totalorder %s37, 1
      %s932 = scalar_select %p931, %s37, 1
      %s933 = smul.addr %s930, 2
      %s934 = sadd.s32 %s932, %s933
      %s935 = scalar_lea.vmem %s6, %s934
      %p936 = pneg %p229
      %p937 = pneg %p226
      %p938 = scmp.lt.s32.totalorder %s36, 1
      %s939 = scalar_select %p938, %s36, 1
      %p940 = scmp.lt.s32.totalorder %s37, 1
      %s941 = scalar_select %p940, %s37, 1
      %s942 = smul.addr %s941, 16
      %s943 = smul.addr %s939, 32
      %s944 = sadd.s32 %s942, %s943
      %s945 = smul.addr %s944, 4
      %s946 = scalar_lea.vmem %s7, %s945
      %p947 = pneg %p257
      %p948 = pneg %p254
      %p949 = scmp.lt.s32.totalorder %s36, 1
      %s950 = scalar_select %p949, %s36, 1
      %p951 = scmp.lt.s32.totalorder %s37, 1
      %s952 = scalar_select %p951, %s37, 1
      %s953 = smul.addr %s950, 2
      %s954 = sadd.s32 %s952, %s953
      %s955 = scalar_lea.vmem %s8, %s954
      %p956 = pneg %p285
      %p957 = pneg %p282
      %p958 = scmp.lt.s32.totalorder %s36, 1
      %s959 = scalar_select %p958, %s36, 1
      %p960 = scmp.lt.s32.totalorder %s37, 1
      %s961 = scalar_select %p960, %s37, 1
      %s962 = smul.addr %s961, 16
      %s963 = smul.addr %s959, 32
      %s964 = sadd.s32 %s962, %s963
      %s965 = smul.addr %s964, 4
      %s966 = scalar_lea.vmem %s9, %s965
      %p967 = pneg %p313
      %p968 = pneg %p310
      %p969 = scmp.lt.s32.totalorder %s36, 1
      %s970 = scalar_select %p969, %s36, 1
      %p971 = scmp.lt.s32.totalorder %s37, 1
      %s972 = scalar_select %p971, %s37, 1
      %s973 = smul.addr %s970, 2
      %s974 = sadd.s32 %s972, %s973
      %s975 = scalar_lea.vmem %s10, %s974
      %p976 = pneg %p341
      %p977 = pneg %p338
      %p978 = scmp.lt.s32.totalorder %s36, 1
      %s979 = scalar_select %p978, %s36, 1
      %p980 = scmp.lt.s32.totalorder %s37, 1
      %s981 = scalar_select %p980, %s37, 1
      %s982 = smul.addr %s979, 2
      %s983 = sadd.s32 %s981, %s982
      %s984 = scalar_lea.vmem %s11, %s983
      %p985 = pneg %p369
      %p986 = pneg %p366
      %p987 = scmp.lt.s32.totalorder %s36, 1
      %s988 = scalar_select %p987, %s36, 1
      %p989 = scmp.lt.s32.totalorder %s37, 1
      %s990 = scalar_select %p989, %s37, 1
      %s991 = smul.addr %s988, 2
      %s992 = sadd.s32 %s990, %s991
      %s993 = scalar_lea.vmem %s12, %s992
      %p994 = pneg %p397
      %p995 = pneg %p394
      %p996 = scmp.lt.s32.totalorder %s36, 1
      %s997 = scalar_select %p996, %s36, 1
      %p998 = scmp.lt.s32.totalorder %s37, 1
      %s999 = scalar_select %p998, %s37, 1
      %s1000 = smul.addr %s999, 16
      %s1001 = smul.addr %s997, 32
      %s1002 = sadd.s32 %s1000, %s1001
      %s1003 = smul.addr %s1002, 4
      %s1004 = scalar_lea.vmem %s13, %s1003
      %p1005 = pneg %p425
      %p1006 = pneg %p422
      %p1007 = scmp.lt.s32.totalorder %s36, 1
      %s1008 = scalar_select %p1007, %s36, 1
      %p1009 = scmp.lt.s32.totalorder %s37, 1
      %s1010 = scalar_select %p1009, %s37, 1
      %s1011 = smul.addr %s1008, 2
      %s1012 = sadd.s32 %s1010, %s1011
      %s1013 = scalar_lea.vmem %s14, %s1012
      %p1014 = pneg %p453
      %p1015 = pneg %p450
      %p1016 = scmp.lt.s32.totalorder %s36, 1
      %s1017 = scalar_select %p1016, %s36, 1
      %p1018 = scmp.lt.s32.totalorder %s37, 1
      %s1019 = scalar_select %p1018, %s37, 1
      %s1020 = smul.addr %s1019, 16
      %s1021 = smul.addr %s1017, 32
      %s1022 = sadd.s32 %s1020, %s1021
      %s1023 = smul.addr %s1022, 4
      %s1024 = scalar_lea.vmem %s15, %s1023
      %p1025 = pneg %p481
      %p1026 = pneg %p478
      %p1027 = scmp.lt.s32.totalorder %s36, 1
      %s1028 = scalar_select %p1027, %s36, 1
      %p1029 = scmp.lt.s32.totalorder %s37, 1
      %s1030 = scalar_select %p1029, %s37, 1
      %s1031 = smul.addr %s1028, 2
      %s1032 = sadd.s32 %s1030, %s1031
      %s1033 = scalar_lea.vmem %s16, %s1032
      %p1034 = pneg %p509
      %p1035 = pneg %p506
      %p1036 = scmp.lt.s32.totalorder %s36, 1
      %s1037 = scalar_select %p1036, %s36, 1
      %p1038 = scmp.lt.s32.totalorder %s37, 1
      %s1039 = scalar_select %p1038, %s37, 1
      %s1040 = smul.addr %s1037, 2
      %s1041 = sadd.s32 %s1039, %s1040
      %s1042 = scalar_lea.vmem %s17, %s1041
      %p1043 = pneg %p537
      %p1044 = pneg %p534
      %p1045 = scmp.lt.s32.totalorder %s36, 1
      %s1046 = scalar_select %p1045, %s36, 1
      %p1047 = scmp.lt.s32.totalorder %s37, 1
      %s1048 = scalar_select %p1047, %s37, 1
      %s1049 = smul.addr %s1046, 2
      %s1050 = sadd.s32 %s1048, %s1049
      %s1051 = scalar_lea.vmem %s18, %s1050
      %p1052 = pneg %p565
      %p1053 = pneg %p562
      %p1054 = scmp.lt.s32.totalorder %s36, 1
      %s1055 = scalar_select %p1054, %s36, 1
      %s1056 = smul.addr %s1055, 16
      %s1057 = smul.addr %s1056, 4
      %s1058 = scalar_lea.vmem %s19, %s1057
      %p1059 = pneg %p591
      %p1060 = pneg %p588
      %p1061 = scmp.lt.s32.totalorder %s36, 1
      %s1062 = scalar_select %p1061, %s36, 1
      %s1063 = scalar_lea.vmem %s20, %s1062
      %p1064 = pneg %p617
      %p1065 = pneg %p614
      %p1066 = pneg %p643
      %p1067 = pneg %p640
      %p1068 = scmp.lt.s32.totalorder %s36, 1
      %s1069 = scalar_select %p1068, %s36, 1
      %s1070 = smul.addr %s1069, 8
      %s1071 = scalar_lea.vmem %s21, %s1070
      %p1072 = scmp.lt.s32.totalorder %s36, 1
      %s1073 = scalar_select %p1072, %s36, 1
      %s1074 = smul.addr %s1073, 16
      %s1075 = smul.addr %s1074, 8
      %s1076 = scalar_lea.vmem %s0, %s1075
      %p1077 = scmp.lt.s32.totalorder %s36, 1
      %s1078 = scalar_select %p1077, %s36, 1
      %s1079 = smul.addr %s1078, 16
      %s1080 = smul.addr %s1079, 8
      %s1081 = scalar_lea.vmem %s1, %s1080
      %p1082 = scmp.lt.s32.totalorder %s36, 1
      %s1083 = scalar_select %p1082, %s36, 1
      %s1084 = smul.addr %s1083, 8
      %s1085 = scalar_lea.vmem %s2, %s1084
      %p1086 = scmp.lt.s32.totalorder %s36, 1
      %s1087 = scalar_select %p1086, %s36, 1
      %p1088 = scmp.lt.s32.totalorder %s37, 1
      %s1089 = scalar_select %p1088, %s37, 1
      %s1090 = smul.addr %s1089, 16
      %s1091 = smul.addr %s1087, 32
      %s1092 = sadd.s32 %s1090, %s1091
      %s1093 = smul.addr %s1092, 4
      %s1094 = scalar_lea.vmem %s3, %s1093
      %p1095 = scmp.lt.s32.totalorder %s36, 1
      %s1096 = scalar_select %p1095, %s36, 1
      %p1097 = scmp.lt.s32.totalorder %s37, 1
      %s1098 = scalar_select %p1097, %s37, 1
      %s1099 = smul.addr %s1096, 2
      %s1100 = sadd.s32 %s1098, %s1099
      %s1101 = scalar_lea.vmem %s4, %s1100
      %p1102 = scmp.lt.s32.totalorder %s36, 1
      %s1103 = scalar_select %p1102, %s36, 1
      %p1104 = scmp.lt.s32.totalorder %s37, 1
      %s1105 = scalar_select %p1104, %s37, 1
      %s1106 = smul.addr %s1105, 16
      %s1107 = smul.addr %s1103, 32
      %s1108 = sadd.s32 %s1106, %s1107
      %s1109 = smul.addr %s1108, 4
      %s1110 = scalar_lea.vmem %s5, %s1109
      %p1111 = scmp.lt.s32.totalorder %s36, 1
      %s1112 = scalar_select %p1111, %s36, 1
      %p1113 = scmp.lt.s32.totalorder %s37, 1
      %s1114 = scalar_select %p1113, %s37, 1
      %s1115 = smul.addr %s1112, 2
      %s1116 = sadd.s32 %s1114, %s1115
      %s1117 = scalar_lea.vmem %s6, %s1116
      %p1118 = scmp.lt.s32.totalorder %s36, 1
      %s1119 = scalar_select %p1118, %s36, 1
      %p1120 = scmp.lt.s32.totalorder %s37, 1
      %s1121 = scalar_select %p1120, %s37, 1
      %s1122 = smul.addr %s1121, 16
      %s1123 = smul.addr %s1119, 32
      %s1124 = sadd.s32 %s1122, %s1123
      %s1125 = smul.addr %s1124, 4
      %s1126 = scalar_lea.vmem %s7, %s1125
      %p1127 = scmp.lt.s32.totalorder %s36, 1
      %s1128 = scalar_select %p1127, %s36, 1
      %p1129 = scmp.lt.s32.totalorder %s37, 1
      %s1130 = scalar_select %p1129, %s37, 1
      %s1131 = smul.addr %s1128, 2
      %s1132 = sadd.s32 %s1130, %s1131
      %s1133 = scalar_lea.vmem %s8, %s1132
      %p1134 = scmp.lt.s32.totalorder %s36, 1
      %s1135 = scalar_select %p1134, %s36, 1
      %p1136 = scmp.lt.s32.totalorder %s37, 1
      %s1137 = scalar_select %p1136, %s37, 1
      %s1138 = smul.addr %s1137, 16
      %s1139 = smul.addr %s1135, 32
      %s1140 = sadd.s32 %s1138, %s1139
      %s1141 = smul.addr %s1140, 4
      %s1142 = scalar_lea.vmem %s9, %s1141
      %p1143 = scmp.lt.s32.totalorder %s36, 1
      %s1144 = scalar_select %p1143, %s36, 1
      %p1145 = scmp.lt.s32.totalorder %s37, 1
      %s1146 = scalar_select %p1145, %s37, 1
      %s1147 = smul.addr %s1144, 2
      %s1148 = sadd.s32 %s1146, %s1147
      %s1149 = scalar_lea.vmem %s10, %s1148
      %p1150 = scmp.lt.s32.totalorder %s36, 1
      %s1151 = scalar_select %p1150, %s36, 1
      %p1152 = scmp.lt.s32.totalorder %s37, 1
      %s1153 = scalar_select %p1152, %s37, 1
      %s1154 = smul.addr %s1151, 2
      %s1155 = sadd.s32 %s1153, %s1154
      %s1156 = scalar_lea.vmem %s11, %s1155
      %p1157 = scmp.lt.s32.totalorder %s36, 1
      %s1158 = scalar_select %p1157, %s36, 1
      %p1159 = scmp.lt.s32.totalorder %s37, 1
      %s1160 = scalar_select %p1159, %s37, 1
      %s1161 = smul.addr %s1158, 2
      %s1162 = sadd.s32 %s1160, %s1161
      %s1163 = scalar_lea.vmem %s12, %s1162
      %p1164 = scmp.lt.s32.totalorder %s36, 1
      %s1165 = scalar_select %p1164, %s36, 1
      %p1166 = scmp.lt.s32.totalorder %s37, 1
      %s1167 = scalar_select %p1166, %s37, 1
      %s1168 = smul.addr %s1167, 16
      %s1169 = smul.addr %s1165, 32
      %s1170 = sadd.s32 %s1168, %s1169
      %s1171 = smul.addr %s1170, 4
      %s1172 = scalar_lea.vmem %s13, %s1171
      %p1173 = scmp.lt.s32.totalorder %s36, 1
      %s1174 = scalar_select %p1173, %s36, 1
      %p1175 = scmp.lt.s32.totalorder %s37, 1
      %s1176 = scalar_select %p1175, %s37, 1
      %s1177 = smul.addr %s1174, 2
      %s1178 = sadd.s32 %s1176, %s1177
      %s1179 = scalar_lea.vmem %s14, %s1178
      %p1180 = scmp.lt.s32.totalorder %s36, 1
      %s1181 = scalar_select %p1180, %s36, 1
      %p1182 = scmp.lt.s32.totalorder %s37, 1
      %s1183 = scalar_select %p1182, %s37, 1
      %s1184 = smul.addr %s1183, 16
      %s1185 = smul.addr %s1181, 32
      %s1186 = sadd.s32 %s1184, %s1185
      %s1187 = smul.addr %s1186, 4
      %s1188 = scalar_lea.vmem %s15, %s1187
      %p1189 = scmp.lt.s32.totalorder %s36, 1
      %s1190 = scalar_select %p1189, %s36, 1
      %p1191 = scmp.lt.s32.totalorder %s37, 1
      %s1192 = scalar_select %p1191, %s37, 1
      %s1193 = smul.addr %s1190, 2
      %s1194 = sadd.s32 %s1192, %s1193
      %s1195 = scalar_lea.vmem %s16, %s1194
      %p1196 = scmp.lt.s32.totalorder %s36, 1
      %s1197 = scalar_select %p1196, %s36, 1
      %p1198 = scmp.lt.s32.totalorder %s37, 1
      %s1199 = scalar_select %p1198, %s37, 1
      %s1200 = smul.addr %s1197, 2
      %s1201 = sadd.s32 %s1199, %s1200
      %s1202 = scalar_lea.vmem %s17, %s1201
      %p1203 = scmp.lt.s32.totalorder %s36, 1
      %s1204 = scalar_select %p1203, %s36, 1
      %p1205 = scmp.lt.s32.totalorder %s37, 1
      %s1206 = scalar_select %p1205, %s37, 1
      %s1207 = smul.addr %s1204, 2
      %s1208 = sadd.s32 %s1206, %s1207
      %s1209 = scalar_lea.vmem %s18, %s1208
      %p1210 = scmp.lt.s32.totalorder %s36, 1
      %s1211 = scalar_select %p1210, %s36, 1
      %s1212 = smul.addr %s1211, 16
      %s1213 = smul.addr %s1212, 4
      %s1214 = scalar_lea.vmem %s19, %s1213
      %p1215 = scmp.lt.s32.totalorder %s36, 1
      %s1216 = scalar_select %p1215, %s36, 1
      %s1217 = scalar_lea.vmem %s20, %s1216
      %p1218 = scmp.lt.s32.totalorder %s36, 1
      %s1219 = scalar_select %p1218, %s36, 1
      %s1220 = smul.addr %s1219, 8
      %s1221 = scalar_lea.vmem %s21, %s1220
      %p1223 = scmp.eq.s32.totalorder %s37, 0
      // Predicated region
      $region105: #{_forward_impl.1} parent=103 // pred_check
        %p1224 = pneg %p1223
      $region106: #{_forward_impl.1} parent=103 // pred_check_branch
        %1226 = sbr.rel (%p1224) target = $region108
      $region107: #{_forward_impl.1} parent=103 // pred_region
        %v1227 = vld [vmem:[%s1076] sm:$0xff]
        %v1228 = vld [vmem:[%s1076 + $0x8] sm:$0xff]
        %v1229 = vld [vmem:[%s1076 + $0x10] sm:$0xff]
        %v1230 = vld [vmem:[%s1076 + $0x18] sm:$0xff]
        %v1231 = vld [vmem:[%s1076 + $0x20] sm:$0xff]
        %v1232 = vld [vmem:[%s1076 + $0x28] sm:$0xff]
        %v1233 = vld [vmem:[%s1076 + $0x30] sm:$0xff]
        %v1234 = vld [vmem:[%s1076 + $0x38] sm:$0xff]
        %v1235 = vld [vmem:[%s1076 + $0x40] sm:$0xff]
        %v1236 = vld [vmem:[%s1076 + $0x48] sm:$0xff]
        %v1237 = vld [vmem:[%s1076 + $0x50] sm:$0xff]
        %v1238 = vld [vmem:[%s1076 + $0x58] sm:$0xff]
        %v1239 = vld [vmem:[%s1076 + $0x60] sm:$0xff]
        %v1240 = vld [vmem:[%s1076 + $0x68] sm:$0xff]
        %v1241 = vld [vmem:[%s1076 + $0x70] sm:$0xff]
        %v1242 = vld [vmem:[%s1076 + $0x78] sm:$0xff]
        %1243 = vst [vmem:[#allocation2] sm:$0xff] %v1227
        %1244 = vst [vmem:[#allocation2 + $0x8] sm:$0xff] %v1228
        %1245 = vst [vmem:[#allocation2 + $0x10] sm:$0xff] %v1229
        %1246 = vst [vmem:[#allocation2 + $0x18] sm:$0xff] %v1230
        %1247 = vst [vmem:[#allocation2 + $0x20] sm:$0xff] %v1231
        %1248 = vst [vmem:[#allocation2 + $0x28] sm:$0xff] %v1232
        %1249 = vst [vmem:[#allocation2 + $0x30] sm:$0xff] %v1233
        %1250 = vst [vmem:[#allocation2 + $0x38] sm:$0xff] %v1234
        %1251 = vst [vmem:[#allocation2 + $0x40] sm:$0xff] %v1235
        %1252 = vst [vmem:[#allocation2 + $0x48] sm:$0xff] %v1236
        %1253 = vst [vmem:[#allocation2 + $0x50] sm:$0xff] %v1237
        %1254 = vst [vmem:[#allocation2 + $0x58] sm:$0xff] %v1238
        %1255 = vst [vmem:[#allocation2 + $0x60] sm:$0xff] %v1239
        %1256 = vst [vmem:[#allocation2 + $0x68] sm:$0xff] %v1240
        %1257 = vst [vmem:[#allocation2 + $0x70] sm:$0xff] %v1241
        %1258 = vst [vmem:[#allocation2 + $0x78] sm:$0xff] %v1242
      $region108: #{_forward_impl.1} parent=103 // pred_fallthru
        _
      %v1259 = vlaneseq
      %v1260 = vand.u32 %v1259, 127
      %vm1261 = vcmp.lt.s32.totalorder %v1260, 32
      %v1262 = vsel %vm1261, 1, 0
      %v1263 = vcvt.s32.f32 %v1262
      %v1264 = vld [vmem:[#allocation2] sm:$0xff]
      %v1265 = vld [vmem:[#allocation2 + $0x8] sm:$0xff]
      %v1266 = vld [vmem:[#allocation2 + $0x10] sm:$0xff]
      %v1267 = vld [vmem:[#allocation2 + $0x18] sm:$0xff]
      %v1268 = vld [vmem:[#allocation2 + $0x20] sm:$0xff]
      %v1269 = vld [vmem:[#allocation2 + $0x28] sm:$0xff]
      %v1270 = vld [vmem:[#allocation2 + $0x30] sm:$0xff]
      %v1271 = vld [vmem:[#allocation2 + $0x38] sm:$0xff]
      %v1272 = vld [vmem:[#allocation2 + $0x40] sm:$0xff]
      %v1273 = vld [vmem:[#allocation2 + $0x48] sm:$0xff]
      %v1274 = vld [vmem:[#allocation2 + $0x50] sm:$0xff]
      %v1275 = vld [vmem:[#allocation2 + $0x58] sm:$0xff]
      %v1276 = vld [vmem:[#allocation2 + $0x60] sm:$0xff]
      %v1277 = vld [vmem:[#allocation2 + $0x68] sm:$0xff]
      %v1278 = vld [vmem:[#allocation2 + $0x70] sm:$0xff]
      %v1279 = vld [vmem:[#allocation2 + $0x78] sm:$0xff]
      %v1280 = vpack.c.bf16 %v1265, %v1264
      %v1281 = vpack.c.bf16 %v1267, %v1266
      %v1282 = vpack.c.bf16 %v1269, %v1268
      %v1283 = vpack.c.bf16 %v1271, %v1270
      %v1284 = vpack.c.bf16 %v1273, %v1272
      %v1285 = vpack.c.bf16 %v1275, %v1274
      %v1286 = vpack.c.bf16 %v1277, %v1276
      %v1287 = vpack.c.bf16 %v1279, %v1278
      %v1288 = vld [vmem:[%s1094] sm:$0xf]
      %v1289 = vld [vmem:[%s1094 + $0x4] sm:$0xf]
      %v1290 = vld [vmem:[%s1094 + $0x8] sm:$0xf]
      %v1291 = vld [vmem:[%s1094 + $0xc] sm:$0xf]
      %v1292 = vld [vmem:[%s1094 + $0x10] sm:$0xf]
      %v1293 = vld [vmem:[%s1094 + $0x14] sm:$0xf]
      %v1294 = vld [vmem:[%s1094 + $0x18] sm:$0xf]
      %v1295 = vld [vmem:[%s1094 + $0x1c] sm:$0xf]
      %v1296 = vld [vmem:[%s1094 + $0x20] sm:$0xf]
      %v1297 = vld [vmem:[%s1094 + $0x24] sm:$0xf]
      %v1298 = vld [vmem:[%s1094 + $0x28] sm:$0xf]
      %v1299 = vld [vmem:[%s1094 + $0x2c] sm:$0xf]
      %v1300 = vld [vmem:[%s1094 + $0x30] sm:$0xf]
      %v1301 = vld [vmem:[%s1094 + $0x34] sm:$0xf]
      %v1302 = vld [vmem:[%s1094 + $0x38] sm:$0xf]
      %v1303 = vld [vmem:[%s1094 + $0x3c] sm:$0xf]
      %v1304 = vld [vmem:[%s1101] sm:$0x1]
      %v1306 = vlaneseq
      %v1307 = vshrl.u32 %v1306, 7
      %v1308 = vsub.s32 0, %v1307
      %v1309 = vrot.slane %v1304, %v1308
      %v1327 = vunpack.c.l.b16 %v1288
      %v1328 = vunpack.c.l.b16 %v1289
      %v1329 = vunpack.c.l.b16 %v1290
      %v1330 = vunpack.c.l.b16 %v1291
      %v1331 = vunpack.c.l.b16 %v1292
      %v1332 = vunpack.c.l.b16 %v1293
      %v1333 = vunpack.c.l.b16 %v1294
      %v1334 = vunpack.c.l.b16 %v1295
      %v1335 = vunpack.c.l.b16 %v1296
      %v1336 = vunpack.c.l.b16 %v1297
      %v1337 = vunpack.c.l.b16 %v1298
      %v1338 = vunpack.c.l.b16 %v1299
      %v1339 = vunpack.c.l.b16 %v1300
      %v1340 = vunpack.c.l.b16 %v1301
      %v1341 = vunpack.c.l.b16 %v1302
      %v1342 = vunpack.c.l.b16 %v1303
      %v1343 = vpack.c.b16 %v1328, %v1327
      %v1344 = vpack.c.b16 %v1330, %v1329
      %v1345 = vpack.c.b16 %v1332, %v1331
      %v1346 = vpack.c.b16 %v1334, %v1333
      %v1347 = vpack.c.b16 %v1336, %v1335
      %v1348 = vpack.c.b16 %v1338, %v1337
      %v1349 = vpack.c.b16 %v1340, %v1339
      %v1350 = vpack.c.b16 %v1342, %v1341
      %1359 = vmatprep.subr.bf16.mxu0 0
      %1360 = vmatpush1.bf16.msra.mxu0 %v1343
      %1361 = vmatprep.subr.bf16.mxu0 0
      %1362 = vmatpush1.bf16.msra.mxu0 %v1344
      %1363 = vmatprep.subr.bf16.mxu0 0
      %1364 = vmatpush1.bf16.msra.mxu0 %v1345
      %1365 = vmatprep.subr.bf16.mxu0 0
      %1366 = vmatpush1.bf16.msra.mxu0 %v1346
      %1367 = vmatprep.subr.bf16.mxu0 0
      %1368 = vmatpush1.bf16.msra.mxu0 %v1347
      %1369 = vmatprep.subr.bf16.mxu0 0
      %1370 = vmatpush1.bf16.msra.mxu0 %v1348
      %1371 = vmatprep.subr.bf16.mxu0 0
      %1372 = vmatpush1.bf16.msra.mxu0 %v1349
      %1373 = vmatprep.subr.bf16.mxu0 0
      %1374 = vmatpush1.bf16.msra.mxu0 %v1350
      %1375 = vmatprep.subr.bf16.mxu0 0
      %1376 = vmatpush1.bf16.msra.mxu0 0
      %1377 = vmatprep.subr.bf16.mxu0 0
      %1378 = vmatpush1.bf16.msra.mxu0 0
      %1379 = vmatprep.subr.bf16.mxu0 0
      %1380 = vmatpush1.bf16.msra.mxu0 0
      %1381 = vmatprep.subr.bf16.mxu0 0
      %1382 = vmatpush1.bf16.msra.mxu0 0
      %1383 = vmatprep.subr.bf16.mxu0 0
      %1384 = vmatpush1.bf16.msra.mxu0 0
      %1385 = vmatprep.subr.bf16.mxu0 0
      %1386 = vmatpush1.bf16.msra.mxu0 0
      %1387 = vmatprep.subr.bf16.mxu0 0
      %1388 = vmatpush1.bf16.msra.mxu0 0
      %1389 = vmatprep.subr.bf16.mxu0 0
      %1390 = vmatpush1.bf16.msra.mxu0 0
      %1391 = vmatprep.mubr.bf16.mxu0 0
      %1392 = vmatmul.mubr.bf16.gmra.mrb[0].mxu0 %v1280
      %v1393 = vpop.f32.mrb[0].mxu0
      %v1394 = vadd.f32 %v1309, %v1393
      %v1395 = vpop.f32.mrb[0].mxu0
      %v1396 = vpop.f32.mrb[0].mxu0
      %v1397 = vadd.f32 %v1309, %v1396
      %v1398 = vpop.f32.mrb[0].mxu0
      %1399 = vmatprep.mubr.bf16.mxu0 0
      %1400 = vmatmul.mubr.bf16.gmra.mrb[0].mxu0 %v1281
      %v1401 = vpop.f32.mrb[0].mxu0
      %v1402 = vadd.f32 %v1309, %v1401
      %v1403 = vpop.f32.mrb[0].mxu0
      %v1404 = vpop.f32.mrb[0].mxu0
      %v1405 = vadd.f32 %v1309, %v1404
      %v1406 = vpop.f32.mrb[0].mxu0
      %1407 = vmatprep.mubr.bf16.mxu0 0
      %1408 = vmatmul.mubr.bf16.gmra.mrb[0].mxu0 %v1282
      %v1409 = vpop.f32.mrb[0].mxu0
      %v1410 = vadd.f32 %v1309, %v1409
      %v1411 = vpop.f32.mrb[0].mxu0
      %v1412 = vpop.f32.mrb[0].mxu0
      %v1413 = vadd.f32 %v1309, %v1412
      %v1414 = vpop.f32.mrb[0].mxu0
      %1415 = vmatprep.mubr.bf16.mxu0 0
      %1416 = vmatmul.mubr.bf16.gmra.mrb[0].mxu0 %v1283
      %v1417 = vpop.f32.mrb[0].mxu0
      %v1418 = vadd.f32 %v1309, %v1417
      %v1419 = vpop.f32.mrb[0].mxu0
      %v1420 = vpop.f32.mrb[0].mxu0
      %v1421 = vadd.f32 %v1309, %v1420
      %v1422 = vpop.f32.mrb[0].mxu0
      %1423 = vmatprep.mubr.bf16.mxu0 0
      %1424 = vmatmul.mubr.bf16.gmra.mrb[0].mxu0 %v1284
      %v1425 = vpop.f32.mrb[0].mxu0
      %v1426 = vadd.f32 %v1309, %v1425
      %v1427 = vpop.f32.mrb[0].mxu0
      %v1428 = vpop.f32.mrb[0].mxu0
      %v1429 = vadd.f32 %v1309, %v1428
      %v1430 = vpop.f32.mrb[0].mxu0
      %1431 = vmatprep.mubr.bf16.mxu0 0
      %1432 = vmatmul.mubr.bf16.gmra.mrb[0].mxu0 %v1285
      %v1433 = vpop.f32.mrb[0].mxu0
      %v1434 = vadd.f32 %v1309, %v1433
      %v1435 = vpop.f32.mrb[0].mxu0
      %v1436 = vpop.f32.mrb[0].mxu0
      %v1437 = vadd.f32 %v1309, %v1436
      %v1438 = vpop.f32.mrb[0].mxu0
      %1439 = vmatprep.mubr.bf16.mxu0 0
      %1440 = vmatmul.mubr.bf16.gmra.mrb[0].mxu0 %v1286
      %v1441 = vpop.f32.mrb[0].mxu0
      %v1442 = vadd.f32 %v1309, %v1441
      %v1443 = vpop.f32.mrb[0].mxu0
      %v1444 = vpop.f32.mrb[0].mxu0
      %v1445 = vadd.f32 %v1309, %v1444
      %v1446 = vpop.f32.mrb[0].mxu0
      %1447 = vmatprep.mubr.bf16.mxu0 0
      %1448 = vmatmul.mubr.bf16.gmra.mrb[0].mxu0 %v1287
      %v1449 = vpop.f32.mrb[0].mxu0
      %v1450 = vadd.f32 %v1309, %v1449
      %v1451 = vpop.f32.mrb[0].mxu0
      %v1452 = vpop.f32.mrb[0].mxu0
      %v1453 = vadd.f32 %v1309, %v1452
      %v1454 = vpop.f32.mrb[0].mxu0
      %1455 = vdwg.mxu0
      %v1456 = vld [vmem:[%s1110] sm:$0xf]
      %v1457 = vld [vmem:[%s1110 + $0x4] sm:$0xf]
      %v1458 = vld [vmem:[%s1110 + $0x8] sm:$0xf]
      %v1459 = vld [vmem:[%s1110 + $0xc] sm:$0xf]
      %v1460 = vld [vmem:[%s1110 + $0x10] sm:$0xf]
      %v1461 = vld [vmem:[%s1110 + $0x14] sm:$0xf]
      %v1462 = vld [vmem:[%s1110 + $0x18] sm:$0xf]
      %v1463 = vld [vmem:[%s1110 + $0x1c] sm:$0xf]
      %v1464 = vld [vmem:[%s1110 + $0x20] sm:$0xf]
      %v1465 = vld [vmem:[%s1110 + $0x24] sm:$0xf]
      %v1466 = vld [vmem:[%s1110 + $0x28] sm:$0xf]
      %v1467 = vld [vmem:[%s1110 + $0x2c] sm:$0xf]
      %v1468 = vld [vmem:[%s1110 + $0x30] sm:$0xf]
      %v1469 = vld [vmem:[%s1110 + $0x34] sm:$0xf]
      %v1470 = vld [vmem:[%s1110 + $0x38] sm:$0xf]
      %v1471 = vld [vmem:[%s1110 + $0x3c] sm:$0xf]
      %v1472 = vld [vmem:[%s1117] sm:$0x1]
      %v1474 = vlaneseq
      %v1475 = vshrl.u32 %v1474, 7
      %v1476 = vsub.s32 0, %v1475
      %v1477 = vrot.slane %v1472, %v1476
      %v1495 = vunpack.c.l.b16 %v1456
      %v1496 = vunpack.c.l.b16 %v1457
      %v1497 = vunpack.c.l.b16 %v1458
      %v1498 = vunpack.c.l.b16 %v1459
      %v1499 = vunpack.c.l.b16 %v1460
      %v1500 = vunpack.c.l.b16 %v1461
      %v1501 = vunpack.c.l.b16 %v1462
      %v1502 = vunpack.c.l.b16 %v1463
      %v1503 = vunpack.c.l.b16 %v1464
      %v1504 = vunpack.c.l.b16 %v1465
      %v1505 = vunpack.c.l.b16 %v1466
      %v1506 = vunpack.c.l.b16 %v1467
      %v1507 = vunpack.c.l.b16 %v1468
      %v1508 = vunpack.c.l.b16 %v1469
      %v1509 = vunpack.c.l.b16 %v1470
      %v1510 = vunpack.c.l.b16 %v1471
      %v1511 = vpack.c.b16 %v1496, %v1495
      %v1512 = vpack.c.b16 %v1498, %v1497
      %v1513 = vpack.c.b16 %v1500, %v1499
      %v1514 = vpack.c.b16 %v1502, %v1501
      %v1515 = vpack.c.b16 %v1504, %v1503
      %v1516 = vpack.c.b16 %v1506, %v1505
      %v1517 = vpack.c.b16 %v1508, %v1507
      %v1518 = vpack.c.b16 %v1510, %v1509
      %1527 = vmatprep.subr.bf16.mxu0 0
      %1528 = vmatpush1.bf16.msra.mxu0 %v1511
      %1529 = vmatprep.subr.bf16.mxu0 0
      %1530 = vmatpush1.bf16.msra.mxu0 %v1512
      %1531 = vmatprep.subr.bf16.mxu0 0
      %1532 = vmatpush1.bf16.msra.mxu0 %v1513
      %1533 = vmatprep.subr.bf16.mxu0 0
      %1534 = vmatpush1.bf16.msra.mxu0 %v1514
      %1535 = vmatprep.subr.bf16.mxu0 0
      %1536 = vmatpush1.bf16.msra.mxu0 %v1515
      %1537 = vmatprep.subr.bf16.mxu0 0
      %1538 = vmatpush1.bf16.msra.mxu0 %v1516
      %1539 = vmatprep.subr.bf16.mxu0 0
      %1540 = vmatpush1.bf16.msra.mxu0 %v1517
      %1541 = vmatprep.subr.bf16.mxu0 0
      %1542 = vmatpush1.bf16.msra.mxu0 %v1518
      %1543 = vmatprep.subr.bf16.mxu0 0
      %1544 = vmatpush1.bf16.msra.mxu0 0
      %1545 = vmatprep.subr.bf16.mxu0 0
      %1546 = vmatpush1.bf16.msra.mxu0 0
      %1547 = vmatprep.subr.bf16.mxu0 0
      %1548 = vmatpush1.bf16.msra.mxu0 0
      %1549 = vmatprep.subr.bf16.mxu0 0
      %1550 = vmatpush1.bf16.msra.mxu0 0
      %1551 = vmatprep.subr.bf16.mxu0 0
      %1552 = vmatpush1.bf16.msra.mxu0 0
      %1553 = vmatprep.subr.bf16.mxu0 0
      %1554 = vmatpush1.bf16.msra.mxu0 0
      %1555 = vmatprep.subr.bf16.mxu0 0
      %1556 = vmatpush1.bf16.msra.mxu0 0
      %1557 = vmatprep.subr.bf16.mxu0 0
      %1558 = vmatpush1.bf16.msra.mxu0 0
      %1559 = vmatprep.mubr.bf16.mxu0 0
      %1560 = vmatmul.mubr.bf16.gmra.mrb[0].mxu0 %v1280
      %v1561 = vpop.f32.mrb[0].mxu0
      %v1562 = vadd.f32 %v1477, %v1561
      %v1563 = vpop.f32.mrb[0].mxu0
      %v1564 = vpop.f32.mrb[0].mxu0
      %v1565 = vadd.f32 %v1477, %v1564
      %v1566 = vpop.f32.mrb[0].mxu0
      %1567 = vmatprep.mubr.bf16.mxu0 0
      %1568 = vmatmul.mubr.bf16.gmra.mrb[0].mxu0 %v1281
      %v1569 = vpop.f32.mrb[0].mxu0
      %v1570 = vadd.f32 %v1477, %v1569
      %v1571 = vpop.f32.mrb[0].mxu0
      %v1572 = vpop.f32.mrb[0].mxu0
      %v1573 = vadd.f32 %v1477, %v1572
      %v1574 = vpop.f32.mrb[0].mxu0
      %1575 = vmatprep.mubr.bf16.mxu0 0
      %1576 = vmatmul.mubr.bf16.gmra.mrb[0].mxu0 %v1282
      %v1577 = vpop.f32.mrb[0].mxu0
      %v1578 = vadd.f32 %v1477, %v1577
      %v1579 = vpop.f32.mrb[0].mxu0
      %v1580 = vpop.f32.mrb[0].mxu0
      %v1581 = vadd.f32 %v1477, %v1580
      %v1582 = vpop.f32.mrb[0].mxu0
      %1583 = vmatprep.mubr.bf16.mxu0 0
      %1584 = vmatmul.mubr.bf16.gmra.mrb[0].mxu0 %v1283
      %v1585 = vpop.f32.mrb[0].mxu0
      %v1586 = vadd.f32 %v1477, %v1585
      %v1587 = vpop.f32.mrb[0].mxu0
      %v1588 = vpop.f32.mrb[0].mxu0
      %v1589 = vadd.f32 %v1477, %v1588
      %v1590 = vpop.f32.mrb[0].mxu0
      %1591 = vmatprep.mubr.bf16.mxu0 0
      %1592 = vmatmul.mubr.bf16.gmra.mrb[0].mxu0 %v1284
      %v1593 = vpop.f32.mrb[0].mxu0
      %v1594 = vadd.f32 %v1477, %v1593
      %v1595 = vpop.f32.mrb[0].mxu0
      %v1596 = vpop.f32.mrb[0].mxu0
      %v1597 = vadd.f32 %v1477, %v1596
      %v1598 = vpop.f32.mrb[0].mxu0
      %1599 = vmatprep.mubr.bf16.mxu0 0
      %1600 = vmatmul.mubr.bf16.gmra.mrb[0].mxu0 %v1285
      %v1601 = vpop.f32.mrb[0].mxu0
      %v1602 = vadd.f32 %v1477, %v1601
      %v1603 = vpop.f32.mrb[0].mxu0
      %v1604 = vpop.f32.mrb[0].mxu0
      %v1605 = vadd.f32 %v1477, %v1604
      %v1606 = vpop.f32.mrb[0].mxu0
      %1607 = vmatprep.mubr.bf16.mxu0 0
      %1608 = vmatmul.mubr.bf16.gmra.mrb[0].mxu0 %v1286
      %v1609 = vpop.f32.mrb[0].mxu0
      %v1610 = vadd.f32 %v1477, %v1609
      %v1611 = vpop.f32.mrb[0].mxu0
      %v1612 = vpop.f32.mrb[0].mxu0
      %v1613 = vadd.f32 %v1477, %v1612
      %v1614 = vpop.f32.mrb[0].mxu0
      %1615 = vmatprep.mubr.bf16.mxu0 0
      %1616 = vmatmul.mubr.bf16.gmra.mrb[0].mxu0 %v1287
      %v1617 = vpop.f32.mrb[0].mxu0
      %v1618 = vadd.f32 %v1477, %v1617
      %v1619 = vpop.f32.mrb[0].mxu0
      %v1620 = vpop.f32.mrb[0].mxu0
      %v1621 = vadd.f32 %v1477, %v1620
      %v1622 = vpop.f32.mrb[0].mxu0
      %1623 = vdwg.mxu0
      %v1624 = vld [vmem:[%s1126] sm:$0xf]
      %v1625 = vld [vmem:[%s1126 + $0x4] sm:$0xf]
      %v1626 = vld [vmem:[%s1126 + $0x8] sm:$0xf]
      %v1627 = vld [vmem:[%s1126 + $0xc] sm:$0xf]
      %v1628 = vld [vmem:[%s1126 + $0x10] sm:$0xf]
      %v1629 = vld [vmem:[%s1126 + $0x14] sm:$0xf]
      %v1630 = vld [vmem:[%s1126 + $0x18] sm:$0xf]
      %v1631 = vld [vmem:[%s1126 + $0x1c] sm:$0xf]
      %v1632 = vld [vmem:[%s1126 + $0x20] sm:$0xf]
      %v1633 = vld [vmem:[%s1126 + $0x24] sm:$0xf]
      %v1634 = vld [vmem:[%s1126 + $0x28] sm:$0xf]
      %v1635 = vld [vmem:[%s1126 + $0x2c] sm:$0xf]
      %v1636 = vld [vmem:[%s1126 + $0x30] sm:$0xf]
      %v1637 = vld [vmem:[%s1126 + $0x34] sm:$0xf]
      %v1638 = vld [vmem:[%s1126 + $0x38] sm:$0xf]
      %v1639 = vld [vmem:[%s1126 + $0x3c] sm:$0xf]
      %v1640 = vld [vmem:[%s1133] sm:$0x1]
      %v1642 = vlaneseq
      %v1643 = vshrl.u32 %v1642, 7
      %v1644 = vsub.s32 0, %v1643
      %v1645 = vrot.slane %v1640, %v1644
      %v1663 = vunpack.c.l.b16 %v1624
      %v1664 = vunpack.c.l.b16 %v1625
      %v1665 = vunpack.c.l.b16 %v1626
      %v1666 = vunpack.c.l.b16 %v1627
      %v1667 = vunpack.c.l.b16 %v1628
      %v1668 = vunpack.c.l.b16 %v1629
      %v1669 = vunpack.c.l.b16 %v1630
      %v1670 = vunpack.c.l.b16 %v1631
      %v1671 = vunpack.c.l.b16 %v1632
      %v1672 = vunpack.c.l.b16 %v1633
      %v1673 = vunpack.c.l.b16 %v1634
      %v1674 = vunpack.c.l.b16 %v1635
      %v1675 = vunpack.c.l.b16 %v1636
      %v1676 = vunpack.c.l.b16 %v1637
      %v1677 = vunpack.c.l.b16 %v1638
      %v1678 = vunpack.c.l.b16 %v1639
      %v1679 = vpack.c.b16 %v1664, %v1663
      %v1680 = vpack.c.b16 %v1666, %v1665
      %v1681 = vpack.c.b16 %v1668, %v1667
      %v1682 = vpack.c.b16 %v1670, %v1669
      %v1683 = vpack.c.b16 %v1672, %v1671
      %v1684 = vpack.c.b16 %v1674, %v1673
      %v1685 = vpack.c.b16 %v1676, %v1675
      %v1686 = vpack.c.b16 %v1678, %v1677
      %1695 = vmatprep.subr.bf16.mxu0 0
      %1696 = vmatpush1.bf16.msra.mxu0 %v1679
      %1697 = vmatprep.subr.bf16.mxu0 0
      %1698 = vmatpush1.bf16.msra.mxu0 %v1680
      %1699 = vmatprep.subr.bf16.mxu0 0
      %1700 = vmatpush1.bf16.msra.mxu0 %v1681
      %1701 = vmatprep.subr.bf16.mxu0 0
      %1702 = vmatpush1.bf16.msra.mxu0 %v1682
      %1703 = vmatprep.subr.bf16.mxu0 0
      %1704 = vmatpush1.bf16.msra.mxu0 %v1683
      %1705 = vmatprep.subr.bf16.mxu0 0
      %1706 = vmatpush1.bf16.msra.mxu0 %v1684
      %1707 = vmatprep.subr.bf16.mxu0 0
      %1708 = vmatpush1.bf16.msra.mxu0 %v1685
      %1709 = vmatprep.subr.bf16.mxu0 0
      %1710 = vmatpush1.bf16.msra.mxu0 %v1686
      %1711 = vmatprep.subr.bf16.mxu0 0
      %1712 = vmatpush1.bf16.msra.mxu0 0
      %1713 = vmatprep.subr.bf16.mxu0 0
      %1714 = vmatpush1.bf16.msra.mxu0 0
      %1715 = vmatprep.subr.bf16.mxu0 0
      %1716 = vmatpush1.bf16.msra.mxu0 0
      %1717 = vmatprep.subr.bf16.mxu0 0
      %1718 = vmatpush1.bf16.msra.mxu0 0
      %1719 = vmatprep.subr.bf16.mxu0 0
      %1720 = vmatpush1.bf16.msra.mxu0 0
      %1721 = vmatprep.subr.bf16.mxu0 0
      %1722 = vmatpush1.bf16.msra.mxu0 0
      %1723 = vmatprep.subr.bf16.mxu0 0
      %1724 = vmatpush1.bf16.msra.mxu0 0
      %1725 = vmatprep.subr.bf16.mxu0 0
      %1726 = vmatpush1.bf16.msra.mxu0 0
      %1727 = vmatprep.mubr.bf16.mxu0 0
      %1728 = vmatmul.mubr.bf16.gmra.mrb[0].mxu0 %v1280
      %v1729 = vpop.f32.mrb[0].mxu0
      %v1730 = vadd.f32 %v1645, %v1729
      %v1731 = vpop.f32.mrb[0].mxu0
      %v1732 = vpop.f32.mrb[0].mxu0
      %v1733 = vadd.f32 %v1645, %v1732
      %v1734 = vpop.f32.mrb[0].mxu0
      %1735 = vmatprep.mubr.bf16.mxu0 0
      %1736 = vmatmul.mubr.bf16.gmra.mrb[0].mxu0 %v1281
      %v1737 = vpop.f32.mrb[0].mxu0
      %v1738 = vadd.f32 %v1645, %v1737
      %v1739 = vpop.f32.mrb[0].mxu0
      %v1740 = vpop.f32.mrb[0].mxu0
      %v1741 = vadd.f32 %v1645, %v1740
      %v1742 = vpop.f32.mrb[0].mxu0
      %1743 = vmatprep.mubr.bf16.mxu0 0
      %1744 = vmatmul.mubr.bf16.gmra.mrb[0].mxu0 %v1282
      %v1745 = vpop.f32.mrb[0].mxu0
      %v1746 = vadd.f32 %v1645, %v1745
      %v1747 = vpop.f32.mrb[0].mxu0
      %v1748 = vpop.f32.mrb[0].mxu0
      %v1749 = vadd.f32 %v1645, %v1748
      %v1750 = vpop.f32.mrb[0].mxu0
      %1751 = vmatprep.mubr.bf16.mxu0 0
      %1752 = vmatmul.mubr.bf16.gmra.mrb[0].mxu0 %v1283
      %v1753 = vpop.f32.mrb[0].mxu0
      %v1754 = vadd.f32 %v1645, %v1753
      %v1755 = vpop.f32.mrb[0].mxu0
      %v1756 = vpop.f32.mrb[0].mxu0
      %v1757 = vadd.f32 %v1645, %v1756
      %v1758 = vpop.f32.mrb[0].mxu0
      %1759 = vmatprep.mubr.bf16.mxu0 0
      %1760 = vmatmul.mubr.bf16.gmra.mrb[0].mxu0 %v1284
      %v1761 = vpop.f32.mrb[0].mxu0
      %v1762 = vadd.f32 %v1645, %v1761
      %v1763 = vpop.f32.mrb[0].mxu0
      %v1764 = vpop.f32.mrb[0].mxu0
      %v1765 = vadd.f32 %v1645, %v1764
      %v1766 = vpop.f32.mrb[0].mxu0
      %1767 = vmatprep.mubr.bf16.mxu0 0
      %1768 = vmatmul.mubr.bf16.gmra.mrb[0].mxu0 %v1285
      %v1769 = vpop.f32.mrb[0].mxu0
      %v1770 = vadd.f32 %v1645, %v1769
      %v1771 = vpop.f32.mrb[0].mxu0
      %v1772 = vpop.f32.mrb[0].mxu0
      %v1773 = vadd.f32 %v1645, %v1772
      %v1774 = vpop.f32.mrb[0].mxu0
      %1775 = vmatprep.mubr.bf16.mxu0 0
      %1776 = vmatmul.mubr.bf16.gmra.mrb[0].mxu0 %v1286
      %v1777 = vpop.f32.mrb[0].mxu0
      %v1778 = vadd.f32 %v1645, %v1777
      %v1779 = vpop.f32.mrb[0].mxu0
      %v1780 = vpop.f32.mrb[0].mxu0
      %v1781 = vadd.f32 %v1645, %v1780
      %v1782 = vpop.f32.mrb[0].mxu0
      %1783 = vmatprep.mubr.bf16.mxu0 0
      %1784 = vmatmul.mubr.bf16.gmra.mrb[0].mxu0 %v1287
      %v1785 = vpop.f32.mrb[0].mxu0
      %v1786 = vadd.f32 %v1645, %v1785
      %v1787 = vpop.f32.mrb[0].mxu0
      %v1788 = vpop.f32.mrb[0].mxu0
      %v1789 = vadd.f32 %v1645, %v1788
      %v1790 = vpop.f32.mrb[0].mxu0
      %1791 = vdwg.mxu0
      %v1792 = vpack.c.bf16 %v1565, %v1562
      %v1793 = vpack.c.bf16 %v1573, %v1570
      %v1794 = vpack.c.bf16 %v1581, %v1578
      %v1795 = vpack.c.bf16 %v1589, %v1586
      %v1796 = vpack.c.bf16 %v1597, %v1594
      %v1797 = vpack.c.bf16 %v1605, %v1602
      %v1798 = vpack.c.bf16 %v1613, %v1610
      %v1799 = vpack.c.bf16 %v1621, %v1618
      %1800 = vst [vmem:[#allocation4] sm:$0xff] %v1792
      %1801 = vst [vmem:[#allocation4 + $0x8] sm:$0xff] %v1793
      %1802 = vst [vmem:[#allocation4 + $0x10] sm:$0xff] %v1794
      %1803 = vst [vmem:[#allocation4 + $0x18] sm:$0xff] %v1795
      %1804 = vst [vmem:[#allocation4 + $0x20] sm:$0xff] %v1796
      %1805 = vst [vmem:[#allocation4 + $0x28] sm:$0xff] %v1797
      %1806 = vst [vmem:[#allocation4 + $0x30] sm:$0xff] %v1798
      %1807 = vst [vmem:[#allocation4 + $0x38] sm:$0xff] %v1799
      %vm1808 = vcmp.ge.s32.totalorder %v1260, 0
      %vm1809 = vcmp.lt.s32.totalorder %v1260, 16
      %vm1810 = vmand %vm1808, %vm1809
      %v1811 = vsel %vm1810, 1, 0
      %v1812 = vcvt.s32.f32 %v1811
      %v1813 = vmul.f32 %v1394, %v1812
      %v1814 = vmul.f32 %v1397, %v1812
      %v1815 = vmul.f32 %v1402, %v1812
      %v1816 = vmul.f32 %v1405, %v1812
      %v1817 = vmul.f32 %v1410, %v1812
      %v1818 = vmul.f32 %v1413, %v1812
      %v1819 = vmul.f32 %v1418, %v1812
      %v1820 = vmul.f32 %v1421, %v1812
      %v1821 = vmul.f32 %v1426, %v1812
      %v1822 = vmul.f32 %v1429, %v1812
      %v1823 = vmul.f32 %v1434, %v1812
      %v1824 = vmul.f32 %v1437, %v1812
      %v1825 = vmul.f32 %v1442, %v1812
      %v1826 = vmul.f32 %v1445, %v1812
      %v1827 = vmul.f32 %v1450, %v1812
      %v1828 = vmul.f32 %v1453, %v1812
      %v1829 = vpack.c.bf16 %v1814, %v1813
      %v1830 = vpack.c.bf16 %v1816, %v1815
      %v1831 = vpack.c.bf16 %v1818, %v1817
      %v1832 = vpack.c.bf16 %v1820, %v1819
      %v1833 = vpack.c.bf16 %v1822, %v1821
      %v1834 = vpack.c.bf16 %v1824, %v1823
      %v1835 = vpack.c.bf16 %v1826, %v1825
      %v1836 = vpack.c.bf16 %v1828, %v1827
      %1837 = vst [vmem:[#allocation3] sm:$0xff] %v1829
      %1838 = vst [vmem:[#allocation3 + $0x8] sm:$0xff] %v1830
      %1839 = vst [vmem:[#allocation3 + $0x10] sm:$0xff] %v1831
      %1840 = vst [vmem:[#allocation3 + $0x18] sm:$0xff] %v1832
      %1841 = vst [vmem:[#allocation3 + $0x20] sm:$0xff] %v1833
      %1842 = vst [vmem:[#allocation3 + $0x28] sm:$0xff] %v1834
      %1843 = vst [vmem:[#allocation3 + $0x30] sm:$0xff] %v1835
      %1844 = vst [vmem:[#allocation3 + $0x38] sm:$0xff] %v1836
      %v1845 = vmul.f32 %v1730, %v1812
      %v1846 = vmul.f32 %v1733, %v1812
      %v1847 = vmul.f32 %v1738, %v1812
      %v1848 = vmul.f32 %v1741, %v1812
      %v1849 = vmul.f32 %v1746, %v1812
      %v1850 = vmul.f32 %v1749, %v1812
      %v1851 = vmul.f32 %v1754, %v1812
      %v1852 = vmul.f32 %v1757, %v1812
      %v1853 = vmul.f32 %v1762, %v1812
      %v1854 = vmul.f32 %v1765, %v1812
      %v1855 = vmul.f32 %v1770, %v1812
      %v1856 = vmul.f32 %v1773, %v1812
      %v1857 = vmul.f32 %v1778, %v1812
      %v1858 = vmul.f32 %v1781, %v1812
      %v1859 = vmul.f32 %v1786, %v1812
      %v1860 = vmul.f32 %v1789, %v1812
      %v1861 = vpack.c.bf16 %v1846, %v1845
      %v1862 = vpack.c.bf16 %v1848, %v1847
      %v1863 = vpack.c.bf16 %v1850, %v1849
      %v1864 = vpack.c.bf16 %v1852, %v1851
      %v1865 = vpack.c.bf16 %v1854, %v1853
      %v1866 = vpack.c.bf16 %v1856, %v1855
      %v1867 = vpack.c.bf16 %v1858, %v1857
      %v1868 = vpack.c.bf16 %v1860, %v1859
      %1869 = vst [vmem:[#allocation5] sm:$0xff] %v1861
      %1870 = vst [vmem:[#allocation5 + $0x8] sm:$0xff] %v1862
      %1871 = vst [vmem:[#allocation5 + $0x10] sm:$0xff] %v1863
      %1872 = vst [vmem:[#allocation5 + $0x18] sm:$0xff] %v1864
      %1873 = vst [vmem:[#allocation5 + $0x20] sm:$0xff] %v1865
      %1874 = vst [vmem:[#allocation5 + $0x28] sm:$0xff] %v1866
      %1875 = vst [vmem:[#allocation5 + $0x30] sm:$0xff] %v1867
      %1876 = vst [vmem:[#allocation5 + $0x38] sm:$0xff] %v1868
      %vm1877 = vcmp.ge.s32.totalorder %v1260, 16
      %vm1878 = vmand %vm1877, %vm1261
      %v1879 = vsel %vm1878, 1, 0
      %v1880 = vcvt.s32.f32 %v1879
      %v1881 = vmul.f32 %v1394, %v1880
      %v1882 = vmul.f32 %v1397, %v1880
      %v1883 = vmul.f32 %v1402, %v1880
      %v1884 = vmul.f32 %v1405, %v1880
      %v1885 = vmul.f32 %v1410, %v1880
      %v1886 = vmul.f32 %v1413, %v1880
      %v1887 = vmul.f32 %v1418, %v1880
      %v1888 = vmul.f32 %v1421, %v1880
      %v1889 = vmul.f32 %v1426, %v1880
      %v1890 = vmul.f32 %v1429, %v1880
      %v1891 = vmul.f32 %v1434, %v1880
      %v1892 = vmul.f32 %v1437, %v1880
      %v1893 = vmul.f32 %v1442, %v1880
      %v1894 = vmul.f32 %v1445, %v1880
      %v1895 = vmul.f32 %v1450, %v1880
      %v1896 = vmul.f32 %v1453, %v1880
      %v1897 = vpack.c.bf16 %v1882, %v1881
      %v1898 = vpack.c.bf16 %v1884, %v1883
      %v1899 = vpack.c.bf16 %v1886, %v1885
      %v1900 = vpack.c.bf16 %v1888, %v1887
      %v1901 = vpack.c.bf16 %v1890, %v1889
      %v1902 = vpack.c.bf16 %v1892, %v1891
      %v1903 = vpack.c.bf16 %v1894, %v1893
      %v1904 = vpack.c.bf16 %v1896, %v1895
      %s1905 = scalar_lea.vmem [#allocation3], 64
      %1906 = vst [vmem:[%s1905] sm:$0xff] %v1897
      %1907 = vst [vmem:[%s1905 + $0x8] sm:$0xff] %v1898
      %1908 = vst [vmem:[%s1905 + $0x10] sm:$0xff] %v1899
      %1909 = vst [vmem:[%s1905 + $0x18] sm:$0xff] %v1900
      %1910 = vst [vmem:[%s1905 + $0x20] sm:$0xff] %v1901
      %1911 = vst [vmem:[%s1905 + $0x28] sm:$0xff] %v1902
      %1912 = vst [vmem:[%s1905 + $0x30] sm:$0xff] %v1903
      %1913 = vst [vmem:[%s1905 + $0x38] sm:$0xff] %v1904
      %v1914 = vmul.f32 %v1730, %v1880
      %v1915 = vmul.f32 %v1733, %v1880
      %v1916 = vmul.f32 %v1738, %v1880
      %v1917 = vmul.f32 %v1741, %v1880
      %v1918 = vmul.f32 %v1746, %v1880
      %v1919 = vmul.f32 %v1749, %v1880
      %v1920 = vmul.f32 %v1754, %v1880
      %v1921 = vmul.f32 %v1757, %v1880
      %v1922 = vmul.f32 %v1762, %v1880
      %v1923 = vmul.f32 %v1765, %v1880
      %v1924 = vmul.f32 %v1770, %v1880
      %v1925 = vmul.f32 %v1773, %v1880
      %v1926 = vmul.f32 %v1778, %v1880
      %v1927 = vmul.f32 %v1781, %v1880
      %v1928 = vmul.f32 %v1786, %v1880
      %v1929 = vmul.f32 %v1789, %v1880
      %v1930 = vpack.c.bf16 %v1915, %v1914
      %v1931 = vpack.c.bf16 %v1917, %v1916
      %v1932 = vpack.c.bf16 %v1919, %v1918
      %v1933 = vpack.c.bf16 %v1921, %v1920
      %v1934 = vpack.c.bf16 %v1923, %v1922
      %v1935 = vpack.c.bf16 %v1925, %v1924
      %v1936 = vpack.c.bf16 %v1927, %v1926
      %v1937 = vpack.c.bf16 %v1929, %v1928
      %s1938 = scalar_lea.vmem [#allocation5], 64
      %1939 = vst [vmem:[%s1938] sm:$0xff] %v1930
      %1940 = vst [vmem:[%s1938 + $0x8] sm:$0xff] %v1931
      %1941 = vst [vmem:[%s1938 + $0x10] sm:$0xff] %v1932
      %1942 = vst [vmem:[%s1938 + $0x18] sm:$0xff] %v1933
      %1943 = vst [vmem:[%s1938 + $0x20] sm:$0xff] %v1934
      %1944 = vst [vmem:[%s1938 + $0x28] sm:$0xff] %v1935
      %1945 = vst [vmem:[%s1938 + $0x30] sm:$0xff] %v1936
      %1946 = vst [vmem:[%s1938 + $0x38] sm:$0xff] %v1937
      %v1947 = vld [vmem:[%s1081] sm:$0xff]
      %v1948 = vld [vmem:[%s1081 + $0x8] sm:$0xff]
      %v1949 = vld [vmem:[%s1081 + $0x10] sm:$0xff]
      %v1950 = vld [vmem:[%s1081 + $0x18] sm:$0xff]
      %v1951 = vld [vmem:[%s1081 + $0x20] sm:$0xff]
      %v1952 = vld [vmem:[%s1081 + $0x28] sm:$0xff]
      %v1953 = vld [vmem:[%s1081 + $0x30] sm:$0xff]
      %v1954 = vld [vmem:[%s1081 + $0x38] sm:$0xff]
      %v1955 = vld [vmem:[%s1081 + $0x40] sm:$0xff]
      %v1956 = vld [vmem:[%s1081 + $0x48] sm:$0xff]
      %v1957 = vld [vmem:[%s1081 + $0x50] sm:$0xff]
      %v1958 = vld [vmem:[%s1081 + $0x58] sm:$0xff]
      %v1959 = vld [vmem:[%s1081 + $0x60] sm:$0xff]
      %v1960 = vld [vmem:[%s1081 + $0x68] sm:$0xff]
      %v1961 = vld [vmem:[%s1081 + $0x70] sm:$0xff]
      %v1962 = vld [vmem:[%s1081 + $0x78] sm:$0xff]
      %v1963 = vld [vmem:[#allocation3] sm:$0xff]
      %v1964 = vld [vmem:[#allocation3 + $0x8] sm:$0xff]
      %v1965 = vld [vmem:[#allocation3 + $0x10] sm:$0xff]
      %v1966 = vld [vmem:[#allocation3 + $0x18] sm:$0xff]
      %v1967 = vld [vmem:[#allocation3 + $0x20] sm:$0xff]
      %v1968 = vld [vmem:[#allocation3 + $0x28] sm:$0xff]
      %v1969 = vld [vmem:[#allocation3 + $0x30] sm:$0xff]
      %v1970 = vld [vmem:[#allocation3 + $0x38] sm:$0xff]
      %v1971 = vld [vmem:[#allocation4] sm:$0xff]
      %v1972 = vld [vmem:[#allocation4 + $0x8] sm:$0xff]
      %v1973 = vld [vmem:[#allocation4 + $0x10] sm:$0xff]
      %v1974 = vld [vmem:[#allocation4 + $0x18] sm:$0xff]
      %v1975 = vld [vmem:[#allocation4 + $0x20] sm:$0xff]
      %v1976 = vld [vmem:[#allocation4 + $0x28] sm:$0xff]
      %v1977 = vld [vmem:[#allocation4 + $0x30] sm:$0xff]
      %v1978 = vld [vmem:[#allocation4 + $0x38] sm:$0xff]
      %1979 = vmatprep.subr.bf16.mxu0 0
      %1980 = vmatpush1.bf16.xpose.msra.mxu0 %v1971
      %1981 = vmatprep.subr.bf16.mxu0 0
      %1982 = vmatpush1.bf16.xpose.msra.mxu0 %v1972
      %1983 = vmatprep.subr.bf16.mxu0 0
      %1984 = vmatpush1.bf16.xpose.msra.mxu0 %v1973
      %1985 = vmatprep.subr.bf16.mxu0 0
      %1986 = vmatpush1.bf16.xpose.msra.mxu0 %v1974
      %1987 = vmatprep.subr.bf16.mxu0 0
      %1988 = vmatpush1.bf16.xpose.msra.mxu0 %v1975
      %1989 = vmatprep.subr.bf16.mxu0 0
      %1990 = vmatpush1.bf16.xpose.msra.mxu0 %v1976
      %1991 = vmatprep.subr.bf16.mxu0 0
      %1992 = vmatpush1.bf16.xpose.msra.mxu0 %v1977
      %1993 = vmatprep.subr.bf16.mxu0 0
      %1994 = vmatpush1.bf16.xpose.msra.mxu0 %v1978
      %1995 = vmatprep.subr.bf16.mxu0 0
      %1996 = vmatpush1.bf16.xpose.msra.mxu0 0
      %1997 = vmatprep.subr.bf16.mxu0 0
      %1998 = vmatpush1.bf16.xpose.msra.mxu0 0
      %1999 = vmatprep.subr.bf16.mxu0 0
      %2000 = vmatpush1.bf16.xpose.msra.mxu0 0
      %2001 = vmatprep.subr.bf16.mxu0 0
      %2002 = vmatpush1.bf16.xpose.msra.mxu0 0
      %2003 = vmatprep.subr.bf16.mxu0 0
      %2004 = vmatpush1.bf16.xpose.msra.mxu0 0
      %2005 = vmatprep.subr.bf16.mxu0 0
      %2006 = vmatpush1.bf16.xpose.msra.mxu0 0
      %2007 = vmatprep.subr.bf16.mxu0 0
      %2008 = vmatpush1.bf16.xpose.msra.mxu0 0
      %2009 = vmatprep.subr.bf16.mxu0 0
      %2010 = vmatpush1.bf16.xpose.msra.mxu0 0
      %2011 = vmatprep.mubr.bf16.mxu0 0
      %2012 = vmatmul.mubr.bf16.gmra.mrb[0].mxu0 %v1963
      %v2013 = vpop.f32.mrb[0].mxu0
      %v2014 = vadd.f32 %v1947, %v2013
      %v2015 = vpop.f32.mrb[0].mxu0
      %v2016 = vpop.f32.mrb[0].mxu0
      %v2017 = vadd.f32 %v1948, %v2016
      %v2018 = vpop.f32.mrb[0].mxu0
      %2019 = vmatprep.mubr.bf16.mxu0 0
      %2020 = vmatmul.mubr.bf16.gmra.mrb[0].mxu0 %v1964
      %v2021 = vpop.f32.mrb[0].mxu0
      %v2022 = vadd.f32 %v1949, %v2021
      %v2023 = vpop.f32.mrb[0].mxu0
      %v2024 = vpop.f32.mrb[0].mxu0
      %v2025 = vadd.f32 %v1950, %v2024
      %v2026 = vpop.f32.mrb[0].mxu0
      %2027 = vmatprep.mubr.bf16.mxu0 0
      %2028 = vmatmul.mubr.bf16.gmra.mrb[0].mxu0 %v1965
      %v2029 = vpop.f32.mrb[0].mxu0
      %v2030 = vadd.f32 %v1951, %v2029
      %v2031 = vpop.f32.mrb[0].mxu0
      %v2032 = vpop.f32.mrb[0].mxu0
      %v2033 = vadd.f32 %v1952, %v2032
      %v2034 = vpop.f32.mrb[0].mxu0
      %2035 = vmatprep.mubr.bf16.mxu0 0
      %2036 = vmatmul.mubr.bf16.gmra.mrb[0].mxu0 %v1966
      %v2037 = vpop.f32.mrb[0].mxu0
      %v2038 = vadd.f32 %v1953, %v2037
      %v2039 = vpop.f32.mrb[0].mxu0
      %v2040 = vpop.f32.mrb[0].mxu0
      %v2041 = vadd.f32 %v1954, %v2040
      %v2042 = vpop.f32.mrb[0].mxu0
      %2043 = vmatprep.mubr.bf16.mxu0 0
      %2044 = vmatmul.mubr.bf16.gmra.mrb[0].mxu0 %v1967
      %v2045 = vpop.f32.mrb[0].mxu0
      %v2046 = vadd.f32 %v1955, %v2045
      %v2047 = vpop.f32.mrb[0].mxu0
      %v2048 = vpop.f32.mrb[0].mxu0
      %v2049 = vadd.f32 %v1956, %v2048
      %v2050 = vpop.f32.mrb[0].mxu0
      %2051 = vmatprep.mubr.bf16.mxu0 0
      %2052 = vmatmul.mubr.bf16.gmra.mrb[0].mxu0 %v1968
      %v2053 = vpop.f32.mrb[0].mxu0
      %v2054 = vadd.f32 %v1957, %v2053
      %v2055 = vpop.f32.mrb[0].mxu0
      %v2056 = vpop.f32.mrb[0].mxu0
      %v2057 = vadd.f32 %v1958, %v2056
      %v2058 = vpop.f32.mrb[0].mxu0
      %2059 = vmatprep.mubr.bf16.mxu0 0
      %2060 = vmatmul.mubr.bf16.gmra.mrb[0].mxu0 %v1969
      %v2061 = vpop.f32.mrb[0].mxu0
      %v2062 = vadd.f32 %v1959, %v2061
      %v2063 = vpop.f32.mrb[0].mxu0
      %v2064 = vpop.f32.mrb[0].mxu0
      %v2065 = vadd.f32 %v1960, %v2064
      %v2066 = vpop.f32.mrb[0].mxu0
      %2067 = vmatprep.mubr.bf16.mxu0 0
      %2068 = vmatmul.mubr.bf16.gmra.mrb[0].mxu0 %v1970
      %v2069 = vpop.f32.mrb[0].mxu0
      %v2070 = vadd.f32 %v1961, %v2069
      %v2071 = vpop.f32.mrb[0].mxu0
      %v2072 = vpop.f32.mrb[0].mxu0
      %v2073 = vadd.f32 %v1962, %v2072
      %v2074 = vpop.f32.mrb[0].mxu0
      %2075 = vdwg.mxu0
      %2076 = vmax.xlane.f32.xlu0 %v2014
      %v2077 = vpop.xlane.xlu0 %2076
      %2078 = vmax.xlane.f32.xlu0 %v2017
      %v2079 = vpop.xlane.xlu0 %2078
      %2080 = vmax.xlane.f32.xlu0 %v2022
      %v2081 = vpop.xlane.xlu0 %2080
      %2082 = vmax.xlane.f32.xlu0 %v2025
      %v2083 = vpop.xlane.xlu0 %2082
      %2084 = vmax.xlane.f32.xlu0 %v2030
      %v2085 = vpop.xlane.xlu0 %2084
      %2086 = vmax.xlane.f32.xlu0 %v2033
      %v2087 = vpop.xlane.xlu0 %2086
      %2088 = vmax.xlane.f32.xlu0 %v2038
      %v2089 = vpop.xlane.xlu0 %2088
      %2090 = vmax.xlane.f32.xlu0 %v2041
      %v2091 = vpop.xlane.xlu0 %2090
      %2092 = vmax.xlane.f32.xlu0 %v2046
      %v2093 = vpop.xlane.xlu0 %2092
      %2094 = vmax.xlane.f32.xlu0 %v2049
      %v2095 = vpop.xlane.xlu0 %2094
      %2096 = vmax.xlane.f32.xlu0 %v2054
      %v2097 = vpop.xlane.xlu0 %2096
      %2098 = vmax.xlane.f32.xlu0 %v2057
      %v2099 = vpop.xlane.xlu0 %2098
      %2100 = vmax.xlane.f32.xlu0 %v2062
      %v2101 = vpop.xlane.xlu0 %2100
      %2102 = vmax.xlane.f32.xlu0 %v2065
      %v2103 = vpop.xlane.xlu0 %2102
      %2104 = vmax.xlane.f32.xlu0 %v2070
      %v2105 = vpop.xlane.xlu0 %2104
      %2106 = vmax.xlane.f32.xlu0 %v2073
      %v2107 = vpop.xlane.xlu0 %2106
      %v2108 = vsub.f32 %v2014, %v2077
      %v2109 = vsub.f32 %v2017, %v2079
      %v2110 = vsub.f32 %v2022, %v2081
      %v2111 = vsub.f32 %v2025, %v2083
      %v2112 = vsub.f32 %v2030, %v2085
      %v2113 = vsub.f32 %v2033, %v2087
      %v2114 = vsub.f32 %v2038, %v2089
      %v2115 = vsub.f32 %v2041, %v2091
      %v2116 = vsub.f32 %v2046, %v2093
      %v2117 = vsub.f32 %v2049, %v2095
      %v2118 = vsub.f32 %v2054, %v2097
      %v2119 = vsub.f32 %v2057, %v2099
      %v2120 = vsub.f32 %v2062, %v2101
      %v2121 = vsub.f32 %v2065, %v2103
      %v2122 = vsub.f32 %v2070, %v2105
      %v2123 = vsub.f32 %v2073, %v2107
      %v2124 = vmul.f32 %v2108, 1.442695
      %v2125 = vpow.pop %v2124
      %v2126 = vmul.f32 %v2109, 1.442695
      %v2127 = vpow.pop %v2126
      %v2128 = vmul.f32 %v2110, 1.442695
      %v2129 = vpow.pop %v2128
      %v2130 = vmul.f32 %v2111, 1.442695
      %v2131 = vpow.pop %v2130
      %v2132 = vmul.f32 %v2112, 1.442695
      %v2133 = vpow.pop %v2132
      %v2134 = vmul.f32 %v2113, 1.442695
      %v2135 = vpow.pop %v2134
      %v2136 = vmul.f32 %v2114, 1.442695
      %v2137 = vpow.pop %v2136
      %v2138 = vmul.f32 %v2115, 1.442695
      %v2139 = vpow.pop %v2138
      %v2140 = vmul.f32 %v2116, 1.442695
      %v2141 = vpow.pop %v2140
      %v2142 = vmul.f32 %v2117, 1.442695
      %v2143 = vpow.pop %v2142
      %v2144 = vmul.f32 %v2118, 1.442695
      %v2145 = vpow.pop %v2144
      %v2146 = vmul.f32 %v2119, 1.442695
      %v2147 = vpow.pop %v2146
      %v2148 = vmul.f32 %v2120, 1.442695
      %v2149 = vpow.pop %v2148
      %v2150 = vmul.f32 %v2121, 1.442695
      %v2151 = vpow.pop %v2150
      %v2152 = vmul.f32 %v2122, 1.442695
      %v2153 = vpow.pop %v2152
      %v2154 = vmul.f32 %v2123, 1.442695
      %v2155 = vpow.pop %v2154
      %2156 = vadd.xlane.f32.xlu0 %v2125
      %v2157 = vpop.xlane.xlu0 %2156
      %2158 = vadd.xlane.f32.xlu0 %v2127
      %v2159 = vpop.xlane.xlu0 %2158
      %2160 = vadd.xlane.f32.xlu0 %v2129
      %v2161 = vpop.xlane.xlu0 %2160
      %2162 = vadd.xlane.f32.xlu0 %v2131
      %v2163 = vpop.xlane.xlu0 %2162
      %2164 = vadd.xlane.f32.xlu0 %v2133
      %v2165 = vpop.xlane.xlu0 %2164
      %2166 = vadd.xlane.f32.xlu0 %v2135
      %v2167 = vpop.xlane.xlu0 %2166
      %2168 = vadd.xlane.f32.xlu0 %v2137
      %v2169 = vpop.xlane.xlu0 %2168
      %2170 = vadd.xlane.f32.xlu0 %v2139
      %v2171 = vpop.xlane.xlu0 %2170
      %2172 = vadd.xlane.f32.xlu0 %v2141
      %v2173 = vpop.xlane.xlu0 %2172
      %2174 = vadd.xlane.f32.xlu0 %v2143
      %v2175 = vpop.xlane.xlu0 %2174
      %2176 = vadd.xlane.f32.xlu0 %v2145
      %v2177 = vpop.xlane.xlu0 %2176
      %2178 = vadd.xlane.f32.xlu0 %v2147
      %v2179 = vpop.xlane.xlu0 %2178
      %2180 = vadd.xlane.f32.xlu0 %v2149
      %v2181 = vpop.xlane.xlu0 %2180
      %2182 = vadd.xlane.f32.xlu0 %v2151
      %v2183 = vpop.xlane.xlu0 %2182
      %2184 = vadd.xlane.f32.xlu0 %v2153
      %v2185 = vpop.xlane.xlu0 %2184
      %2186 = vadd.xlane.f32.xlu0 %v2155
      %v2187 = vpop.xlane.xlu0 %2186
      %v2188 = vrcp.pop %v2157
      %v2189 = vrcp.pop %v2159
      %v2190 = vrcp.pop %v2161
      %v2191 = vrcp.pop %v2163
      %v2192 = vrcp.pop %v2165
      %v2193 = vrcp.pop %v2167
      %v2194 = vrcp.pop %v2169
      %v2195 = vrcp.pop %v2171
      %v2196 = vrcp.pop %v2173
      %v2197 = vrcp.pop %v2175
      %v2198 = vrcp.pop %v2177
      %v2199 = vrcp.pop %v2179
      %v2200 = vrcp.pop %v2181
      %v2201 = vrcp.pop %v2183
      %v2202 = vrcp.pop %v2185
      %v2203 = vrcp.pop %v2187
      %v2204 = vmul.f32 %v2125, %v2188
      %v2205 = vmul.f32 %v2127, %v2189
      %v2206 = vmul.f32 %v2129, %v2190
      %v2207 = vmul.f32 %v2131, %v2191
      %v2208 = vmul.f32 %v2133, %v2192
      %v2209 = vmul.f32 %v2135, %v2193
      %v2210 = vmul.f32 %v2137, %v2194
      %v2211 = vmul.f32 %v2139, %v2195
      %v2212 = vmul.f32 %v2141, %v2196
      %v2213 = vmul.f32 %v2143, %v2197
      %v2214 = vmul.f32 %v2145, %v2198
      %v2215 = vmul.f32 %v2147, %v2199
      %v2216 = vmul.f32 %v2149, %v2200
      %v2217 = vmul.f32 %v2151, %v2201
      %v2218 = vmul.f32 %v2153, %v2202
      %v2219 = vmul.f32 %v2155, %v2203
      %v2220 = vpack.c.bf16 %v2205, %v2204
      %v2221 = vpack.c.bf16 %v2207, %v2206
      %v2222 = vpack.c.bf16 %v2209, %v2208
      %v2223 = vpack.c.bf16 %v2211, %v2210
      %v2224 = vpack.c.bf16 %v2213, %v2212
      %v2225 = vpack.c.bf16 %v2215, %v2214
      %v2226 = vpack.c.bf16 %v2217, %v2216
      %v2227 = vpack.c.bf16 %v2219, %v2218
      %v2228 = vld [vmem:[#allocation5] sm:$0xff]
      %v2229 = vld [vmem:[#allocation5 + $0x8] sm:$0xff]
      %v2230 = vld [vmem:[#allocation5 + $0x10] sm:$0xff]
      %v2231 = vld [vmem:[#allocation5 + $0x18] sm:$0xff]
      %v2232 = vld [vmem:[#allocation5 + $0x20] sm:$0xff]
      %v2233 = vld [vmem:[#allocation5 + $0x28] sm:$0xff]
      %v2234 = vld [vmem:[#allocation5 + $0x30] sm:$0xff]
      %v2235 = vld [vmem:[#allocation5 + $0x38] sm:$0xff]
      %v2236 = vld [vmem:[%s1905] sm:$0xff]
      %v2237 = vld [vmem:[%s1905 + $0x8] sm:$0xff]
      %v2238 = vld [vmem:[%s1905 + $0x10] sm:$0xff]
      %v2239 = vld [vmem:[%s1905 + $0x18] sm:$0xff]
      %v2240 = vld [vmem:[%s1905 + $0x20] sm:$0xff]
      %v2241 = vld [vmem:[%s1905 + $0x28] sm:$0xff]
      %v2242 = vld [vmem:[%s1905 + $0x30] sm:$0xff]
      %v2243 = vld [vmem:[%s1905 + $0x38] sm:$0xff]
      %2244 = vmatprep.subr.bf16.mxu0 0
      %2245 = vmatpush1.bf16.xpose.msra.mxu0 %v1971
      %2246 = vmatprep.subr.bf16.mxu0 0
      %2247 = vmatpush1.bf16.xpose.msra.mxu0 %v1972
      %2248 = vmatprep.subr.bf16.mxu0 0
      %2249 = vmatpush1.bf16.xpose.msra.mxu0 %v1973
      %2250 = vmatprep.subr.bf16.mxu0 0
      %2251 = vmatpush1.bf16.xpose.msra.mxu0 %v1974
      %2252 = vmatprep.subr.bf16.mxu0 0
      %2253 = vmatpush1.bf16.xpose.msra.mxu0 %v1975
      %2254 = vmatprep.subr.bf16.mxu0 0
      %2255 = vmatpush1.bf16.xpose.msra.mxu0 %v1976
      %2256 = vmatprep.subr.bf16.mxu0 0
      %2257 = vmatpush1.bf16.xpose.msra.mxu0 %v1977
      %2258 = vmatprep.subr.bf16.mxu0 0
      %2259 = vmatpush1.bf16.xpose.msra.mxu0 %v1978
      %2260 = vmatprep.subr.bf16.mxu0 0
      %2261 = vmatpush1.bf16.xpose.msra.mxu0 0
      %2262 = vmatprep.subr.bf16.mxu0 0
      %2263 = vmatpush1.bf16.xpose.msra.mxu0 0
      %2264 = vmatprep.subr.bf16.mxu0 0
      %2265 = vmatpush1.bf16.xpose.msra.mxu0 0
      %2266 = vmatprep.subr.bf16.mxu0 0
      %2267 = vmatpush1.bf16.xpose.msra.mxu0 0
      %2268 = vmatprep.subr.bf16.mxu0 0
      %2269 = vmatpush1.bf16.xpose.msra.mxu0 0
      %2270 = vmatprep.subr.bf16.mxu0 0
      %2271 = vmatpush1.bf16.xpose.msra.mxu0 0
      %2272 = vmatprep.subr.bf16.mxu0 0
      %2273 = vmatpush1.bf16.xpose.msra.mxu0 0
      %2274 = vmatprep.subr.bf16.mxu0 0
      %2275 = vmatpush1.bf16.xpose.msra.mxu0 0
      %2276 = vmatprep.mubr.bf16.mxu0 0
      %2277 = vmatmul.mubr.bf16.gmra.mrb[0].mxu0 %v2236
      %v2278 = vpop.f32.mrb[0].mxu0
      %v2279 = vadd.f32 %v1947, %v2278
      %v2280 = vpop.f32.mrb[0].mxu0
      %v2281 = vpop.f32.mrb[0].mxu0
      %v2282 = vadd.f32 %v1948, %v2281
      %v2283 = vpop.f32.mrb[0].mxu0
      %2284 = vmatprep.mubr.bf16.mxu0 0
      %2285 = vmatmul.mubr.bf16.gmra.mrb[0].mxu0 %v2237
      %v2286 = vpop.f32.mrb[0].mxu0
      %v2287 = vadd.f32 %v1949, %v2286
      %v2288 = vpop.f32.mrb[0].mxu0
      %v2289 = vpop.f32.mrb[0].mxu0
      %v2290 = vadd.f32 %v1950, %v2289
      %v2291 = vpop.f32.mrb[0].mxu0
      %2292 = vmatprep.mubr.bf16.mxu0 0
      %2293 = vmatmul.mubr.bf16.gmra.mrb[0].mxu0 %v2238
      %v2294 = vpop.f32.mrb[0].mxu0
      %v2295 = vadd.f32 %v1951, %v2294
      %v2296 = vpop.f32.mrb[0].mxu0
      %v2297 = vpop.f32.mrb[0].mxu0
      %v2298 = vadd.f32 %v1952, %v2297
      %v2299 = vpop.f32.mrb[0].mxu0
      %2300 = vmatprep.mubr.bf16.mxu0 0
      %2301 = vmatmul.mubr.bf16.gmra.mrb[0].mxu0 %v2239
      %v2302 = vpop.f32.mrb[0].mxu0
      %v2303 = vadd.f32 %v1953, %v2302
      %v2304 = vpop.f32.mrb[0].mxu0
      %v2305 = vpop.f32.mrb[0].mxu0
      %v2306 = vadd.f32 %v1954, %v2305
      %v2307 = vpop.f32.mrb[0].mxu0
      %2308 = vmatprep.mubr.bf16.mxu0 0
      %2309 = vmatmul.mubr.bf16.gmra.mrb[0].mxu0 %v2240
      %v2310 = vpop.f32.mrb[0].mxu0
      %v2311 = vadd.f32 %v1955, %v2310
      %v2312 = vpop.f32.mrb[0].mxu0
      %v2313 = vpop.f32.mrb[0].mxu0
      %v2314 = vadd.f32 %v1956, %v2313
      %v2315 = vpop.f32.mrb[0].mxu0
      %2316 = vmatprep.mubr.bf16.mxu0 0
      %2317 = vmatmul.mubr.bf16.gmra.mrb[0].mxu0 %v2241
      %v2318 = vpop.f32.mrb[0].mxu0
      %v2319 = vadd.f32 %v1957, %v2318
      %v2320 = vpop.f32.mrb[0].mxu0
      %v2321 = vpop.f32.mrb[0].mxu0
      %v2322 = vadd.f32 %v1958, %v2321
      %v2323 = vpop.f32.mrb[0].mxu0
      %2324 = vmatprep.mubr.bf16.mxu0 0
      %2325 = vmatmul.mubr.bf16.gmra.mrb[0].mxu0 %v2242
      %v2326 = vpop.f32.mrb[0].mxu0
      %v2327 = vadd.f32 %v1959, %v2326
      %v2328 = vpop.f32.mrb[0].mxu0
      %v2329 = vpop.f32.mrb[0].mxu0
      %v2330 = vadd.f32 %v1960, %v2329
      %v2331 = vpop.f32.mrb[0].mxu0
      %2332 = vmatprep.mubr.bf16.mxu0 0
      %2333 = vmatmul.mubr.bf16.gmra.mrb[0].mxu0 %v2243
      %v2334 = vpop.f32.mrb[0].mxu0
      %v2335 = vadd.f32 %v1961, %v2334
      %v2336 = vpop.f32.mrb[0].mxu0
      %v2337 = vpop.f32.mrb[0].mxu0
      %v2338 = vadd.f32 %v1962, %v2337
      %v2339 = vpop.f32.mrb[0].mxu0
      %2340 = vdwg.mxu0
      %2341 = vmax.xlane.f32.xlu0 %v2279
      %v2342 = vpop.xlane.xlu0 %2341
      %2343 = vmax.xlane.f32.xlu0 %v2282
      %v2344 = vpop.xlane.xlu0 %2343
      %2345 = vmax.xlane.f32.xlu0 %v2287
      %v2346 = vpop.xlane.xlu0 %2345
      %2347 = vmax.xlane.f32.xlu0 %v2290
      %v2348 = vpop.xlane.xlu0 %2347
      %2349 = vmax.xlane.f32.xlu0 %v2295
      %v2350 = vpop.xlane.xlu0 %2349
      %2351 = vmax.xlane.f32.xlu0 %v2298
      %v2352 = vpop.xlane.xlu0 %2351
      %2353 = vmax.xlane.f32.xlu0 %v2303
      %v2354 = vpop.xlane.xlu0 %2353
      %2355 = vmax.xlane.f32.xlu0 %v2306
      %v2356 = vpop.xlane.xlu0 %2355
      %2357 = vmax.xlane.f32.xlu0 %v2311
      %v2358 = vpop.xlane.xlu0 %2357
      %2359 = vmax.xlane.f32.xlu0 %v2314
      %v2360 = vpop.xlane.xlu0 %2359
      %2361 = vmax.xlane.f32.xlu0 %v2319
      %v2362 = vpop.xlane.xlu0 %2361
      %2363 = vmax.xlane.f32.xlu0 %v2322
      %v2364 = vpop.xlane.xlu0 %2363
      %2365 = vmax.xlane.f32.xlu0 %v2327
      %v2366 = vpop.xlane.xlu0 %2365
      %2367 = vmax.xlane.f32.xlu0 %v2330
      %v2368 = vpop.xlane.xlu0 %2367
      %2369 = vmax.xlane.f32.xlu0 %v2335
      %v2370 = vpop.xlane.xlu0 %2369
      %2371 = vmax.xlane.f32.xlu0 %v2338
      %v2372 = vpop.xlane.xlu0 %2371
      %v2373 = vsub.f32 %v2279, %v2342
      %v2374 = vsub.f32 %v2282, %v2344
      %v2375 = vsub.f32 %v2287, %v2346
      %v2376 = vsub.f32 %v2290, %v2348
      %v2377 = vsub.f32 %v2295, %v2350
      %v2378 = vsub.f32 %v2298, %v2352
      %v2379 = vsub.f32 %v2303, %v2354
      %v2380 = vsub.f32 %v2306, %v2356
      %v2381 = vsub.f32 %v2311, %v2358
      %v2382 = vsub.f32 %v2314, %v2360
      %v2383 = vsub.f32 %v2319, %v2362
      %v2384 = vsub.f32 %v2322, %v2364
      %v2385 = vsub.f32 %v2327, %v2366
      %v2386 = vsub.f32 %v2330, %v2368
      %v2387 = vsub.f32 %v2335, %v2370
      %v2388 = vsub.f32 %v2338, %v2372
      %v2389 = vmul.f32 %v2373, 1.442695
      %v2390 = vpow.pop %v2389
      %v2391 = vmul.f32 %v2374, 1.442695
      %v2392 = vpow.pop %v2391
      %v2393 = vmul.f32 %v2375, 1.442695
      %v2394 = vpow.pop %v2393
      %v2395 = vmul.f32 %v2376, 1.442695
      %v2396 = vpow.pop %v2395
      %v2397 = vmul.f32 %v2377, 1.442695
      %v2398 = vpow.pop %v2397
      %v2399 = vmul.f32 %v2378, 1.442695
      %v2400 = vpow.pop %v2399
      %v2401 = vmul.f32 %v2379, 1.442695
      %v2402 = vpow.pop %v2401
      %v2403 = vmul.f32 %v2380, 1.442695
      %v2404 = vpow.pop %v2403
      %v2405 = vmul.f32 %v2381, 1.442695
      %v2406 = vpow.pop %v2405
      %v2407 = vmul.f32 %v2382, 1.442695
      %v2408 = vpow.pop %v2407
      %v2409 = vmul.f32 %v2383, 1.442695
      %v2410 = vpow.pop %v2409
      %v2411 = vmul.f32 %v2384, 1.442695
      %v2412 = vpow.pop %v2411
      %v2413 = vmul.f32 %v2385, 1.442695
      %v2414 = vpow.pop %v2413
      %v2415 = vmul.f32 %v2386, 1.442695
      %v2416 = vpow.pop %v2415
      %v2417 = vmul.f32 %v2387, 1.442695
      %v2418 = vpow.pop %v2417
      %v2419 = vmul.f32 %v2388, 1.442695
      %v2420 = vpow.pop %v2419
      %2421 = vadd.xlane.f32.xlu0 %v2390
      %v2422 = vpop.xlane.xlu0 %2421
      %2423 = vadd.xlane.f32.xlu0 %v2392
      %v2424 = vpop.xlane.xlu0 %2423
      %2425 = vadd.xlane.f32.xlu0 %v2394
      %v2426 = vpop.xlane.xlu0 %2425
      %2427 = vadd.xlane.f32.xlu0 %v2396
      %v2428 = vpop.xlane.xlu0 %2427
      %2429 = vadd.xlane.f32.xlu0 %v2398
      %v2430 = vpop.xlane.xlu0 %2429
      %2431 = vadd.xlane.f32.xlu0 %v2400
      %v2432 = vpop.xlane.xlu0 %2431
      %2433 = vadd.xlane.f32.xlu0 %v2402
      %v2434 = vpop.xlane.xlu0 %2433
      %2435 = vadd.xlane.f32.xlu0 %v2404
      %v2436 = vpop.xlane.xlu0 %2435
      %2437 = vadd.xlane.f32.xlu0 %v2406
      %v2438 = vpop.xlane.xlu0 %2437
      %2439 = vadd.xlane.f32.xlu0 %v2408
      %v2440 = vpop.xlane.xlu0 %2439
      %2441 = vadd.xlane.f32.xlu0 %v2410
      %v2442 = vpop.xlane.xlu0 %2441
      %2443 = vadd.xlane.f32.xlu0 %v2412
      %v2444 = vpop.xlane.xlu0 %2443
      %2445 = vadd.xlane.f32.xlu0 %v2414
      %v2446 = vpop.xlane.xlu0 %2445
      %2447 = vadd.xlane.f32.xlu0 %v2416
      %v2448 = vpop.xlane.xlu0 %2447
      %2449 = vadd.xlane.f32.xlu0 %v2418
      %v2450 = vpop.xlane.xlu0 %2449
      %2451 = vadd.xlane.f32.xlu0 %v2420
      %v2452 = vpop.xlane.xlu0 %2451
      %v2453 = vrcp.pop %v2422
      %v2454 = vrcp.pop %v2424
      %v2455 = vrcp.pop %v2426
      %v2456 = vrcp.pop %v2428
      %v2457 = vrcp.pop %v2430
      %v2458 = vrcp.pop %v2432
      %v2459 = vrcp.pop %v2434
      %v2460 = vrcp.pop %v2436
      %v2461 = vrcp.pop %v2438
      %v2462 = vrcp.pop %v2440
      %v2463 = vrcp.pop %v2442
      %v2464 = vrcp.pop %v2444
      %v2465 = vrcp.pop %v2446
      %v2466 = vrcp.pop %v2448
      %v2467 = vrcp.pop %v2450
      %v2468 = vrcp.pop %v2452
      %v2469 = vmul.f32 %v2390, %v2453
      %v2470 = vmul.f32 %v2392, %v2454
      %v2471 = vmul.f32 %v2394, %v2455
      %v2472 = vmul.f32 %v2396, %v2456
      %v2473 = vmul.f32 %v2398, %v2457
      %v2474 = vmul.f32 %v2400, %v2458
      %v2475 = vmul.f32 %v2402, %v2459
      %v2476 = vmul.f32 %v2404, %v2460
      %v2477 = vmul.f32 %v2406, %v2461
      %v2478 = vmul.f32 %v2408, %v2462
      %v2479 = vmul.f32 %v2410, %v2463
      %v2480 = vmul.f32 %v2412, %v2464
      %v2481 = vmul.f32 %v2414, %v2465
      %v2482 = vmul.f32 %v2416, %v2466
      %v2483 = vmul.f32 %v2418, %v2467
      %v2484 = vmul.f32 %v2420, %v2468
      %v2485 = vpack.c.bf16 %v2470, %v2469
      %v2486 = vpack.c.bf16 %v2472, %v2471
      %v2487 = vpack.c.bf16 %v2474, %v2473
      %v2488 = vpack.c.bf16 %v2476, %v2475
      %v2489 = vpack.c.bf16 %v2478, %v2477
      %v2490 = vpack.c.bf16 %v2480, %v2479
      %v2491 = vpack.c.bf16 %v2482, %v2481
      %v2492 = vpack.c.bf16 %v2484, %v2483
      %v2493 = vld [vmem:[%s1938] sm:$0xff]
      %v2494 = vld [vmem:[%s1938 + $0x8] sm:$0xff]
      %v2495 = vld [vmem:[%s1938 + $0x10] sm:$0xff]
      %v2496 = vld [vmem:[%s1938 + $0x18] sm:$0xff]
      %v2497 = vld [vmem:[%s1938 + $0x20] sm:$0xff]
      %v2498 = vld [vmem:[%s1938 + $0x28] sm:$0xff]
      %v2499 = vld [vmem:[%s1938 + $0x30] sm:$0xff]
      %v2500 = vld [vmem:[%s1938 + $0x38] sm:$0xff]
      %2501 = vmatprep.subr.bf16.mxu0 0
      %2502 = vmatpush1.bf16.msra.mxu0 %v2493
      %2503 = vmatprep.subr.bf16.mxu0 0
      %2504 = vmatpush1.bf16.msra.mxu0 %v2494
      %2505 = vmatprep.subr.bf16.mxu0 0
      %2506 = vmatpush1.bf16.msra.mxu0 %v2495
      %2507 = vmatprep.subr.bf16.mxu0 0
      %2508 = vmatpush1.bf16.msra.mxu0 %v2496
      %2509 = vmatprep.subr.bf16.mxu0 0
      %2510 = vmatpush1.bf16.msra.mxu0 %v2497
      %2511 = vmatprep.subr.bf16.mxu0 0
      %2512 = vmatpush1.bf16.msra.mxu0 %v2498
      %2513 = vmatprep.subr.bf16.mxu0 0
      %2514 = vmatpush1.bf16.msra.mxu0 %v2499
      %2515 = vmatprep.subr.bf16.mxu0 0
      %2516 = vmatpush1.bf16.msra.mxu0 %v2500
      %2517 = vmatprep.subr.bf16.mxu0 0
      %2518 = vmatpush1.bf16.msra.mxu0 0
      %2519 = vmatprep.subr.bf16.mxu0 0
      %2520 = vmatpush1.bf16.msra.mxu0 0
      %2521 = vmatprep.subr.bf16.mxu0 0
      %2522 = vmatpush1.bf16.msra.mxu0 0
      %2523 = vmatprep.subr.bf16.mxu0 0
      %2524 = vmatpush1.bf16.msra.mxu0 0
      %2525 = vmatprep.subr.bf16.mxu0 0
      %2526 = vmatpush1.bf16.msra.mxu0 0
      %2527 = vmatprep.subr.bf16.mxu0 0
      %2528 = vmatpush1.bf16.msra.mxu0 0
      %2529 = vmatprep.subr.bf16.mxu0 0
      %2530 = vmatpush1.bf16.msra.mxu0 0
      %2531 = vmatprep.subr.bf16.mxu0 0
      %2532 = vmatpush1.bf16.msra.mxu0 0
      %2533 = vmatprep.mubr.bf16.mxu0 0
      %2534 = vmatmul.mubr.bf16.gmra.mrb[0].mxu0 %v2485
      %v2535 = vpop.f32.mrb[0].mxu0
      %v2536 = vadd.f32 0.0, %v2535
      %v2537 = vpop.f32.mrb[0].mxu0
      %v2538 = vpop.f32.mrb[0].mxu0
      %v2539 = vadd.f32 0.0, %v2538
      %v2540 = vpop.f32.mrb[0].mxu0
      %2541 = vmatprep.mubr.bf16.mxu0 0
      %2542 = vmatmul.mubr.bf16.gmra.mrb[0].mxu0 %v2486
      %v2543 = vpop.f32.mrb[0].mxu0
      %v2544 = vadd.f32 0.0, %v2543
      %v2545 = vpop.f32.mrb[0].mxu0
      %v2546 = vpop.f32.mrb[0].mxu0
      %v2547 = vadd.f32 0.0, %v2546
      %v2548 = vpop.f32.mrb[0].mxu0
      %2549 = vmatprep.mubr.bf16.mxu0 0
      %2550 = vmatmul.mubr.bf16.gmra.mrb[0].mxu0 %v2487
      %v2551 = vpop.f32.mrb[0].mxu0
      %v2552 = vadd.f32 0.0, %v2551
      %v2553 = vpop.f32.mrb[0].mxu0
      %v2554 = vpop.f32.mrb[0].mxu0
      %v2555 = vadd.f32 0.0, %v2554
      %v2556 = vpop.f32.mrb[0].mxu0
      %2557 = vmatprep.mubr.bf16.mxu0 0
      %2558 = vmatmul.mubr.bf16.gmra.mrb[0].mxu0 %v2488
      %v2559 = vpop.f32.mrb[0].mxu0
      %v2560 = vadd.f32 0.0, %v2559
      %v2561 = vpop.f32.mrb[0].mxu0
      %v2562 = vpop.f32.mrb[0].mxu0
      %v2563 = vadd.f32 0.0, %v2562
      %v2564 = vpop.f32.mrb[0].mxu0
      %2565 = vmatprep.mubr.bf16.mxu0 0
      %2566 = vmatmul.mubr.bf16.gmra.mrb[0].mxu0 %v2489
      %v2567 = vpop.f32.mrb[0].mxu0
      %v2568 = vadd.f32 0.0, %v2567
      %v2569 = vpop.f32.mrb[0].mxu0
      %v2570 = vpop.f32.mrb[0].mxu0
      %v2571 = vadd.f32 0.0, %v2570
      %v2572 = vpop.f32.mrb[0].mxu0
      %2573 = vmatprep.mubr.bf16.mxu0 0
      %2574 = vmatmul.mubr.bf16.gmra.mrb[0].mxu0 %v2490
      %v2575 = vpop.f32.mrb[0].mxu0
      %v2576 = vadd.f32 0.0, %v2575
      %v2577 = vpop.f32.mrb[0].mxu0
      %v2578 = vpop.f32.mrb[0].mxu0
      %v2579 = vadd.f32 0.0, %v2578
      %v2580 = vpop.f32.mrb[0].mxu0
      %2581 = vmatprep.mubr.bf16.mxu0 0
      %2582 = vmatmul.mubr.bf16.gmra.mrb[0].mxu0 %v2491
      %v2583 = vpop.f32.mrb[0].mxu0
      %v2584 = vadd.f32 0.0, %v2583
      %v2585 = vpop.f32.mrb[0].mxu0
      %v2586 = vpop.f32.mrb[0].mxu0
      %v2587 = vadd.f32 0.0, %v2586
      %v2588 = vpop.f32.mrb[0].mxu0
      %2589 = vmatprep.mubr.bf16.mxu0 0
      %2590 = vmatmul.mubr.bf16.gmra.mrb[0].mxu0 %v2492
      %v2591 = vpop.f32.mrb[0].mxu0
      %v2592 = vadd.f32 0.0, %v2591
      %v2593 = vpop.f32.mrb[0].mxu0
      %v2594 = vpop.f32.mrb[0].mxu0
      %v2595 = vadd.f32 0.0, %v2594
      %v2596 = vpop.f32.mrb[0].mxu0
      %2597 = vdwg.mxu0
      %2598 = vmatprep.subr.bf16.mxu0 0
      %2599 = vmatpush1.bf16.msra.mxu0 %v2228
      %2600 = vmatprep.subr.bf16.mxu0 0
      %2601 = vmatpush1.bf16.msra.mxu0 %v2229
      %2602 = vmatprep.subr.bf16.mxu0 0
      %2603 = vmatpush1.bf16.msra.mxu0 %v2230
      %2604 = vmatprep.subr.bf16.mxu0 0
      %2605 = vmatpush1.bf16.msra.mxu0 %v2231
      %2606 = vmatprep.subr.bf16.mxu0 0
      %2607 = vmatpush1.bf16.msra.mxu0 %v2232
      %2608 = vmatprep.subr.bf16.mxu0 0
      %2609 = vmatpush1.bf16.msra.mxu0 %v2233
      %2610 = vmatprep.subr.bf16.mxu0 0
      %2611 = vmatpush1.bf16.msra.mxu0 %v2234
      %2612 = vmatprep.subr.bf16.mxu0 0
      %2613 = vmatpush1.bf16.msra.mxu0 %v2235
      %2614 = vmatprep.subr.bf16.mxu0 0
      %2615 = vmatpush1.bf16.msra.mxu0 0
      %2616 = vmatprep.subr.bf16.mxu0 0
      %2617 = vmatpush1.bf16.msra.mxu0 0
      %2618 = vmatprep.subr.bf16.mxu0 0
      %2619 = vmatpush1.bf16.msra.mxu0 0
      %2620 = vmatprep.subr.bf16.mxu0 0
      %2621 = vmatpush1.bf16.msra.mxu0 0
      %2622 = vmatprep.subr.bf16.mxu0 0
      %2623 = vmatpush1.bf16.msra.mxu0 0
      %2624 = vmatprep.subr.bf16.mxu0 0
      %2625 = vmatpush1.bf16.msra.mxu0 0
      %2626 = vmatprep.subr.bf16.mxu0 0
      %2627 = vmatpush1.bf16.msra.mxu0 0
      %2628 = vmatprep.subr.bf16.mxu0 0
      %2629 = vmatpush1.bf16.msra.mxu0 0
      %2630 = vmatprep.mubr.bf16.mxu0 0
      %2631 = vmatmul.mubr.bf16.gmra.mrb[0].mxu0 %v2220
      %v2632 = vpop.f32.mrb[0].mxu0
      %v2633 = vadd.f32 %v2536, %v2632
      %v2634 = vpop.f32.mrb[0].mxu0
      %v2635 = vpop.f32.mrb[0].mxu0
      %v2636 = vadd.f32 %v2539, %v2635
      %v2637 = vpop.f32.mrb[0].mxu0
      %2638 = vmatprep.mubr.bf16.mxu0 0
      %2639 = vmatmul.mubr.bf16.gmra.mrb[0].mxu0 %v2221
      %v2640 = vpop.f32.mrb[0].mxu0
      %v2641 = vadd.f32 %v2544, %v2640
      %v2642 = vpop.f32.mrb[0].mxu0
      %v2643 = vpop.f32.mrb[0].mxu0
      %v2644 = vadd.f32 %v2547, %v2643
      %v2645 = vpop.f32.mrb[0].mxu0
      %2646 = vmatprep.mubr.bf16.mxu0 0
      %2647 = vmatmul.mubr.bf16.gmra.mrb[0].mxu0 %v2222
      %v2648 = vpop.f32.mrb[0].mxu0
      %v2649 = vadd.f32 %v2552, %v2648
      %v2650 = vpop.f32.mrb[0].mxu0
      %v2651 = vpop.f32.mrb[0].mxu0
      %v2652 = vadd.f32 %v2555, %v2651
      %v2653 = vpop.f32.mrb[0].mxu0
      %2654 = vmatprep.mubr.bf16.mxu0 0
      %2655 = vmatmul.mubr.bf16.gmra.mrb[0].mxu0 %v2223
      %v2656 = vpop.f32.mrb[0].mxu0
      %v2657 = vadd.f32 %v2560, %v2656
      %v2658 = vpop.f32.mrb[0].mxu0
      %v2659 = vpop.f32.mrb[0].mxu0
      %v2660 = vadd.f32 %v2563, %v2659
      %v2661 = vpop.f32.mrb[0].mxu0
      %2662 = vmatprep.mubr.bf16.mxu0 0
      %2663 = vmatmul.mubr.bf16.gmra.mrb[0].mxu0 %v2224
      %v2664 = vpop.f32.mrb[0].mxu0
      %v2665 = vadd.f32 %v2568, %v2664
      %v2666 = vpop.f32.mrb[0].mxu0
      %v2667 = vpop.f32.mrb[0].mxu0
      %v2668 = vadd.f32 %v2571, %v2667
      %v2669 = vpop.f32.mrb[0].mxu0
      %2670 = vmatprep.mubr.bf16.mxu0 0
      %2671 = vmatmul.mubr.bf16.gmra.mrb[0].mxu0 %v2225
      %v2672 = vpop.f32.mrb[0].mxu0
      %v2673 = vadd.f32 %v2576, %v2672
      %v2674 = vpop.f32.mrb[0].mxu0
      %v2675 = vpop.f32.mrb[0].mxu0
      %v2676 = vadd.f32 %v2579, %v2675
      %v2677 = vpop.f32.mrb[0].mxu0
      %2678 = vmatprep.mubr.bf16.mxu0 0
      %2679 = vmatmul.mubr.bf16.gmra.mrb[0].mxu0 %v2226
      %v2680 = vpop.f32.mrb[0].mxu0
      %v2681 = vadd.f32 %v2584, %v2680
      %v2682 = vpop.f32.mrb[0].mxu0
      %v2683 = vpop.f32.mrb[0].mxu0
      %v2684 = vadd.f32 %v2587, %v2683
      %v2685 = vpop.f32.mrb[0].mxu0
      %2686 = vmatprep.mubr.bf16.mxu0 0
      %2687 = vmatmul.mubr.bf16.gmra.mrb[0].mxu0 %v2227
      %v2688 = vpop.f32.mrb[0].mxu0
      %v2689 = vadd.f32 %v2592, %v2688
      %v2690 = vpop.f32.mrb[0].mxu0
      %v2691 = vpop.f32.mrb[0].mxu0
      %v2692 = vadd.f32 %v2595, %v2691
      %v2693 = vpop.f32.mrb[0].mxu0
      %2694 = vdwg.mxu0
      %v2695 = vpack.c.bf16 %v2636, %v2633
      %v2696 = vpack.c.bf16 %v2644, %v2641
      %v2697 = vpack.c.bf16 %v2652, %v2649
      %v2698 = vpack.c.bf16 %v2660, %v2657
      %v2699 = vpack.c.bf16 %v2668, %v2665
      %v2700 = vpack.c.bf16 %v2676, %v2673
      %v2701 = vpack.c.bf16 %v2684, %v2681
      %v2702 = vpack.c.bf16 %v2692, %v2689
      %v2703 = vld [vmem:[%s1142] sm:$0xf]
      %v2704 = vld [vmem:[%s1142 + $0x4] sm:$0xf]
      %v2705 = vld [vmem:[%s1142 + $0x8] sm:$0xf]
      %v2706 = vld [vmem:[%s1142 + $0xc] sm:$0xf]
      %v2707 = vld [vmem:[%s1142 + $0x10] sm:$0xf]
      %v2708 = vld [vmem:[%s1142 + $0x14] sm:$0xf]
      %v2709 = vld [vmem:[%s1142 + $0x18] sm:$0xf]
      %v2710 = vld [vmem:[%s1142 + $0x1c] sm:$0xf]
      %v2711 = vld [vmem:[%s1142 + $0x20] sm:$0xf]
      %v2712 = vld [vmem:[%s1142 + $0x24] sm:$0xf]
      %v2713 = vld [vmem:[%s1142 + $0x28] sm:$0xf]
      %v2714 = vld [vmem:[%s1142 + $0x2c] sm:$0xf]
      %v2715 = vld [vmem:[%s1142 + $0x30] sm:$0xf]
      %v2716 = vld [vmem:[%s1142 + $0x34] sm:$0xf]
      %v2717 = vld [vmem:[%s1142 + $0x38] sm:$0xf]
      %v2718 = vld [vmem:[%s1142 + $0x3c] sm:$0xf]
      %v2719 = vld [vmem:[%s1149] sm:$0x1]
      %v2721 = vlaneseq
      %v2722 = vshrl.u32 %v2721, 7
      %v2723 = vsub.s32 0, %v2722
      %v2724 = vrot.slane %v2719, %v2723
      %v2742 = vunpack.c.l.b16 %v2703
      %v2743 = vunpack.c.l.b16 %v2704
      %v2744 = vunpack.c.l.b16 %v2705
      %v2745 = vunpack.c.l.b16 %v2706
      %v2746 = vunpack.c.l.b16 %v2707
      %v2747 = vunpack.c.l.b16 %v2708
      %v2748 = vunpack.c.l.b16 %v2709
      %v2749 = vunpack.c.l.b16 %v2710
      %v2750 = vunpack.c.l.b16 %v2711
      %v2751 = vunpack.c.l.b16 %v2712
      %v2752 = vunpack.c.l.b16 %v2713
      %v2753 = vunpack.c.l.b16 %v2714
      %v2754 = vunpack.c.l.b16 %v2715
      %v2755 = vunpack.c.l.b16 %v2716
      %v2756 = vunpack.c.l.b16 %v2717
      %v2757 = vunpack.c.l.b16 %v2718
      %v2758 = vpack.c.b16 %v2743, %v2742
      %v2759 = vpack.c.b16 %v2745, %v2744
      %v2760 = vpack.c.b16 %v2747, %v2746
      %v2761 = vpack.c.b16 %v2749, %v2748
      %v2762 = vpack.c.b16 %v2751, %v2750
      %v2763 = vpack.c.b16 %v2753, %v2752
      %v2764 = vpack.c.b16 %v2755, %v2754
      %v2765 = vpack.c.b16 %v2757, %v2756
      %2774 = vmatprep.subr.bf16.mxu0 0
      %2775 = vmatpush1.bf16.msra.mxu0 %v2758
      %2776 = vmatprep.subr.bf16.mxu0 0
      %2777 = vmatpush1.bf16.msra.mxu0 %v2759
      %2778 = vmatprep.subr.bf16.mxu0 0
      %2779 = vmatpush1.bf16.msra.mxu0 %v2760
      %2780 = vmatprep.subr.bf16.mxu0 0
      %2781 = vmatpush1.bf16.msra.mxu0 %v2761
      %2782 = vmatprep.subr.bf16.mxu0 0
      %2783 = vmatpush1.bf16.msra.mxu0 %v2762
      %2784 = vmatprep.subr.bf16.mxu0 0
      %2785 = vmatpush1.bf16.msra.mxu0 %v2763
      %2786 = vmatprep.subr.bf16.mxu0 0
      %2787 = vmatpush1.bf16.msra.mxu0 %v2764
      %2788 = vmatprep.subr.bf16.mxu0 0
      %2789 = vmatpush1.bf16.msra.mxu0 %v2765
      %2790 = vmatprep.subr.bf16.mxu0 0
      %2791 = vmatpush1.bf16.msra.mxu0 0
      %2792 = vmatprep.subr.bf16.mxu0 0
      %2793 = vmatpush1.bf16.msra.mxu0 0
      %2794 = vmatprep.subr.bf16.mxu0 0
      %2795 = vmatpush1.bf16.msra.mxu0 0
      %2796 = vmatprep.subr.bf16.mxu0 0
      %2797 = vmatpush1.bf16.msra.mxu0 0
      %2798 = vmatprep.subr.bf16.mxu0 0
      %2799 = vmatpush1.bf16.msra.mxu0 0
      %2800 = vmatprep.subr.bf16.mxu0 0
      %2801 = vmatpush1.bf16.msra.mxu0 0
      %2802 = vmatprep.subr.bf16.mxu0 0
      %2803 = vmatpush1.bf16.msra.mxu0 0
      %2804 = vmatprep.subr.bf16.mxu0 0
      %2805 = vmatpush1.bf16.msra.mxu0 0
      %2806 = vmatprep.mubr.bf16.mxu0 0
      %2807 = vmatmul.mubr.bf16.gmra.mrb[0].mxu0 %v2695
      %v2808 = vpop.f32.mrb[0].mxu0
      %v2809 = vadd.f32 %v2724, %v2808
      %v2810 = vpop.f32.mrb[0].mxu0
      %v2811 = vpop.f32.mrb[0].mxu0
      %v2812 = vadd.f32 %v2724, %v2811
      %v2813 = vpop.f32.mrb[0].mxu0
      %2814 = vmatprep.mubr.bf16.mxu0 0
      %2815 = vmatmul.mubr.bf16.gmra.mrb[0].mxu0 %v2696
      %v2816 = vpop.f32.mrb[0].mxu0
      %v2817 = vadd.f32 %v2724, %v2816
      %v2818 = vpop.f32.mrb[0].mxu0
      %v2819 = vpop.f32.mrb[0].mxu0
      %v2820 = vadd.f32 %v2724, %v2819
      %v2821 = vpop.f32.mrb[0].mxu0
      %2822 = vmatprep.mubr.bf16.mxu0 0
      %2823 = vmatmul.mubr.bf16.gmra.mrb[0].mxu0 %v2697
      %v2824 = vpop.f32.mrb[0].mxu0
      %v2825 = vadd.f32 %v2724, %v2824
      %v2826 = vpop.f32.mrb[0].mxu0
      %v2827 = vpop.f32.mrb[0].mxu0
      %v2828 = vadd.f32 %v2724, %v2827
      %v2829 = vpop.f32.mrb[0].mxu0
      %2830 = vmatprep.mubr.bf16.mxu0 0
      %2831 = vmatmul.mubr.bf16.gmra.mrb[0].mxu0 %v2698
      %v2832 = vpop.f32.mrb[0].mxu0
      %v2833 = vadd.f32 %v2724, %v2832
      %v2834 = vpop.f32.mrb[0].mxu0
      %v2835 = vpop.f32.mrb[0].mxu0
      %v2836 = vadd.f32 %v2724, %v2835
      %v2837 = vpop.f32.mrb[0].mxu0
      %2838 = vmatprep.mubr.bf16.mxu0 0
      %2839 = vmatmul.mubr.bf16.gmra.mrb[0].mxu0 %v2699
      %v2840 = vpop.f32.mrb[0].mxu0
      %v2841 = vadd.f32 %v2724, %v2840
      %v2842 = vpop.f32.mrb[0].mxu0
      %v2843 = vpop.f32.mrb[0].mxu0
      %v2844 = vadd.f32 %v2724, %v2843
      %v2845 = vpop.f32.mrb[0].mxu0
      %2846 = vmatprep.mubr.bf16.mxu0 0
      %2847 = vmatmul.mubr.bf16.gmra.mrb[0].mxu0 %v2700
      %v2848 = vpop.f32.mrb[0].mxu0
      %v2849 = vadd.f32 %v2724, %v2848
      %v2850 = vpop.f32.mrb[0].mxu0
      %v2851 = vpop.f32.mrb[0].mxu0
      %v2852 = vadd.f32 %v2724, %v2851
      %v2853 = vpop.f32.mrb[0].mxu0
      %2854 = vmatprep.mubr.bf16.mxu0 0
      %2855 = vmatmul.mubr.bf16.gmra.mrb[0].mxu0 %v2701
      %v2856 = vpop.f32.mrb[0].mxu0
      %v2857 = vadd.f32 %v2724, %v2856
      %v2858 = vpop.f32.mrb[0].mxu0
      %v2859 = vpop.f32.mrb[0].mxu0
      %v2860 = vadd.f32 %v2724, %v2859
      %v2861 = vpop.f32.mrb[0].mxu0
      %2862 = vmatprep.mubr.bf16.mxu0 0
      %2863 = vmatmul.mubr.bf16.gmra.mrb[0].mxu0 %v2702
      %v2864 = vpop.f32.mrb[0].mxu0
      %v2865 = vadd.f32 %v2724, %v2864
      %v2866 = vpop.f32.mrb[0].mxu0
      %v2867 = vpop.f32.mrb[0].mxu0
      %v2868 = vadd.f32 %v2724, %v2867
      %v2869 = vpop.f32.mrb[0].mxu0
      %2870 = vdwg.mxu0
      %v2871 = vadd.f32 %v1264, %v2809
      %v2872 = vadd.f32 %v1265, %v2812
      %v2873 = vadd.f32 %v1266, %v2817
      %v2874 = vadd.f32 %v1267, %v2820
      %v2875 = vadd.f32 %v1268, %v2825
      %v2876 = vadd.f32 %v1269, %v2828
      %v2877 = vadd.f32 %v1270, %v2833
      %v2878 = vadd.f32 %v1271, %v2836
      %v2879 = vadd.f32 %v1272, %v2841
      %v2880 = vadd.f32 %v1273, %v2844
      %v2881 = vadd.f32 %v1274, %v2849
      %v2882 = vadd.f32 %v1275, %v2852
      %v2883 = vadd.f32 %v1276, %v2857
      %v2884 = vadd.f32 %v1277, %v2860
      %v2885 = vadd.f32 %v1278, %v2865
      %v2886 = vadd.f32 %v1279, %v2868
      %v2887 = vld [vmem:[%s1156] sm:$0x1]
      %v2888 = vld [vmem:[%s1163] sm:$0x1]
      %2889 = vadd.xlane.f32.xlu0 %v2871
      %v2890 = vpop.xlane.xlu0 %2889
      %2891 = vadd.xlane.f32.xlu0 %v2872
      %v2892 = vpop.xlane.xlu0 %2891
      %2893 = vadd.xlane.f32.xlu0 %v2873
      %v2894 = vpop.xlane.xlu0 %2893
      %2895 = vadd.xlane.f32.xlu0 %v2874
      %v2896 = vpop.xlane.xlu0 %2895
      %2897 = vadd.xlane.f32.xlu0 %v2875
      %v2898 = vpop.xlane.xlu0 %2897
      %2899 = vadd.xlane.f32.xlu0 %v2876
      %v2900 = vpop.xlane.xlu0 %2899
      %2901 = vadd.xlane.f32.xlu0 %v2877
      %v2902 = vpop.xlane.xlu0 %2901
      %2903 = vadd.xlane.f32.xlu0 %v2878
      %v2904 = vpop.xlane.xlu0 %2903
      %2905 = vadd.xlane.f32.xlu0 %v2879
      %v2906 = vpop.xlane.xlu0 %2905
      %2907 = vadd.xlane.f32.xlu0 %v2880
      %v2908 = vpop.xlane.xlu0 %2907
      %2909 = vadd.xlane.f32.xlu0 %v2881
      %v2910 = vpop.xlane.xlu0 %2909
      %2911 = vadd.xlane.f32.xlu0 %v2882
      %v2912 = vpop.xlane.xlu0 %2911
      %2913 = vadd.xlane.f32.xlu0 %v2883
      %v2914 = vpop.xlane.xlu0 %2913
      %2915 = vadd.xlane.f32.xlu0 %v2884
      %v2916 = vpop.xlane.xlu0 %2915
      %2917 = vadd.xlane.f32.xlu0 %v2885
      %v2918 = vpop.xlane.xlu0 %2917
      %2919 = vadd.xlane.f32.xlu0 %v2886
      %v2920 = vpop.xlane.xlu0 %2919
      %v2921 = vmul.f32 %v2890, 0.03125
      %v2922 = vmul.f32 %v2892, 0.03125
      %v2923 = vmul.f32 %v2894, 0.03125
      %v2924 = vmul.f32 %v2896, 0.03125
      %v2925 = vmul.f32 %v2898, 0.03125
      %v2926 = vmul.f32 %v2900, 0.03125
      %v2927 = vmul.f32 %v2902, 0.03125
      %v2928 = vmul.f32 %v2904, 0.03125
      %v2929 = vmul.f32 %v2906, 0.03125
      %v2930 = vmul.f32 %v2908, 0.03125
      %v2931 = vmul.f32 %v2910, 0.03125
      %v2932 = vmul.f32 %v2912, 0.03125
      %v2933 = vmul.f32 %v2914, 0.03125
      %v2934 = vmul.f32 %v2916, 0.03125
      %v2935 = vmul.f32 %v2918, 0.03125
      %v2936 = vmul.f32 %v2920, 0.03125
      %v2937 = vsub.f32 %v2871, %v2921
      %v2938 = vsub.f32 %v2872, %v2922
      %v2939 = vsub.f32 %v2873, %v2923
      %v2940 = vsub.f32 %v2874, %v2924
      %v2941 = vsub.f32 %v2875, %v2925
      %v2942 = vsub.f32 %v2876, %v2926
      %v2943 = vsub.f32 %v2877, %v2927
      %v2944 = vsub.f32 %v2878, %v2928
      %v2945 = vsub.f32 %v2879, %v2929
      %v2946 = vsub.f32 %v2880, %v2930
      %v2947 = vsub.f32 %v2881, %v2931
      %v2948 = vsub.f32 %v2882, %v2932
      %v2949 = vsub.f32 %v2883, %v2933
      %v2950 = vsub.f32 %v2884, %v2934
      %v2951 = vsub.f32 %v2885, %v2935
      %v2952 = vsub.f32 %v2886, %v2936
      %v2953 = vmul.f32 %v2937, %v1263
      %v2954 = vmul.f32 %v2938, %v1263
      %v2955 = vmul.f32 %v2939, %v1263
      %v2956 = vmul.f32 %v2940, %v1263
      %v2957 = vmul.f32 %v2941, %v1263
      %v2958 = vmul.f32 %v2942, %v1263
      %v2959 = vmul.f32 %v2943, %v1263
      %v2960 = vmul.f32 %v2944, %v1263
      %v2961 = vmul.f32 %v2945, %v1263
      %v2962 = vmul.f32 %v2946, %v1263
      %v2963 = vmul.f32 %v2947, %v1263
      %v2964 = vmul.f32 %v2948, %v1263
      %v2965 = vmul.f32 %v2949, %v1263
      %v2966 = vmul.f32 %v2950, %v1263
      %v2967 = vmul.f32 %v2951, %v1263
      %v2968 = vmul.f32 %v2952, %v1263
      %v2969 = vmul.f32 %v2953, %v2953
      %v2970 = vmul.f32 %v2954, %v2954
      %v2971 = vmul.f32 %v2955, %v2955
      %v2972 = vmul.f32 %v2956, %v2956
      %v2973 = vmul.f32 %v2957, %v2957
      %v2974 = vmul.f32 %v2958, %v2958
      %v2975 = vmul.f32 %v2959, %v2959
      %v2976 = vmul.f32 %v2960, %v2960
      %v2977 = vmul.f32 %v2961, %v2961
      %v2978 = vmul.f32 %v2962, %v2962
      %v2979 = vmul.f32 %v2963, %v2963
      %v2980 = vmul.f32 %v2964, %v2964
      %v2981 = vmul.f32 %v2965, %v2965
      %v2982 = vmul.f32 %v2966, %v2966
      %v2983 = vmul.f32 %v2967, %v2967
      %v2984 = vmul.f32 %v2968, %v2968
      %2985 = vadd.xlane.f32.xlu0 %v2969
      %v2986 = vpop.xlane.xlu0 %2985
      %2987 = vadd.xlane.f32.xlu0 %v2970
      %v2988 = vpop.xlane.xlu0 %2987
      %2989 = vadd.xlane.f32.xlu0 %v2971
      %v2990 = vpop.xlane.xlu0 %2989
      %2991 = vadd.xlane.f32.xlu0 %v2972
      %v2992 = vpop.xlane.xlu0 %2991
      %2993 = vadd.xlane.f32.xlu0 %v2973
      %v2994 = vpop.xlane.xlu0 %2993
      %2995 = vadd.xlane.f32.xlu0 %v2974
      %v2996 = vpop.xlane.xlu0 %2995
      %2997 = vadd.xlane.f32.xlu0 %v2975
      %v2998 = vpop.xlane.xlu0 %2997
      %2999 = vadd.xlane.f32.xlu0 %v2976
      %v3000 = vpop.xlane.xlu0 %2999
      %3001 = vadd.xlane.f32.xlu0 %v2977
      %v3002 = vpop.xlane.xlu0 %3001
      %3003 = vadd.xlane.f32.xlu0 %v2978
      %v3004 = vpop.xlane.xlu0 %3003
      %3005 = vadd.xlane.f32.xlu0 %v2979
      %v3006 = vpop.xlane.xlu0 %3005
      %3007 = vadd.xlane.f32.xlu0 %v2980
      %v3008 = vpop.xlane.xlu0 %3007
      %3009 = vadd.xlane.f32.xlu0 %v2981
      %v3010 = vpop.xlane.xlu0 %3009
      %3011 = vadd.xlane.f32.xlu0 %v2982
      %v3012 = vpop.xlane.xlu0 %3011
      %3013 = vadd.xlane.f32.xlu0 %v2983
      %v3014 = vpop.xlane.xlu0 %3013
      %3015 = vadd.xlane.f32.xlu0 %v2984
      %v3016 = vpop.xlane.xlu0 %3015
      %v3017 = vmul.f32 %v2986, 0.03125
      %v3018 = vmul.f32 %v2988, 0.03125
      %v3019 = vmul.f32 %v2990, 0.03125
      %v3020 = vmul.f32 %v2992, 0.03125
      %v3021 = vmul.f32 %v2994, 0.03125
      %v3022 = vmul.f32 %v2996, 0.03125
      %v3023 = vmul.f32 %v2998, 0.03125
      %v3024 = vmul.f32 %v3000, 0.03125
      %v3025 = vmul.f32 %v3002, 0.03125
      %v3026 = vmul.f32 %v3004, 0.03125
      %v3027 = vmul.f32 %v3006, 0.03125
      %v3028 = vmul.f32 %v3008, 0.03125
      %v3029 = vmul.f32 %v3010, 0.03125
      %v3030 = vmul.f32 %v3012, 0.03125
      %v3031 = vmul.f32 %v3014, 0.03125
      %v3032 = vmul.f32 %v3016, 0.03125
      %v3033 = vadd.f32 %v3017, 1e-12
      %v3034 = vadd.f32 %v3018, 1e-12
      %v3035 = vadd.f32 %v3019, 1e-12
      %v3036 = vadd.f32 %v3020, 1e-12
      %v3037 = vadd.f32 %v3021, 1e-12
      %v3038 = vadd.f32 %v3022, 1e-12
      %v3039 = vadd.f32 %v3023, 1e-12
      %v3040 = vadd.f32 %v3024, 1e-12
      %v3041 = vadd.f32 %v3025, 1e-12
      %v3042 = vadd.f32 %v3026, 1e-12
      %v3043 = vadd.f32 %v3027, 1e-12
      %v3044 = vadd.f32 %v3028, 1e-12
      %v3045 = vadd.f32 %v3029, 1e-12
      %v3046 = vadd.f32 %v3030, 1e-12
      %v3047 = vadd.f32 %v3031, 1e-12
      %v3048 = vadd.f32 %v3032, 1e-12
      %v3049 = vrsqrt.pop %v3033
      %v3050 = vrsqrt.pop %v3034
      %v3051 = vrsqrt.pop %v3035
      %v3052 = vrsqrt.pop %v3036
      %v3053 = vrsqrt.pop %v3037
      %v3054 = vrsqrt.pop %v3038
      %v3055 = vrsqrt.pop %v3039
      %v3056 = vrsqrt.pop %v3040
      %v3057 = vrsqrt.pop %v3041
      %v3058 = vrsqrt.pop %v3042
      %v3059 = vrsqrt.pop %v3043
      %v3060 = vrsqrt.pop %v3044
      %v3061 = vrsqrt.pop %v3045
      %v3062 = vrsqrt.pop %v3046
      %v3063 = vrsqrt.pop %v3047
      %v3064 = vrsqrt.pop %v3048
      %v3065 = vmul.f32 %v2953, %v3049
      %v3066 = vmul.f32 %v2954, %v3050
      %v3067 = vmul.f32 %v2955, %v3051
      %v3068 = vmul.f32 %v2956, %v3052
      %v3069 = vmul.f32 %v2957, %v3053
      %v3070 = vmul.f32 %v2958, %v3054
      %v3071 = vmul.f32 %v2959, %v3055
      %v3072 = vmul.f32 %v2960, %v3056
      %v3073 = vmul.f32 %v2961, %v3057
      %v3074 = vmul.f32 %v2962, %v3058
      %v3075 = vmul.f32 %v2963, %v3059
      %v3076 = vmul.f32 %v2964, %v3060
      %v3077 = vmul.f32 %v2965, %v3061
      %v3078 = vmul.f32 %v2966, %v3062
      %v3079 = vmul.f32 %v2967, %v3063
      %v3080 = vmul.f32 %v2968, %v3064
      %v3082 = vlaneseq
      %v3083 = vshrl.u32 %v3082, 7
      %v3084 = vsub.s32 0, %v3083
      %v3085 = vrot.slane %v2887, %v3084
      %v3087 = vmul.f32 %v3065, %v3085
      %v3088 = vmul.f32 %v3066, %v3085
      %v3089 = vmul.f32 %v3067, %v3085
      %v3090 = vmul.f32 %v3068, %v3085
      %v3091 = vmul.f32 %v3069, %v3085
      %v3092 = vmul.f32 %v3070, %v3085
      %v3093 = vmul.f32 %v3071, %v3085
      %v3094 = vmul.f32 %v3072, %v3085
      %v3095 = vmul.f32 %v3073, %v3085
      %v3096 = vmul.f32 %v3074, %v3085
      %v3097 = vmul.f32 %v3075, %v3085
      %v3098 = vmul.f32 %v3076, %v3085
      %v3099 = vmul.f32 %v3077, %v3085
      %v3100 = vmul.f32 %v3078, %v3085
      %v3101 = vmul.f32 %v3079, %v3085
      %v3102 = vmul.f32 %v3080, %v3085
      %v3104 = vlaneseq
      %v3105 = vshrl.u32 %v3104, 7
      %v3106 = vsub.s32 0, %v3105
      %v3107 = vrot.slane %v2888, %v3106
      %v3109 = vadd.f32 %v3087, %v3107
      %v3110 = vadd.f32 %v3088, %v3107
      %v3111 = vadd.f32 %v3089, %v3107
      %v3112 = vadd.f32 %v3090, %v3107
      %v3113 = vadd.f32 %v3091, %v3107
      %v3114 = vadd.f32 %v3092, %v3107
      %v3115 = vadd.f32 %v3093, %v3107
      %v3116 = vadd.f32 %v3094, %v3107
      %v3117 = vadd.f32 %v3095, %v3107
      %v3118 = vadd.f32 %v3096, %v3107
      %v3119 = vadd.f32 %v3097, %v3107
      %v3120 = vadd.f32 %v3098, %v3107
      %v3121 = vadd.f32 %v3099, %v3107
      %v3122 = vadd.f32 %v3100, %v3107
      %v3123 = vadd.f32 %v3101, %v3107
      %v3124 = vadd.f32 %v3102, %v3107
      %v3125 = vpack.c.bf16 %v3110, %v3109
      %v3126 = vpack.c.bf16 %v3112, %v3111
      %v3127 = vpack.c.bf16 %v3114, %v3113
      %v3128 = vpack.c.bf16 %v3116, %v3115
      %v3129 = vpack.c.bf16 %v3118, %v3117
      %v3130 = vpack.c.bf16 %v3120, %v3119
      %v3131 = vpack.c.bf16 %v3122, %v3121
      %v3132 = vpack.c.bf16 %v3124, %v3123
      %v3133 = vld [vmem:[%s1172] sm:$0xf]
      %v3134 = vld [vmem:[%s1172 + $0x4] sm:$0xf]
      %v3135 = vld [vmem:[%s1172 + $0x8] sm:$0xf]
      %v3136 = vld [vmem:[%s1172 + $0xc] sm:$0xf]
      %v3137 = vld [vmem:[%s1172 + $0x10] sm:$0xf]
      %v3138 = vld [vmem:[%s1172 + $0x14] sm:$0xf]
      %v3139 = vld [vmem:[%s1172 + $0x18] sm:$0xf]
      %v3140 = vld [vmem:[%s1172 + $0x1c] sm:$0xf]
      %v3141 = vld [vmem:[%s1172 + $0x20] sm:$0xf]
      %v3142 = vld [vmem:[%s1172 + $0x24] sm:$0xf]
      %v3143 = vld [vmem:[%s1172 + $0x28] sm:$0xf]
      %v3144 = vld [vmem:[%s1172 + $0x2c] sm:$0xf]
      %v3145 = vld [vmem:[%s1172 + $0x30] sm:$0xf]
      %v3146 = vld [vmem:[%s1172 + $0x34] sm:$0xf]
      %v3147 = vld [vmem:[%s1172 + $0x38] sm:$0xf]
      %v3148 = vld [vmem:[%s1172 + $0x3c] sm:$0xf]
      %v3149 = vld [vmem:[%s1179] sm:$0x1]
      %v3151 = vlaneseq
      %v3152 = vshrl.u32 %v3151, 7
      %v3153 = vsub.s32 0, %v3152
      %v3154 = vrot.slane %v3149, %v3153
      %v3172 = vunpack.c.l.b16 %v3133
      %v3173 = vunpack.c.l.b16 %v3134
      %v3174 = vunpack.c.l.b16 %v3135
      %v3175 = vunpack.c.l.b16 %v3136
      %v3176 = vunpack.c.l.b16 %v3137
      %v3177 = vunpack.c.l.b16 %v3138
      %v3178 = vunpack.c.l.b16 %v3139
      %v3179 = vunpack.c.l.b16 %v3140
      %v3180 = vunpack.c.l.b16 %v3141
      %v3181 = vunpack.c.l.b16 %v3142
      %v3182 = vunpack.c.l.b16 %v3143
      %v3183 = vunpack.c.l.b16 %v3144
      %v3184 = vunpack.c.l.b16 %v3145
      %v3185 = vunpack.c.l.b16 %v3146
      %v3186 = vunpack.c.l.b16 %v3147
      %v3187 = vunpack.c.l.b16 %v3148
      %v3188 = vpack.c.b16 %v3173, %v3172
      %v3189 = vpack.c.b16 %v3175, %v3174
      %v3190 = vpack.c.b16 %v3177, %v3176
      %v3191 = vpack.c.b16 %v3179, %v3178
      %v3192 = vpack.c.b16 %v3181, %v3180
      %v3193 = vpack.c.b16 %v3183, %v3182
      %v3194 = vpack.c.b16 %v3185, %v3184
      %v3195 = vpack.c.b16 %v3187, %v3186
      %3204 = vmatprep.subr.bf16.mxu0 0
      %3205 = vmatpush1.bf16.msra.mxu0 %v3188
      %3206 = vmatprep.subr.bf16.mxu0 0
      %3207 = vmatpush1.bf16.msra.mxu0 %v3189
      %3208 = vmatprep.subr.bf16.mxu0 0
      %3209 = vmatpush1.bf16.msra.mxu0 %v3190
      %3210 = vmatprep.subr.bf16.mxu0 0
      %3211 = vmatpush1.bf16.msra.mxu0 %v3191
      %3212 = vmatprep.subr.bf16.mxu0 0
      %3213 = vmatpush1.bf16.msra.mxu0 %v3192
      %3214 = vmatprep.subr.bf16.mxu0 0
      %3215 = vmatpush1.bf16.msra.mxu0 %v3193
      %3216 = vmatprep.subr.bf16.mxu0 0
      %3217 = vmatpush1.bf16.msra.mxu0 %v3194
      %3218 = vmatprep.subr.bf16.mxu0 0
      %3219 = vmatpush1.bf16.msra.mxu0 %v3195
      %3220 = vmatprep.subr.bf16.mxu0 0
      %3221 = vmatpush1.bf16.msra.mxu0 0
      %3222 = vmatprep.subr.bf16.mxu0 0
      %3223 = vmatpush1.bf16.msra.mxu0 0
      %3224 = vmatprep.subr.bf16.mxu0 0
      %3225 = vmatpush1.bf16.msra.mxu0 0
      %3226 = vmatprep.subr.bf16.mxu0 0
      %3227 = vmatpush1.bf16.msra.mxu0 0
      %3228 = vmatprep.subr.bf16.mxu0 0
      %3229 = vmatpush1.bf16.msra.mxu0 0
      %3230 = vmatprep.subr.bf16.mxu0 0
      %3231 = vmatpush1.bf16.msra.mxu0 0
      %3232 = vmatprep.subr.bf16.mxu0 0
      %3233 = vmatpush1.bf16.msra.mxu0 0
      %3234 = vmatprep.subr.bf16.mxu0 0
      %3235 = vmatpush1.bf16.msra.mxu0 0
      %3236 = vmatprep.mubr.bf16.mxu0 0
      %3237 = vmatmul.mubr.bf16.gmra.mrb[0].mxu0 %v3125
      %v3238 = vpop.f32.mrb[0].mxu0
      %v3239 = vadd.f32 %v3154, %v3238
      %v3240 = vpop.f32.mrb[0].mxu0
      %v3241 = vpop.f32.mrb[0].mxu0
      %v3242 = vadd.f32 %v3154, %v3241
      %v3243 = vpop.f32.mrb[0].mxu0
      %3244 = vmatprep.mubr.bf16.mxu0 0
      %3245 = vmatmul.mubr.bf16.gmra.mrb[0].mxu0 %v3126
      %v3246 = vpop.f32.mrb[0].mxu0
      %v3247 = vadd.f32 %v3154, %v3246
      %v3248 = vpop.f32.mrb[0].mxu0
      %v3249 = vpop.f32.mrb[0].mxu0
      %v3250 = vadd.f32 %v3154, %v3249
      %v3251 = vpop.f32.mrb[0].mxu0
      %3252 = vmatprep.mubr.bf16.mxu0 0
      %3253 = vmatmul.mubr.bf16.gmra.mrb[0].mxu0 %v3127
      %v3254 = vpop.f32.mrb[0].mxu0
      %v3255 = vadd.f32 %v3154, %v3254
      %v3256 = vpop.f32.mrb[0].mxu0
      %v3257 = vpop.f32.mrb[0].mxu0
      %v3258 = vadd.f32 %v3154, %v3257
      %v3259 = vpop.f32.mrb[0].mxu0
      %3260 = vmatprep.mubr.bf16.mxu0 0
      %3261 = vmatmul.mubr.bf16.gmra.mrb[0].mxu0 %v3128
      %v3262 = vpop.f32.mrb[0].mxu0
      %v3263 = vadd.f32 %v3154, %v3262
      %v3264 = vpop.f32.mrb[0].mxu0
      %v3265 = vpop.f32.mrb[0].mxu0
      %v3266 = vadd.f32 %v3154, %v3265
      %v3267 = vpop.f32.mrb[0].mxu0
      %3268 = vmatprep.mubr.bf16.mxu0 0
      %3269 = vmatmul.mubr.bf16.gmra.mrb[0].mxu0 %v3129
      %v3270 = vpop.f32.mrb[0].mxu0
      %v3271 = vadd.f32 %v3154, %v3270
      %v3272 = vpop.f32.mrb[0].mxu0
      %v3273 = vpop.f32.mrb[0].mxu0
      %v3274 = vadd.f32 %v3154, %v3273
      %v3275 = vpop.f32.mrb[0].mxu0
      %3276 = vmatprep.mubr.bf16.mxu0 0
      %3277 = vmatmul.mubr.bf16.gmra.mrb[0].mxu0 %v3130
      %v3278 = vpop.f32.mrb[0].mxu0
      %v3279 = vadd.f32 %v3154, %v3278
      %v3280 = vpop.f32.mrb[0].mxu0
      %v3281 = vpop.f32.mrb[0].mxu0
      %v3282 = vadd.f32 %v3154, %v3281
      %v3283 = vpop.f32.mrb[0].mxu0
      %3284 = vmatprep.mubr.bf16.mxu0 0
      %3285 = vmatmul.mubr.bf16.gmra.mrb[0].mxu0 %v3131
      %v3286 = vpop.f32.mrb[0].mxu0
      %v3287 = vadd.f32 %v3154, %v3286
      %v3288 = vpop.f32.mrb[0].mxu0
      %v3289 = vpop.f32.mrb[0].mxu0
      %v3290 = vadd.f32 %v3154, %v3289
      %v3291 = vpop.f32.mrb[0].mxu0
      %3292 = vmatprep.mubr.bf16.mxu0 0
      %3293 = vmatmul.mubr.bf16.gmra.mrb[0].mxu0 %v3132
      %v3294 = vpop.f32.mrb[0].mxu0
      %v3295 = vadd.f32 %v3154, %v3294
      %v3296 = vpop.f32.mrb[0].mxu0
      %v3297 = vpop.f32.mrb[0].mxu0
      %v3298 = vadd.f32 %v3154, %v3297
      %v3299 = vpop.f32.mrb[0].mxu0
      %3300 = vdwg.mxu0
      %v3301 = vmul.f32 %v3239, %v3239
      %v3302 = vmul.f32 %v3242, %v3242
      %v3303 = vmul.f32 %v3247, %v3247
      %v3304 = vmul.f32 %v3250, %v3250
      %v3305 = vmul.f32 %v3255, %v3255
      %v3306 = vmul.f32 %v3258, %v3258
      %v3307 = vmul.f32 %v3263, %v3263
      %v3308 = vmul.f32 %v3266, %v3266
      %v3309 = vmul.f32 %v3271, %v3271
      %v3310 = vmul.f32 %v3274, %v3274
      %v3311 = vmul.f32 %v3279, %v3279
      %v3312 = vmul.f32 %v3282, %v3282
      %v3313 = vmul.f32 %v3287, %v3287
      %v3314 = vmul.f32 %v3290, %v3290
      %v3315 = vmul.f32 %v3295, %v3295
      %v3316 = vmul.f32 %v3298, %v3298
      %v3317 = vmul.f32 %v3239, %v3301
      %v3318 = vmul.f32 %v3242, %v3302
      %v3319 = vmul.f32 %v3247, %v3303
      %v3320 = vmul.f32 %v3250, %v3304
      %v3321 = vmul.f32 %v3255, %v3305
      %v3322 = vmul.f32 %v3258, %v3306
      %v3323 = vmul.f32 %v3263, %v3307
      %v3324 = vmul.f32 %v3266, %v3308
      %v3325 = vmul.f32 %v3271, %v3309
      %v3326 = vmul.f32 %v3274, %v3310
      %v3327 = vmul.f32 %v3279, %v3311
      %v3328 = vmul.f32 %v3282, %v3312
      %v3329 = vmul.f32 %v3287, %v3313
      %v3330 = vmul.f32 %v3290, %v3314
      %v3331 = vmul.f32 %v3295, %v3315
      %v3332 = vmul.f32 %v3298, %v3316
      %v3333 = vmul.f32 %v3317, 0.044715
      %v3334 = vmul.f32 %v3318, 0.044715
      %v3335 = vmul.f32 %v3319, 0.044715
      %v3336 = vmul.f32 %v3320, 0.044715
      %v3337 = vmul.f32 %v3321, 0.044715
      %v3338 = vmul.f32 %v3322, 0.044715
      %v3339 = vmul.f32 %v3323, 0.044715
      %v3340 = vmul.f32 %v3324, 0.044715
      %v3341 = vmul.f32 %v3325, 0.044715
      %v3342 = vmul.f32 %v3326, 0.044715
      %v3343 = vmul.f32 %v3327, 0.044715
      %v3344 = vmul.f32 %v3328, 0.044715
      %v3345 = vmul.f32 %v3329, 0.044715
      %v3346 = vmul.f32 %v3330, 0.044715
      %v3347 = vmul.f32 %v3331, 0.044715
      %v3348 = vmul.f32 %v3332, 0.044715
      %v3349 = vadd.f32 %v3239, %v3333
      %v3350 = vadd.f32 %v3242, %v3334
      %v3351 = vadd.f32 %v3247, %v3335
      %v3352 = vadd.f32 %v3250, %v3336
      %v3353 = vadd.f32 %v3255, %v3337
      %v3354 = vadd.f32 %v3258, %v3338
      %v3355 = vadd.f32 %v3263, %v3339
      %v3356 = vadd.f32 %v3266, %v3340
      %v3357 = vadd.f32 %v3271, %v3341
      %v3358 = vadd.f32 %v3274, %v3342
      %v3359 = vadd.f32 %v3279, %v3343
      %v3360 = vadd.f32 %v3282, %v3344
      %v3361 = vadd.f32 %v3287, %v3345
      %v3362 = vadd.f32 %v3290, %v3346
      %v3363 = vadd.f32 %v3295, %v3347
      %v3364 = vadd.f32 %v3298, %v3348
      %v3365 = vmul.f32 %v3349, 0.7978846
      %v3366 = vmul.f32 %v3350, 0.7978846
      %v3367 = vmul.f32 %v3351, 0.7978846
      %v3368 = vmul.f32 %v3352, 0.7978846
      %v3369 = vmul.f32 %v3353, 0.7978846
      %v3370 = vmul.f32 %v3354, 0.7978846
      %v3371 = vmul.f32 %v3355, 0.7978846
      %v3372 = vmul.f32 %v3356, 0.7978846
      %v3373 = vmul.f32 %v3357, 0.7978846
      %v3374 = vmul.f32 %v3358, 0.7978846
      %v3375 = vmul.f32 %v3359, 0.7978846
      %v3376 = vmul.f32 %v3360, 0.7978846
      %v3377 = vmul.f32 %v3361, 0.7978846
      %v3378 = vmul.f32 %v3362, 0.7978846
      %v3379 = vmul.f32 %v3363, 0.7978846
      %v3380 = vmul.f32 %v3364, 0.7978846
      %v3381 = vtanh.pop %v3365
      %v3382 = vtanh.pop %v3366
      %v3383 = vtanh.pop %v3367
      %v3384 = vtanh.pop %v3368
      %v3385 = vtanh.pop %v3369
      %v3386 = vtanh.pop %v3370
      %v3387 = vtanh.pop %v3371
      %v3388 = vtanh.pop %v3372
      %v3389 = vtanh.pop %v3373
      %v3390 = vtanh.pop %v3374
      %v3391 = vtanh.pop %v3375
      %v3392 = vtanh.pop %v3376
      %v3393 = vtanh.pop %v3377
      %v3394 = vtanh.pop %v3378
      %v3395 = vtanh.pop %v3379
      %v3396 = vtanh.pop %v3380
      %v3397 = vadd.f32 %v3381, 1.0
      %v3398 = vadd.f32 %v3382, 1.0
      %v3399 = vadd.f32 %v3383, 1.0
      %v3400 = vadd.f32 %v3384, 1.0
      %v3401 = vadd.f32 %v3385, 1.0
      %v3402 = vadd.f32 %v3386, 1.0
      %v3403 = vadd.f32 %v3387, 1.0
      %v3404 = vadd.f32 %v3388, 1.0
      %v3405 = vadd.f32 %v3389, 1.0
      %v3406 = vadd.f32 %v3390, 1.0
      %v3407 = vadd.f32 %v3391, 1.0
      %v3408 = vadd.f32 %v3392, 1.0
      %v3409 = vadd.f32 %v3393, 1.0
      %v3410 = vadd.f32 %v3394, 1.0
      %v3411 = vadd.f32 %v3395, 1.0
      %v3412 = vadd.f32 %v3396, 1.0
      %v3413 = vmul.f32 %v3397, 0.5
      %v3414 = vmul.f32 %v3398, 0.5
      %v3415 = vmul.f32 %v3399, 0.5
      %v3416 = vmul.f32 %v3400, 0.5
      %v3417 = vmul.f32 %v3401, 0.5
      %v3418 = vmul.f32 %v3402, 0.5
      %v3419 = vmul.f32 %v3403, 0.5
      %v3420 = vmul.f32 %v3404, 0.5
      %v3421 = vmul.f32 %v3405, 0.5
      %v3422 = vmul.f32 %v3406, 0.5
      %v3423 = vmul.f32 %v3407, 0.5
      %v3424 = vmul.f32 %v3408, 0.5
      %v3425 = vmul.f32 %v3409, 0.5
      %v3426 = vmul.f32 %v3410, 0.5
      %v3427 = vmul.f32 %v3411, 0.5
      %v3428 = vmul.f32 %v3412, 0.5
      %v3429 = vmul.f32 %v3239, %v3413
      %v3430 = vmul.f32 %v3242, %v3414
      %v3431 = vmul.f32 %v3247, %v3415
      %v3432 = vmul.f32 %v3250, %v3416
      %v3433 = vmul.f32 %v3255, %v3417
      %v3434 = vmul.f32 %v3258, %v3418
      %v3435 = vmul.f32 %v3263, %v3419
      %v3436 = vmul.f32 %v3266, %v3420
      %v3437 = vmul.f32 %v3271, %v3421
      %v3438 = vmul.f32 %v3274, %v3422
      %v3439 = vmul.f32 %v3279, %v3423
      %v3440 = vmul.f32 %v3282, %v3424
      %v3441 = vmul.f32 %v3287, %v3425
      %v3442 = vmul.f32 %v3290, %v3426
      %v3443 = vmul.f32 %v3295, %v3427
      %v3444 = vmul.f32 %v3298, %v3428
      %v3445 = vpack.c.bf16 %v3430, %v3429
      %v3446 = vpack.c.bf16 %v3432, %v3431
      %v3447 = vpack.c.bf16 %v3434, %v3433
      %v3448 = vpack.c.bf16 %v3436, %v3435
      %v3449 = vpack.c.bf16 %v3438, %v3437
      %v3450 = vpack.c.bf16 %v3440, %v3439
      %v3451 = vpack.c.bf16 %v3442, %v3441
      %v3452 = vpack.c.bf16 %v3444, %v3443
      %v3453 = vld [vmem:[%s1188] sm:$0xf]
      %v3454 = vld [vmem:[%s1188 + $0x4] sm:$0xf]
      %v3455 = vld [vmem:[%s1188 + $0x8] sm:$0xf]
      %v3456 = vld [vmem:[%s1188 + $0xc] sm:$0xf]
      %v3457 = vld [vmem:[%s1188 + $0x10] sm:$0xf]
      %v3458 = vld [vmem:[%s1188 + $0x14] sm:$0xf]
      %v3459 = vld [vmem:[%s1188 + $0x18] sm:$0xf]
      %v3460 = vld [vmem:[%s1188 + $0x1c] sm:$0xf]
      %v3461 = vld [vmem:[%s1188 + $0x20] sm:$0xf]
      %v3462 = vld [vmem:[%s1188 + $0x24] sm:$0xf]
      %v3463 = vld [vmem:[%s1188 + $0x28] sm:$0xf]
      %v3464 = vld [vmem:[%s1188 + $0x2c] sm:$0xf]
      %v3465 = vld [vmem:[%s1188 + $0x30] sm:$0xf]
      %v3466 = vld [vmem:[%s1188 + $0x34] sm:$0xf]
      %v3467 = vld [vmem:[%s1188 + $0x38] sm:$0xf]
      %v3468 = vld [vmem:[%s1188 + $0x3c] sm:$0xf]
      %v3469 = vld [vmem:[%s1195] sm:$0x1]
      %v3471 = vlaneseq
      %v3472 = vshrl.u32 %v3471, 7
      %v3473 = vsub.s32 0, %v3472
      %v3474 = vrot.slane %v3469, %v3473
      %v3492 = vunpack.c.l.b16 %v3453
      %v3493 = vunpack.c.l.b16 %v3454
      %v3494 = vunpack.c.l.b16 %v3455
      %v3495 = vunpack.c.l.b16 %v3456
      %v3496 = vunpack.c.l.b16 %v3457
      %v3497 = vunpack.c.l.b16 %v3458
      %v3498 = vunpack.c.l.b16 %v3459
      %v3499 = vunpack.c.l.b16 %v3460
      %v3500 = vunpack.c.l.b16 %v3461
      %v3501 = vunpack.c.l.b16 %v3462
      %v3502 = vunpack.c.l.b16 %v3463
      %v3503 = vunpack.c.l.b16 %v3464
      %v3504 = vunpack.c.l.b16 %v3465
      %v3505 = vunpack.c.l.b16 %v3466
      %v3506 = vunpack.c.l.b16 %v3467
      %v3507 = vunpack.c.l.b16 %v3468
      %v3508 = vpack.c.b16 %v3493, %v3492
      %v3509 = vpack.c.b16 %v3495, %v3494
      %v3510 = vpack.c.b16 %v3497, %v3496
      %v3511 = vpack.c.b16 %v3499, %v3498
      %v3512 = vpack.c.b16 %v3501, %v3500
      %v3513 = vpack.c.b16 %v3503, %v3502
      %v3514 = vpack.c.b16 %v3505, %v3504
      %v3515 = vpack.c.b16 %v3507, %v3506
      %3524 = vmatprep.subr.bf16.mxu0 0
      %3525 = vmatpush1.bf16.msra.mxu0 %v3508
      %3526 = vmatprep.subr.bf16.mxu0 0
      %3527 = vmatpush1.bf16.msra.mxu0 %v3509
      %3528 = vmatprep.subr.bf16.mxu0 0
      %3529 = vmatpush1.bf16.msra.mxu0 %v3510
      %3530 = vmatprep.subr.bf16.mxu0 0
      %3531 = vmatpush1.bf16.msra.mxu0 %v3511
      %3532 = vmatprep.subr.bf16.mxu0 0
      %3533 = vmatpush1.bf16.msra.mxu0 %v3512
      %3534 = vmatprep.subr.bf16.mxu0 0
      %3535 = vmatpush1.bf16.msra.mxu0 %v3513
      %3536 = vmatprep.subr.bf16.mxu0 0
      %3537 = vmatpush1.bf16.msra.mxu0 %v3514
      %3538 = vmatprep.subr.bf16.mxu0 0
      %3539 = vmatpush1.bf16.msra.mxu0 %v3515
      %3540 = vmatprep.subr.bf16.mxu0 0
      %3541 = vmatpush1.bf16.msra.mxu0 0
      %3542 = vmatprep.subr.bf16.mxu0 0
      %3543 = vmatpush1.bf16.msra.mxu0 0
      %3544 = vmatprep.subr.bf16.mxu0 0
      %3545 = vmatpush1.bf16.msra.mxu0 0
      %3546 = vmatprep.subr.bf16.mxu0 0
      %3547 = vmatpush1.bf16.msra.mxu0 0
      %3548 = vmatprep.subr.bf16.mxu0 0
      %3549 = vmatpush1.bf16.msra.mxu0 0
      %3550 = vmatprep.subr.bf16.mxu0 0
      %3551 = vmatpush1.bf16.msra.mxu0 0
      %3552 = vmatprep.subr.bf16.mxu0 0
      %3553 = vmatpush1.bf16.msra.mxu0 0
      %3554 = vmatprep.subr.bf16.mxu0 0
      %3555 = vmatpush1.bf16.msra.mxu0 0
      %3556 = vmatprep.mubr.bf16.mxu0 0
      %3557 = vmatmul.mubr.bf16.gmra.mrb[0].mxu0 %v3445
      %v3558 = vpop.f32.mrb[0].mxu0
      %v3559 = vadd.f32 %v3474, %v3558
      %v3560 = vpop.f32.mrb[0].mxu0
      %v3561 = vpop.f32.mrb[0].mxu0
      %v3562 = vadd.f32 %v3474, %v3561
      %v3563 = vpop.f32.mrb[0].mxu0
      %3564 = vmatprep.mubr.bf16.mxu0 0
      %3565 = vmatmul.mubr.bf16.gmra.mrb[0].mxu0 %v3446
      %v3566 = vpop.f32.mrb[0].mxu0
      %v3567 = vadd.f32 %v3474, %v3566
      %v3568 = vpop.f32.mrb[0].mxu0
      %v3569 = vpop.f32.mrb[0].mxu0
      %v3570 = vadd.f32 %v3474, %v3569
      %v3571 = vpop.f32.mrb[0].mxu0
      %3572 = vmatprep.mubr.bf16.mxu0 0
      %3573 = vmatmul.mubr.bf16.gmra.mrb[0].mxu0 %v3447
      %v3574 = vpop.f32.mrb[0].mxu0
      %v3575 = vadd.f32 %v3474, %v3574
      %v3576 = vpop.f32.mrb[0].mxu0
      %v3577 = vpop.f32.mrb[0].mxu0
      %v3578 = vadd.f32 %v3474, %v3577
      %v3579 = vpop.f32.mrb[0].mxu0
      %3580 = vmatprep.mubr.bf16.mxu0 0
      %3581 = vmatmul.mubr.bf16.gmra.mrb[0].mxu0 %v3448
      %v3582 = vpop.f32.mrb[0].mxu0
      %v3583 = vadd.f32 %v3474, %v3582
      %v3584 = vpop.f32.mrb[0].mxu0
      %v3585 = vpop.f32.mrb[0].mxu0
      %v3586 = vadd.f32 %v3474, %v3585
      %v3587 = vpop.f32.mrb[0].mxu0
      %3588 = vmatprep.mubr.bf16.mxu0 0
      %3589 = vmatmul.mubr.bf16.gmra.mrb[0].mxu0 %v3449
      %v3590 = vpop.f32.mrb[0].mxu0
      %v3591 = vadd.f32 %v3474, %v3590
      %v3592 = vpop.f32.mrb[0].mxu0
      %v3593 = vpop.f32.mrb[0].mxu0
      %v3594 = vadd.f32 %v3474, %v3593
      %v3595 = vpop.f32.mrb[0].mxu0
      %3596 = vmatprep.mubr.bf16.mxu0 0
      %3597 = vmatmul.mubr.bf16.gmra.mrb[0].mxu0 %v3450
      %v3598 = vpop.f32.mrb[0].mxu0
      %v3599 = vadd.f32 %v3474, %v3598
      %v3600 = vpop.f32.mrb[0].mxu0
      %v3601 = vpop.f32.mrb[0].mxu0
      %v3602 = vadd.f32 %v3474, %v3601
      %v3603 = vpop.f32.mrb[0].mxu0
      %3604 = vmatprep.mubr.bf16.mxu0 0
      %3605 = vmatmul.mubr.bf16.gmra.mrb[0].mxu0 %v3451
      %v3606 = vpop.f32.mrb[0].mxu0
      %v3607 = vadd.f32 %v3474, %v3606
      %v3608 = vpop.f32.mrb[0].mxu0
      %v3609 = vpop.f32.mrb[0].mxu0
      %v3610 = vadd.f32 %v3474, %v3609
      %v3611 = vpop.f32.mrb[0].mxu0
      %3612 = vmatprep.mubr.bf16.mxu0 0
      %3613 = vmatmul.mubr.bf16.gmra.mrb[0].mxu0 %v3452
      %v3614 = vpop.f32.mrb[0].mxu0
      %v3615 = vadd.f32 %v3474, %v3614
      %v3616 = vpop.f32.mrb[0].mxu0
      %v3617 = vpop.f32.mrb[0].mxu0
      %v3618 = vadd.f32 %v3474, %v3617
      %v3619 = vpop.f32.mrb[0].mxu0
      %3620 = vdwg.mxu0
      %v3621 = vadd.f32 %v3109, %v3559
      %v3622 = vadd.f32 %v3110, %v3562
      %v3623 = vadd.f32 %v3111, %v3567
      %v3624 = vadd.f32 %v3112, %v3570
      %v3625 = vadd.f32 %v3113, %v3575
      %v3626 = vadd.f32 %v3114, %v3578
      %v3627 = vadd.f32 %v3115, %v3583
      %v3628 = vadd.f32 %v3116, %v3586
      %v3629 = vadd.f32 %v3117, %v3591
      %v3630 = vadd.f32 %v3118, %v3594
      %v3631 = vadd.f32 %v3119, %v3599
      %v3632 = vadd.f32 %v3120, %v3602
      %v3633 = vadd.f32 %v3121, %v3607
      %v3634 = vadd.f32 %v3122, %v3610
      %v3635 = vadd.f32 %v3123, %v3615
      %v3636 = vadd.f32 %v3124, %v3618
      %v3637 = vld [vmem:[%s1202] sm:$0x1]
      %v3638 = vld [vmem:[%s1209] sm:$0x1]
      %3639 = vadd.xlane.f32.xlu0 %v3621
      %v3640 = vpop.xlane.xlu0 %3639
      %3641 = vadd.xlane.f32.xlu0 %v3622
      %v3642 = vpop.xlane.xlu0 %3641
      %3643 = vadd.xlane.f32.xlu0 %v3623
      %v3644 = vpop.xlane.xlu0 %3643
      %3645 = vadd.xlane.f32.xlu0 %v3624
      %v3646 = vpop.xlane.xlu0 %3645
      %3647 = vadd.xlane.f32.xlu0 %v3625
      %v3648 = vpop.xlane.xlu0 %3647
      %3649 = vadd.xlane.f32.xlu0 %v3626
      %v3650 = vpop.xlane.xlu0 %3649
      %3651 = vadd.xlane.f32.xlu0 %v3627
      %v3652 = vpop.xlane.xlu0 %3651
      %3653 = vadd.xlane.f32.xlu0 %v3628
      %v3654 = vpop.xlane.xlu0 %3653
      %3655 = vadd.xlane.f32.xlu0 %v3629
      %v3656 = vpop.xlane.xlu0 %3655
      %3657 = vadd.xlane.f32.xlu0 %v3630
      %v3658 = vpop.xlane.xlu0 %3657
      %3659 = vadd.xlane.f32.xlu0 %v3631
      %v3660 = vpop.xlane.xlu0 %3659
      %3661 = vadd.xlane.f32.xlu0 %v3632
      %v3662 = vpop.xlane.xlu0 %3661
      %3663 = vadd.xlane.f32.xlu0 %v3633
      %v3664 = vpop.xlane.xlu0 %3663
      %3665 = vadd.xlane.f32.xlu0 %v3634
      %v3666 = vpop.xlane.xlu0 %3665
      %3667 = vadd.xlane.f32.xlu0 %v3635
      %v3668 = vpop.xlane.xlu0 %3667
      %3669 = vadd.xlane.f32.xlu0 %v3636
      %v3670 = vpop.xlane.xlu0 %3669
      %v3671 = vmul.f32 %v3640, 0.03125
      %v3672 = vmul.f32 %v3642, 0.03125
      %v3673 = vmul.f32 %v3644, 0.03125
      %v3674 = vmul.f32 %v3646, 0.03125
      %v3675 = vmul.f32 %v3648, 0.03125
      %v3676 = vmul.f32 %v3650, 0.03125
      %v3677 = vmul.f32 %v3652, 0.03125
      %v3678 = vmul.f32 %v3654, 0.03125
      %v3679 = vmul.f32 %v3656, 0.03125
      %v3680 = vmul.f32 %v3658, 0.03125
      %v3681 = vmul.f32 %v3660, 0.03125
      %v3682 = vmul.f32 %v3662, 0.03125
      %v3683 = vmul.f32 %v3664, 0.03125
      %v3684 = vmul.f32 %v3666, 0.03125
      %v3685 = vmul.f32 %v3668, 0.03125
      %v3686 = vmul.f32 %v3670, 0.03125
      %v3687 = vsub.f32 %v3621, %v3671
      %v3688 = vsub.f32 %v3622, %v3672
      %v3689 = vsub.f32 %v3623, %v3673
      %v3690 = vsub.f32 %v3624, %v3674
      %v3691 = vsub.f32 %v3625, %v3675
      %v3692 = vsub.f32 %v3626, %v3676
      %v3693 = vsub.f32 %v3627, %v3677
      %v3694 = vsub.f32 %v3628, %v3678
      %v3695 = vsub.f32 %v3629, %v3679
      %v3696 = vsub.f32 %v3630, %v3680
      %v3697 = vsub.f32 %v3631, %v3681
      %v3698 = vsub.f32 %v3632, %v3682
      %v3699 = vsub.f32 %v3633, %v3683
      %v3700 = vsub.f32 %v3634, %v3684
      %v3701 = vsub.f32 %v3635, %v3685
      %v3702 = vsub.f32 %v3636, %v3686
      %v3703 = vmul.f32 %v3687, %v1263
      %v3704 = vmul.f32 %v3688, %v1263
      %v3705 = vmul.f32 %v3689, %v1263
      %v3706 = vmul.f32 %v3690, %v1263
      %v3707 = vmul.f32 %v3691, %v1263
      %v3708 = vmul.f32 %v3692, %v1263
      %v3709 = vmul.f32 %v3693, %v1263
      %v3710 = vmul.f32 %v3694, %v1263
      %v3711 = vmul.f32 %v3695, %v1263
      %v3712 = vmul.f32 %v3696, %v1263
      %v3713 = vmul.f32 %v3697, %v1263
      %v3714 = vmul.f32 %v3698, %v1263
      %v3715 = vmul.f32 %v3699, %v1263
      %v3716 = vmul.f32 %v3700, %v1263
      %v3717 = vmul.f32 %v3701, %v1263
      %v3718 = vmul.f32 %v3702, %v1263
      %v3719 = vmul.f32 %v3703, %v3703
      %v3720 = vmul.f32 %v3704, %v3704
      %v3721 = vmul.f32 %v3705, %v3705
      %v3722 = vmul.f32 %v3706, %v3706
      %v3723 = vmul.f32 %v3707, %v3707
      %v3724 = vmul.f32 %v3708, %v3708
      %v3725 = vmul.f32 %v3709, %v3709
      %v3726 = vmul.f32 %v3710, %v3710
      %v3727 = vmul.f32 %v3711, %v3711
      %v3728 = vmul.f32 %v3712, %v3712
      %v3729 = vmul.f32 %v3713, %v3713
      %v3730 = vmul.f32 %v3714, %v3714
      %v3731 = vmul.f32 %v3715, %v3715
      %v3732 = vmul.f32 %v3716, %v3716
      %v3733 = vmul.f32 %v3717, %v3717
      %v3734 = vmul.f32 %v3718, %v3718
      %3735 = vadd.xlane.f32.xlu0 %v3719
      %v3736 = vpop.xlane.xlu0 %3735
      %3737 = vadd.xlane.f32.xlu0 %v3720
      %v3738 = vpop.xlane.xlu0 %3737
      %3739 = vadd.xlane.f32.xlu0 %v3721
      %v3740 = vpop.xlane.xlu0 %3739
      %3741 = vadd.xlane.f32.xlu0 %v3722
      %v3742 = vpop.xlane.xlu0 %3741
      %3743 = vadd.xlane.f32.xlu0 %v3723
      %v3744 = vpop.xlane.xlu0 %3743
      %3745 = vadd.xlane.f32.xlu0 %v3724
      %v3746 = vpop.xlane.xlu0 %3745
      %3747 = vadd.xlane.f32.xlu0 %v3725
      %v3748 = vpop.xlane.xlu0 %3747
      %3749 = vadd.xlane.f32.xlu0 %v3726
      %v3750 = vpop.xlane.xlu0 %3749
      %3751 = vadd.xlane.f32.xlu0 %v3727
      %v3752 = vpop.xlane.xlu0 %3751
      %3753 = vadd.xlane.f32.xlu0 %v3728
      %v3754 = vpop.xlane.xlu0 %3753
      %3755 = vadd.xlane.f32.xlu0 %v3729
      %v3756 = vpop.xlane.xlu0 %3755
      %3757 = vadd.xlane.f32.xlu0 %v3730
      %v3758 = vpop.xlane.xlu0 %3757
      %3759 = vadd.xlane.f32.xlu0 %v3731
      %v3760 = vpop.xlane.xlu0 %3759
      %3761 = vadd.xlane.f32.xlu0 %v3732
      %v3762 = vpop.xlane.xlu0 %3761
      %3763 = vadd.xlane.f32.xlu0 %v3733
      %v3764 = vpop.xlane.xlu0 %3763
      %3765 = vadd.xlane.f32.xlu0 %v3734
      %v3766 = vpop.xlane.xlu0 %3765
      %v3767 = vmul.f32 %v3736, 0.03125
      %v3768 = vmul.f32 %v3738, 0.03125
      %v3769 = vmul.f32 %v3740, 0.03125
      %v3770 = vmul.f32 %v3742, 0.03125
      %v3771 = vmul.f32 %v3744, 0.03125
      %v3772 = vmul.f32 %v3746, 0.03125
      %v3773 = vmul.f32 %v3748, 0.03125
      %v3774 = vmul.f32 %v3750, 0.03125
      %v3775 = vmul.f32 %v3752, 0.03125
      %v3776 = vmul.f32 %v3754, 0.03125
      %v3777 = vmul.f32 %v3756, 0.03125
      %v3778 = vmul.f32 %v3758, 0.03125
      %v3779 = vmul.f32 %v3760, 0.03125
      %v3780 = vmul.f32 %v3762, 0.03125
      %v3781 = vmul.f32 %v3764, 0.03125
      %v3782 = vmul.f32 %v3766, 0.03125
      %v3783 = vadd.f32 %v3767, 1e-12
      %v3784 = vadd.f32 %v3768, 1e-12
      %v3785 = vadd.f32 %v3769, 1e-12
      %v3786 = vadd.f32 %v3770, 1e-12
      %v3787 = vadd.f32 %v3771, 1e-12
      %v3788 = vadd.f32 %v3772, 1e-12
      %v3789 = vadd.f32 %v3773, 1e-12
      %v3790 = vadd.f32 %v3774, 1e-12
      %v3791 = vadd.f32 %v3775, 1e-12
      %v3792 = vadd.f32 %v3776, 1e-12
      %v3793 = vadd.f32 %v3777, 1e-12
      %v3794 = vadd.f32 %v3778, 1e-12
      %v3795 = vadd.f32 %v3779, 1e-12
      %v3796 = vadd.f32 %v3780, 1e-12
      %v3797 = vadd.f32 %v3781, 1e-12
      %v3798 = vadd.f32 %v3782, 1e-12
      %v3799 = vrsqrt.pop %v3783
      %v3800 = vrsqrt.pop %v3784
      %v3801 = vrsqrt.pop %v3785
      %v3802 = vrsqrt.pop %v3786
      %v3803 = vrsqrt.pop %v3787
      %v3804 = vrsqrt.pop %v3788
      %v3805 = vrsqrt.pop %v3789
      %v3806 = vrsqrt.pop %v3790
      %v3807 = vrsqrt.pop %v3791
      %v3808 = vrsqrt.pop %v3792
      %v3809 = vrsqrt.pop %v3793
      %v3810 = vrsqrt.pop %v3794
      %v3811 = vrsqrt.pop %v3795
      %v3812 = vrsqrt.pop %v3796
      %v3813 = vrsqrt.pop %v3797
      %v3814 = vrsqrt.pop %v3798
      %v3815 = vmul.f32 %v3703, %v3799
      %v3816 = vmul.f32 %v3704, %v3800
      %v3817 = vmul.f32 %v3705, %v3801
      %v3818 = vmul.f32 %v3706, %v3802
      %v3819 = vmul.f32 %v3707, %v3803
      %v3820 = vmul.f32 %v3708, %v3804
      %v3821 = vmul.f32 %v3709, %v3805
      %v3822 = vmul.f32 %v3710, %v3806
      %v3823 = vmul.f32 %v3711, %v3807
      %v3824 = vmul.f32 %v3712, %v3808
      %v3825 = vmul.f32 %v3713, %v3809
      %v3826 = vmul.f32 %v3714, %v3810
      %v3827 = vmul.f32 %v3715, %v3811
      %v3828 = vmul.f32 %v3716, %v3812
      %v3829 = vmul.f32 %v3717, %v3813
      %v3830 = vmul.f32 %v3718, %v3814
      %v3832 = vlaneseq
      %v3833 = vshrl.u32 %v3832, 7
      %v3834 = vsub.s32 0, %v3833
      %v3835 = vrot.slane %v3637, %v3834
      %v3837 = vmul.f32 %v3815, %v3835
      %v3838 = vmul.f32 %v3816, %v3835
      %v3839 = vmul.f32 %v3817, %v3835
      %v3840 = vmul.f32 %v3818, %v3835
      %v3841 = vmul.f32 %v3819, %v3835
      %v3842 = vmul.f32 %v3820, %v3835
      %v3843 = vmul.f32 %v3821, %v3835
      %v3844 = vmul.f32 %v3822, %v3835
      %v3845 = vmul.f32 %v3823, %v3835
      %v3846 = vmul.f32 %v3824, %v3835
      %v3847 = vmul.f32 %v3825, %v3835
      %v3848 = vmul.f32 %v3826, %v3835
      %v3849 = vmul.f32 %v3827, %v3835
      %v3850 = vmul.f32 %v3828, %v3835
      %v3851 = vmul.f32 %v3829, %v3835
      %v3852 = vmul.f32 %v3830, %v3835
      %v3854 = vlaneseq
      %v3855 = vshrl.u32 %v3854, 7
      %v3856 = vsub.s32 0, %v3855
      %v3857 = vrot.slane %v3638, %v3856
      %v3859 = vadd.f32 %v3837, %v3857
      %v3860 = vadd.f32 %v3838, %v3857
      %v3861 = vadd.f32 %v3839, %v3857
      %v3862 = vadd.f32 %v3840, %v3857
      %v3863 = vadd.f32 %v3841, %v3857
      %v3864 = vadd.f32 %v3842, %v3857
      %v3865 = vadd.f32 %v3843, %v3857
      %v3866 = vadd.f32 %v3844, %v3857
      %v3867 = vadd.f32 %v3845, %v3857
      %v3868 = vadd.f32 %v3846, %v3857
      %v3869 = vadd.f32 %v3847, %v3857
      %v3870 = vadd.f32 %v3848, %v3857
      %v3871 = vadd.f32 %v3849, %v3857
      %v3872 = vadd.f32 %v3850, %v3857
      %v3873 = vadd.f32 %v3851, %v3857
      %v3874 = vadd.f32 %v3852, %v3857
      %3875 = vst [vmem:[#allocation2] sm:$0xff] %v3859
      %3876 = vst [vmem:[#allocation2 + $0x8] sm:$0xff] %v3860
      %3877 = vst [vmem:[#allocation2 + $0x10] sm:$0xff] %v3861
      %3878 = vst [vmem:[#allocation2 + $0x18] sm:$0xff] %v3862
      %3879 = vst [vmem:[#allocation2 + $0x20] sm:$0xff] %v3863
      %3880 = vst [vmem:[#allocation2 + $0x28] sm:$0xff] %v3864
      %3881 = vst [vmem:[#allocation2 + $0x30] sm:$0xff] %v3865
      %3882 = vst [vmem:[#allocation2 + $0x38] sm:$0xff] %v3866
      %3883 = vst [vmem:[#allocation2 + $0x40] sm:$0xff] %v3867
      %3884 = vst [vmem:[#allocation2 + $0x48] sm:$0xff] %v3868
      %3885 = vst [vmem:[#allocation2 + $0x50] sm:$0xff] %v3869
      %3886 = vst [vmem:[#allocation2 + $0x58] sm:$0xff] %v3870
      %3887 = vst [vmem:[#allocation2 + $0x60] sm:$0xff] %v3871
      %3888 = vst [vmem:[#allocation2 + $0x68] sm:$0xff] %v3872
      %3889 = vst [vmem:[#allocation2 + $0x70] sm:$0xff] %v3873
      %3890 = vst [vmem:[#allocation2 + $0x78] sm:$0xff] %v3874
      %p3891 = scmp.eq.s32.totalorder %s37, 1
      // Predicated region
      $region109: #{_forward_impl.1} parent=103 // pred_check
        %p3892 = pneg %p3891
      $region110: #{_forward_impl.1} parent=103 // pred_check_branch
        %3894 = sbr.rel (%p3892) target = $region112
      $region111: #{_forward_impl.1} parent=103 // pred_region
        %v3895 = vld [vmem:[%s1085] sm:$0xff]
        %3896 = vmatprep.subr.mxu0 0.0
        %3897 = vmatpush1.msra.mxu0 %v3859
        %3898 = vmatprep.subr.mxu0 0.0
        %3899 = vmatpush1.msra.mxu0 %v3860
        %3900 = vmatprep.subr.mxu0 0.0
        %3901 = vmatpush1.msra.mxu0 %v3861
        %3902 = vmatprep.subr.mxu0 0.0
        %3903 = vmatpush1.msra.mxu0 %v3862
        %3904 = vmatprep.subr.mxu0 0.0
        %3905 = vmatpush1.msra.mxu0 %v3863
        %3906 = vmatprep.subr.mxu0 0.0
        %3907 = vmatpush1.msra.mxu0 %v3864
        %3908 = vmatprep.subr.mxu0 0.0
        %3909 = vmatpush1.msra.mxu0 %v3865
        %3910 = vmatprep.subr.mxu0 0.0
        %3911 = vmatpush1.msra.mxu0 %v3866
        %3912 = vmatprep.subr.mxu0 0.0
        %3913 = vmatpush1.msra.mxu0 %v3867
        %3914 = vmatprep.subr.mxu0 0.0
        %3915 = vmatpush1.msra.mxu0 %v3868
        %3916 = vmatprep.subr.mxu0 0.0
        %3917 = vmatpush1.msra.mxu0 %v3869
        %3918 = vmatprep.subr.mxu0 0.0
        %3919 = vmatpush1.msra.mxu0 %v3870
        %3920 = vmatprep.subr.mxu0 0.0
        %3921 = vmatpush1.msra.mxu0 %v3871
        %3922 = vmatprep.subr.mxu0 0.0
        %3923 = vmatpush1.msra.mxu0 %v3872
        %3924 = vmatprep.subr.mxu0 0.0
        %3925 = vmatpush1.msra.mxu0 %v3873
        %3926 = vmatprep.subr.mxu0 0.0
        %3927 = vmatpush1.msra.mxu0 %v3874
        %3928 = vmatprep.subr.mxu0 0.0
        %3929 = vmatpush1.msra.mxu0 0.0
        %3930 = vmatprep.subr.mxu0 0.0
        %3931 = vmatpush1.msra.mxu0 0.0
        %3932 = vmatprep.subr.mxu0 0.0
        %3933 = vmatpush1.msra.mxu0 0.0
        %3934 = vmatprep.subr.mxu0 0.0
        %3935 = vmatpush1.msra.mxu0 0.0
        %3936 = vmatprep.subr.mxu0 0.0
        %3937 = vmatpush1.msra.mxu0 0.0
        %3938 = vmatprep.subr.mxu0 0.0
        %3939 = vmatpush1.msra.mxu0 0.0
        %3940 = vmatprep.subr.mxu0 0.0
        %3941 = vmatpush1.msra.mxu0 0.0
        %3942 = vmatprep.subr.mxu0 0.0
        %3943 = vmatpush1.msra.mxu0 0.0
        %3944 = vmatprep.subr.mxu0 0.0
        %3945 = vmatpush1.msra.mxu0 0.0
        %3946 = vmatprep.subr.mxu0 0.0
        %3947 = vmatpush1.msra.mxu0 0.0
        %3948 = vmatprep.subr.mxu0 0.0
        %3949 = vmatpush1.msra.mxu0 0.0
        %3950 = vmatprep.subr.mxu0 0.0
        %3951 = vmatpush1.msra.mxu0 0.0
        %3952 = vmatprep.subr.mxu0 0.0
        %3953 = vmatpush1.msra.mxu0 0.0
        %3954 = vmatprep.subr.mxu0 0.0
        %3955 = vmatpush1.msra.mxu0 0.0
        %3956 = vmatprep.subr.mxu0 0.0
        %3957 = vmatpush1.msra.mxu0 0.0
        %3958 = vmatprep.subr.mxu0 0.0
        %3959 = vmatpush1.msra.mxu0 0.0
        %3960 = vmatprep.mubr.f32.mxu0 0.0
        %3961 = vmatmul.mubr.f32.gmra.mrb[0].mxu0 %v3895
        %v3962 = vpop.f32.mrb[0].mxu0
        %v3963 = vadd.f32 0.0, %v3962
        %v3964 = vpop.f32.mrb[0].mxu0
        %3965 = vdwg.mxu0
        %v3966 = vpack.c.bf16 %v3963, %v3963
        %v3967 = vld [vmem:[%s1214] sm:$0xf]
        %v3968 = vld [vmem:[%s1214 + $0x4] sm:$0xf]
        %v3969 = vld [vmem:[%s1214 + $0x8] sm:$0xf]
        %v3970 = vld [vmem:[%s1214 + $0xc] sm:$0xf]
        %v3971 = vld [vmem:[%s1214 + $0x10] sm:$0xf]
        %v3972 = vld [vmem:[%s1214 + $0x14] sm:$0xf]
        %v3973 = vld [vmem:[%s1214 + $0x18] sm:$0xf]
        %v3974 = vld [vmem:[%s1214 + $0x1c] sm:$0xf]
        %v3975 = vld [vmem:[%s1214 + $0x20] sm:$0xf]
        %v3976 = vld [vmem:[%s1214 + $0x24] sm:$0xf]
        %v3977 = vld [vmem:[%s1214 + $0x28] sm:$0xf]
        %v3978 = vld [vmem:[%s1214 + $0x2c] sm:$0xf]
        %v3979 = vld [vmem:[%s1214 + $0x30] sm:$0xf]
        %v3980 = vld [vmem:[%s1214 + $0x34] sm:$0xf]
        %v3981 = vld [vmem:[%s1214 + $0x38] sm:$0xf]
        %v3982 = vld [vmem:[%s1214 + $0x3c] sm:$0xf]
        %v3983 = vld [vmem:[%s1217] sm:$0x1]
        %v3985 = vlaneseq
        %v3986 = vshrl.u32 %v3985, 7
        %v3987 = vsub.s32 0, %v3986
        %v3988 = vrot.slane %v3983, %v3987
        %v4006 = vunpack.c.l.b16 %v3967
        %v4007 = vunpack.c.l.b16 %v3968
        %v4008 = vunpack.c.l.b16 %v3969
        %v4009 = vunpack.c.l.b16 %v3970
        %v4010 = vunpack.c.l.b16 %v3971
        %v4011 = vunpack.c.l.b16 %v3972
        %v4012 = vunpack.c.l.b16 %v3973
        %v4013 = vunpack.c.l.b16 %v3974
        %v4014 = vunpack.c.l.b16 %v3975
        %v4015 = vunpack.c.l.b16 %v3976
        %v4016 = vunpack.c.l.b16 %v3977
        %v4017 = vunpack.c.l.b16 %v3978
        %v4018 = vunpack.c.l.b16 %v3979
        %v4019 = vunpack.c.l.b16 %v3980
        %v4020 = vunpack.c.l.b16 %v3981
        %v4021 = vunpack.c.l.b16 %v3982
        %v4022 = vpack.c.b16 %v4007, %v4006
        %v4023 = vpack.c.b16 %v4009, %v4008
        %v4024 = vpack.c.b16 %v4011, %v4010
        %v4025 = vpack.c.b16 %v4013, %v4012
        %v4026 = vpack.c.b16 %v4015, %v4014
        %v4027 = vpack.c.b16 %v4017, %v4016
        %v4028 = vpack.c.b16 %v4019, %v4018
        %v4029 = vpack.c.b16 %v4021, %v4020
        %4038 = vmatprep.subr.bf16.mxu0 0
        %4039 = vmatpush1.bf16.msra.mxu0 %v4022
        %4040 = vmatprep.subr.bf16.mxu0 0
        %4041 = vmatpush1.bf16.msra.mxu0 %v4023
        %4042 = vmatprep.subr.bf16.mxu0 0
        %4043 = vmatpush1.bf16.msra.mxu0 %v4024
        %4044 = vmatprep.subr.bf16.mxu0 0
        %4045 = vmatpush1.bf16.msra.mxu0 %v4025
        %4046 = vmatprep.subr.bf16.mxu0 0
        %4047 = vmatpush1.bf16.msra.mxu0 %v4026
        %4048 = vmatprep.subr.bf16.mxu0 0
        %4049 = vmatpush1.bf16.msra.mxu0 %v4027
        %4050 = vmatprep.subr.bf16.mxu0 0
        %4051 = vmatpush1.bf16.msra.mxu0 %v4028
        %4052 = vmatprep.subr.bf16.mxu0 0
        %4053 = vmatpush1.bf16.msra.mxu0 %v4029
        %4054 = vmatprep.subr.bf16.mxu0 0
        %4055 = vmatpush1.bf16.msra.mxu0 0
        %4056 = vmatprep.subr.bf16.mxu0 0
        %4057 = vmatpush1.bf16.msra.mxu0 0
        %4058 = vmatprep.subr.bf16.mxu0 0
        %4059 = vmatpush1.bf16.msra.mxu0 0
        %4060 = vmatprep.subr.bf16.mxu0 0
        %4061 = vmatpush1.bf16.msra.mxu0 0
        %4062 = vmatprep.subr.bf16.mxu0 0
        %4063 = vmatpush1.bf16.msra.mxu0 0
        %4064 = vmatprep.subr.bf16.mxu0 0
        %4065 = vmatpush1.bf16.msra.mxu0 0
        %4066 = vmatprep.subr.bf16.mxu0 0
        %4067 = vmatpush1.bf16.msra.mxu0 0
        %4068 = vmatprep.subr.bf16.mxu0 0
        %4069 = vmatpush1.bf16.msra.mxu0 0
        %4070 = vmatprep.mubr.bf16.mxu0 0
        %4071 = vmatmul.mubr.bf16.gmra.mrb[0].mxu0 %v3966
        %v4072 = vpop.f32.mrb[0].mxu0
        %v4073 = vadd.f32 %v3988, %v4072
        %v4074 = vpop.f32.mrb[0].mxu0
        %v4075 = vpop.f32.mrb[0].mxu0
        %v4076 = vpop.f32.mrb[0].mxu0
        %4077 = vdwg.mxu0
        %v4078 = vtanh.pop %v4073
        %4079 = vst [vmem:[%s1221] sm:$0xff] %v4078
      $region112: #{_forward_impl.1} parent=103 // pred_fallthru
        _
      %p4080 = scmp.lt.s32.totalorder %s36, 1
      %s4081 = scalar_select %p4080, %s36, 1
      %s4082 = smul.addr %s4081, 8
      %s4083 = scalar_lea.vmem %s21, %s4082
      // Predicated region
      $region113: #{_forward_impl.1} parent=103 // pred_check
        %p4084 = pneg %p640
      $region114: #{_forward_impl.1} parent=103 // pred_check_branch
        %4086 = sbr.rel (%p4084) target = $region116
      $region115: #{_forward_impl.1} parent=103 // pred_region
        _
      $region116: #{_forward_impl.1} parent=103 // pred_fallthru
        _
    $region104: #{_forward_impl.1} parent=5 // pred_fallthru
      _
    %p4087 = scmp.le.s32.totalorder 2, %s27
    // Predicated region
    $region117: #{_forward_impl.1} parent=5 // pred_check
      %p4088 = pneg %p4087
    $region118: #{_forward_impl.1} parent=5 // pred_check_branch
      %4090 = sbr.rel (%p4088) target = $region120
    $region119: #{_forward_impl.1} parent=5 // pred_region
      %s4091 = ssub.s32 %s27, 2
      // Predicated region
      $region121: #{_forward_impl.1} parent=119 // pred_check
        %p4092 = pneg %p646
      $region122: #{_forward_impl.1} parent=119 // pred_check_branch
        %4094 = sbr.rel (%p4092) target = $region124
      $region123: #{_forward_impl.1} parent=119 // pred_region
        %p4095 = scmp.lt.s32.totalorder %s38, 1
        %s4096 = scalar_select %p4095, %s38, 1
        %s4097 = smul.addr %s4096, 8
        %s4098 = scalar_lea.vmem %s21, %s4097
      $region124: #{_forward_impl.1} parent=119 // pred_fallthru
        _
    $region120: #{_forward_impl.1} parent=5 // pred_fallthru
      _
  $region6: #{_forward_impl.1} parent=0 // loop_footer
    %s31 = sadd.s32 1, %s27
  $region7: #{_forward_impl.1} parent=0 // loop_footer_branch
    %26 = sbr.rel target = $region3
  $region8: #{_forward_impl.1} parent=0 // loop_exit
    _

</llo_original>
